<compile_context>
chip_gen: v7x
topology: tpu7x:2x2x1
jax: 0.10.0
libtpu: 0.0.40
codegen_flags: <defaults>
</compile_context>

<pallas_src>
import math

import jax
import jax.numpy as jnp
import numpy as np
from jax.experimental import pallas as pl
from jax.experimental.pallas import tpu as pltpu

# --------------------------------------------------------------------------
# Model hyper-parameters (small instance, consistent with the module ctor)
# --------------------------------------------------------------------------
B = 4            # batch
T = 8            # timesteps
F = 8            # n_features
H = 32           # hidden_size
A = 64           # attn_size
FC1, FC2 = 64, 32
LN_EPS = 1e-5


# --------------------------------------------------------------------------
# Packed parameter slab layout (static, shared by host packer and kernel)
# --------------------------------------------------------------------------
def _make_layout():
    layout = {}
    row = [0]

    def add(name, nrows, ncols):
        layout[name] = (row[0], nrows, ncols)
        row[0] += ((nrows + 7) // 8) * 8   # keep 8-sublane alignment

    add("wih0", F, 8 * H)        # layer0 input proj, both dirs, (i,f,o,g)
    add("wih1", 2 * H, 8 * H)    # layer1 input proj, both dirs
    add("whh0", 2 * H, 4 * H)    # layer0 recurrent (stacked fwd|bwd rows)
    add("whh1", 2 * H, 4 * H)    # layer1 recurrent
    add("bias0", 1, 8 * H)       # folded b_ih + b_hh, both dirs
    add("bias1", 1, 8 * H)
    add("wqkv", 2 * H, 3 * A)    # K | V | Q projections
    add("ln_g", 1, A)
    add("ln_b", 1, A)
    add("fc1w", A, FC1)          # pre-transposed
    add("fc1b", 1, FC1)
    add("fc2w", FC1, FC2)        # pre-transposed
    add("fc2b", 1, FC2)
    add("outw", 1, FC2)
    add("outb", 1, 1)
    return layout, row[0]


_LAYOUT, _SLAB_ROWS = _make_layout()
_SLAB_COLS = 8 * H   # 256 lanes


# --------------------------------------------------------------------------
# Kernel
# --------------------------------------------------------------------------
def _bilstm_layer(x_slab, wih, whh, bias):
    """Fused bidirectional LSTM layer.

    x_slab: [T*B, Din] time-major input.
    wih:    [Din, 8H]  (fwd gates in lanes 0:4H, bwd gates in 4H:8H).
    whh:    [2H, 4H]   (rows 0:H = W_hh_f^T, rows H:2H = W_hh_b^T).
    bias:   [1, 8H].
    Returns [T*B, 2H] time-major output ([h_fwd | h_bwd] per timestep).
    """
    # Hoisted input->hidden projection for every timestep and both directions.
    gx = jnp.dot(x_slab, wih, preferred_element_type=jnp.float32) + bias   # [T*B, 8H]

    rows = jax.lax.broadcasted_iota(jnp.int32, (2 * B, 1), 0)
    mf = (rows < B).astype(jnp.float32)        # 1 on forward rows
    mb = 1.0 - mf                              # 1 on backward rows

    # h_pad layout: rows 0:B = fwd h in lanes 0:H; rows B:2B = bwd h in lanes H:2H.
    h_pad = jnp.zeros((2 * B, 2 * H), jnp.float32)
    c = jnp.zeros((2 * B, H), jnp.float32)
    states = []
    for s in range(T):
        gx_f = gx[s * B:(s + 1) * B, 0:4 * H]                 # fwd, time s
        gx_b = gx[(T - 1 - s) * B:(T - s) * B, 4 * H:8 * H]   # bwd, time T-1-s
        gates = (jnp.concatenate([gx_f, gx_b], axis=0)
                 + jnp.dot(h_pad, whh, preferred_element_type=jnp.float32))  # [2B, 4H]
        # gate order (i, f, o, g): one contiguous sigmoid slice + one tanh slice.
        sig = jax.nn.sigmoid(gates[:, 0:3 * H])
        g_g = jnp.tanh(gates[:, 3 * H:4 * H])
        i_g = sig[:, 0:H]
        f_g = sig[:, H:2 * H]
        o_g = sig[:, 2 * H:3 * H]
        c = f_g * c + i_g * g_g
        h = o_g * jnp.tanh(c)
        h_pad = jnp.concatenate([h * mf, h * mb], axis=1)     # re-pad for next matmul
        states.append(h_pad)

    # Output at time t = [h_fwd(t) | h_bwd(t)]; lane placement is already
    # complementary in the padded states, so a single add produces the concat.
    outs = [states[t][0:B, :] + states[T - 1 - t][B:2 * B, :] for t in range(T)]
    return jnp.concatenate(outs, axis=0)                      # [T*B, 2H]


def _kernel(x_ref, w_ref, o_ref):
    def seg(name):
        r0, nr, nc = _LAYOUT[name]
        return w_ref[r0:r0 + nr, 0:nc]

    x = x_ref[...]                                            # [T*B, F]

    l0 = _bilstm_layer(x, seg("wih0"), seg("whh0"), seg("bias0"))
    l1 = _bilstm_layer(l0, seg("wih1"), seg("whh1"), seg("bias1"))

    # ---- fused K | V | Q projection ----
    kvq = jnp.dot(l1, seg("wqkv"), preferred_element_type=jnp.float32)   # [T*B, 3A]
    k3 = kvq[:, 0:A].reshape(T, B, A)
    v3 = kvq[:, A:2 * A].reshape(T, B, A)
    q = kvq[(T - 1) * B:T * B, 2 * A:3 * A]                              # [B, A]

    # ---- temporal attention (softmax over T) ----
    scale = 1.0 / math.sqrt(A)
    s3 = jnp.sum(k3 * q[None, :, :], axis=-1, keepdims=True) * scale     # [T, B, 1]
    m3 = jnp.max(s3, axis=0, keepdims=True)
    e3 = jnp.exp(s3 - m3)
    w3 = e3 / jnp.sum(e3, axis=0, keepdims=True)                         # [T, B, 1]
    context = jnp.sum(w3 * v3, axis=0)                                   # [B, A]

    comb = context + v3[T - 1]                                           # + attn_value(last)

    # ---- LayerNorm ----
    mu = jnp.mean(comb, axis=-1, keepdims=True)
    var = jnp.mean((comb - mu) * (comb - mu), axis=-1, keepdims=True)
    normed = (comb - mu) * jax.lax.rsqrt(var + LN_EPS) * seg("ln_g") + seg("ln_b")

    # ---- MLP head (dropouts are identity in eval mode) ----
    h1 = jnp.maximum(
        jnp.dot(normed, seg("fc1w"), preferred_element_type=jnp.float32)
        + seg("fc1b"), 0.0)
    h2 = jnp.maximum(
        jnp.dot(h1, seg("fc2w"), preferred_element_type=jnp.float32)
        + seg("fc2b"), 0.0)
    # final 1-wide projection as a lane reduction (avoids a degenerate matmul)
    out = jnp.sum(h2 * seg("outw"), axis=-1, keepdims=True) + seg("outb")
    o_ref[...] = out                                                     # [B, 1]


# --------------------------------------------------------------------------
# Host-side parameter packing (pre-transpose, gate reorder, single slab)
# --------------------------------------------------------------------------
def _reorder_gates(w):
    """PyTorch gate blocks (i, f, g, o) along axis 0 -> (i, f, o, g)."""
    return jnp.concatenate(
        [w[0:H], w[H:2 * H], w[3 * H:4 * H], w[2 * H:3 * H]], axis=0)


def _pack_params(p):
    def prep_layer(layer):
        s = f"_l{layer}"
        wf = _reorder_gates(p["w_ih" + s]).T            # [Din, 4H]
        wb = _reorder_gates(p["w_ih" + s + "_rev"]).T
        uf = _reorder_gates(p["w_hh" + s]).T            # [H, 4H]
        ub = _reorder_gates(p["w_hh" + s + "_rev"]).T
        bf = _reorder_gates(p["b_ih" + s] + p["b_hh" + s])
        bb = _reorder_gates(p["b_ih" + s + "_rev"] + p["b_hh" + s + "_rev"])
        wih = jnp.concatenate([wf, wb], axis=1)         # [Din, 8H]
        whh = jnp.concatenate([uf, ub], axis=0)         # [2H, 4H]
        bias = jnp.concatenate([bf, bb])[None, :]       # [1, 8H]
        return wih, whh, bias

    wih0, whh0, bias0 = prep_layer(0)
    wih1, whh1, bias1 = prep_layer(1)
    wqkv = jnp.concatenate([p["wk"].T, p["wv"].T, p["wq"].T], axis=1)    # [2H, 3A]

    pieces = {
        "wih0": wih0, "wih1": wih1, "whh0": whh0, "whh1": whh1,
        "bias0": bias0, "bias1": bias1, "wqkv": wqkv,
        "ln_g": p["ln_g"][None, :], "ln_b": p["ln_b"][None, :],
        "fc1w": p["fc1w"].T, "fc1b": p["fc1b"][None, :],
        "fc2w": p["fc2w"].T, "fc2b": p["fc2b"][None, :],
        "outw": p["outw"].reshape(1, FC2), "outb": p["outb"].reshape(1, 1),
    }
    slab = jnp.zeros((_SLAB_ROWS, _SLAB_COLS), jnp.float32)
    for name, val in pieces.items():
        r0, nr, nc = _LAYOUT[name]
        slab = slab.at[r0:r0 + nr, 0:nc].set(
            val.astype(jnp.float32).reshape(nr, nc))
    return slab


def attn_bilstm_forward(x, params):
    slab = _pack_params(params)
    # time-major [T*B, F] input slab (host-side transpose; free relative to kernel)
    x_tm = jnp.transpose(x, (1, 0, 2)).reshape(T * B, F).astype(jnp.float32)
    out = pl.pallas_call(
        _kernel,
        out_shape=jax.ShapeDtypeStruct((B, 1), jnp.float32),
        in_specs=[pl.BlockSpec(memory_space=pltpu.MemorySpace.VMEM),
                  pl.BlockSpec(memory_space=pltpu.MemorySpace.VMEM)],
        out_specs=pl.BlockSpec(memory_space=pltpu.MemorySpace.VMEM),
    )(x_tm, slab)
    return out[:, 0]


# --------------------------------------------------------------------------
# Pure-JAX reference (straightforward PyTorch-style math, i/f/g/o gate order)
# --------------------------------------------------------------------------
def _lstm_dir_ref(inputs, w_ih, w_hh, b_ih, b_hh, reverse):
    nb = inputs[0].shape[0]
    h = jnp.zeros((nb, H), jnp.float32)
    c = jnp.zeros((nb, H), jnp.float32)
    outs = [None] * len(inputs)
    order = range(len(inputs) - 1, -1, -1) if reverse else range(len(inputs))
    for t in order:
        gates = inputs[t] @ w_ih.T + h @ w_hh.T + b_ih + b_hh
        i = jax.nn.sigmoid(gates[:, 0:H])
        f = jax.nn.sigmoid(gates[:, H:2 * H])
        g = jnp.tanh(gates[:, 2 * H:3 * H])
        o = jax.nn.sigmoid(gates[:, 3 * H:4 * H])
        c = f * c + i * g
        h = o * jnp.tanh(c)
        outs[t] = h
    return outs


def _reference_forward(x, p):
    xs = [x[:, t, :] for t in range(T)]
    f0 = _lstm_dir_ref(xs, p["w_ih_l0"], p["w_hh_l0"],
                       p["b_ih_l0"], p["b_hh_l0"], False)
    b0 = _lstm_dir_ref(xs, p["w_ih_l0_rev"], p["w_hh_l0_rev"],
                       p["b_ih_l0_rev"], p["b_hh_l0_rev"], True)
    l0 = [jnp.concatenate([f0[t], b0[t]], axis=-1) for t in range(T)]
    f1 = _lstm_dir_ref(l0, p["w_ih_l1"], p["w_hh_l1"],
                       p["b_ih_l1"], p["b_hh_l1"], False)
    b1 = _lstm_dir_ref(l0, p["w_ih_l1_rev"], p["w_hh_l1_rev"],
                       p["b_ih_l1_rev"], p["b_hh_l1_rev"], True)
    lstm_out = jnp.stack(
        [jnp.concatenate([f1[t], b1[t]], axis=-1) for t in range(T)], axis=1)

    q = lstm_out[:, -1, :] @ p["wq"].T
    k = jnp.einsum("btd,ad->bta", lstm_out, p["wk"])
    v = jnp.einsum("btd,ad->bta", lstm_out, p["wv"])
    scores = jnp.einsum("ba,bta->bt", q, k) / math.sqrt(A)
    w = jax.nn.softmax(scores, axis=-1)
    context = jnp.einsum("bt,bta->ba", w, v)
    last_proj = lstm_out[:, -1, :] @ p["wv"].T
    comb = context + last_proj

    mu = comb.mean(-1, keepdims=True)
    var = ((comb - mu) ** 2).mean(-1, keepdims=True)
    normed = (comb - mu) * jax.lax.rsqrt(var + LN_EPS) * p["ln_g"] + p["ln_b"]

    h1 = jax.nn.relu(normed @ p["fc1w"].T + p["fc1b"])
    h2 = jax.nn.relu(h1 @ p["fc2w"].T + p["fc2b"])
    return (h2 @ p["outw"].T + p["outb"])[:, 0]


# --------------------------------------------------------------------------
# Synthetic parameters (PyTorch-style shapes / conventions)
# --------------------------------------------------------------------------
def _init_params(key):
    def nrm(k, shape, scale):
        return jax.random.normal(k, shape, dtype=jnp.float32) * scale

    keys = iter(jax.random.split(key, 48))
    klstm = 1.0 / math.sqrt(H)
    p = {}
    for layer, din in ((0, F), (1, 2 * H)):
        for sfx in ("", "_rev"):
            p[f"w_ih_l{layer}{sfx}"] = nrm(next(keys), (4 * H, din), klstm)
            p[f"w_hh_l{layer}{sfx}"] = nrm(next(keys), (4 * H, H), klstm)
            p[f"b_ih_l{layer}{sfx}"] = nrm(next(keys), (4 * H,), klstm)
            p[f"b_hh_l{layer}{sfx}"] = nrm(next(keys), (4 * H,), klstm)
    ka = 1.0 / math.sqrt(2 * H)
    p["wq"] = nrm(next(keys), (A, 2 * H), ka)
    p["wk"] = nrm(next(keys), (A, 2 * H), ka)
    p["wv"] = nrm(next(keys), (A, 2 * H), ka)
    p["ln_g"] = jnp.ones((A,), jnp.float32)
    p["ln_b"] = jnp.zeros((A,), jnp.float32)
    p["fc1w"] = nrm(next(keys), (FC1, A), 1.0 / math.sqrt(A))
    p["fc1b"] = nrm(next(keys), (FC1,), 1.0 / math.sqrt(A))
    p["fc2w"] = nrm(next(keys), (FC2, FC1), 1.0 / math.sqrt(FC1))
    p["fc2b"] = nrm(next(keys), (FC2,), 1.0 / math.sqrt(FC1))
    p["outw"] = nrm(next(keys), (1, FC2), 1.0 / math.sqrt(FC2))
    p["outb"] = nrm(next(keys), (1,), 1.0 / math.sqrt(FC2))
    return p


if __name__ == "__main__":
    key = jax.random.PRNGKey(0)
    k_x, k_p = jax.random.split(key)
    x = jax.random.normal(k_x, (B, T, F), dtype=jnp.float32)
    params = _init_params(k_p)

    fwd = jax.jit(attn_bilstm_forward)
    out = jax.block_until_ready(fwd(x, params))

    # Independent pure-JAX reference (unfused, PyTorch gate order / layout).
    ref = jax.block_until_ready(_reference_forward(x, params))
    np.testing.assert_allclose(np.asarray(out), np.asarray(ref),
                               rtol=1e-3, atol=1e-3)
    assert out.shape == (B,)
    print("KERNEL_OK")
</pallas_src>

<mosaic_0001>
module attributes {stable_mosaic.version = 11 : i64} {
  func.func @_kernel(%arg0: memref<32x8xf32, #tpu.memory_space<vmem>>, %arg1: memref<456x256xf32, #tpu.memory_space<vmem>>, %arg2: memref<4x1xf32, #tpu.memory_space<vmem>>) attributes {dimension_semantics = [], scalar_prefetch = 0 : i64, scratch_operands = 0 : i64, tpu.core_type = #tpu.core_type<tc>} {
    %c0 = arith.constant 0 : index
    %c0_0 = arith.constant 0 : index
    %0 = vector.load %arg0[%c0, %c0_0] : memref<32x8xf32, #tpu.memory_space<vmem>>, vector<32x8xf32>
    %c0_1 = arith.constant 0 : index
    %c0_2 = arith.constant 0 : index
    %1 = vector.load %arg1[%c0_1, %c0_2] : memref<456x256xf32, #tpu.memory_space<vmem>>, vector<8x256xf32>
    %c72 = arith.constant 72 : index
    %c0_3 = arith.constant 0 : index
    %2 = vector.load %arg1[%c72, %c0_3] : memref<456x256xf32, #tpu.memory_space<vmem>>, vector<64x128xf32>
    %c200 = arith.constant 200 : index
    %c0_4 = arith.constant 0 : index
    %3 = vector.load %arg1[%c200, %c0_4] : memref<456x256xf32, #tpu.memory_space<vmem>>, vector<1x256xf32>
    %cst = arith.constant dense<0.000000e+00> : vector<32x256xf32>
    %4 = tpu.matmul %0, %1, %cst {dimension_numbers = #tpu.dot_dimension_numbers<[1], [0], [0], [1], [0, 0, 1, 1], [], []>} : vector<32x8xf32>, vector<8x256xf32>, vector<32x256xf32> -> vector<32x256xf32>
    %5 = vector.broadcast %3 : vector<1x256xf32> to vector<32x256xf32>
    %6 = arith.addf %4, %5 : vector<32x256xf32>
    %7 = tpu.iota {dimensions = array<i32: 0>} : vector<8x1xi32>
    %c4_i32 = arith.constant 4 : i32
    %8 = vector.broadcast %c4_i32 : i32 to vector<8x1xi32>
    %9 = arith.cmpi slt, %7, %8 : vector<8x1xi32>
    %10 = arith.extui %9 : vector<8x1xi1> to vector<8x1xi32>
    %11 = arith.sitofp %10 : vector<8x1xi32> to vector<8x1xf32>
    %cst_5 = arith.constant 1.000000e+00 : f32
    %12 = vector.broadcast %cst_5 : f32 to vector<8x1xf32>
    %13 = arith.subf %12, %11 : vector<8x1xf32>
    %cst_6 = arith.constant 0.000000e+00 : f32
    %14 = vector.broadcast %cst_6 : f32 to vector<8x64xf32>
    %cst_7 = arith.constant 0.000000e+00 : f32
    %15 = vector.broadcast %cst_7 : f32 to vector<8x32xf32>
    %16 = vector.extract_strided_slice %6 {offsets = [0, 0], sizes = [4, 128], strides = [1, 1]} : vector<32x256xf32> to vector<4x128xf32>
    %17 = vector.extract_strided_slice %6 {offsets = [28, 128], sizes = [4, 128], strides = [1, 1]} : vector<32x256xf32> to vector<4x128xf32>
    %18 = tpu.concatenate %16, %17 in 0 : vector<4x128xf32>, vector<4x128xf32> -> vector<8x128xf32>
    %cst_8 = arith.constant dense<0.000000e+00> : vector<8x128xf32>
    %19 = tpu.matmul %14, %2, %cst_8 {dimension_numbers = #tpu.dot_dimension_numbers<[1], [0], [0], [1], [0, 0, 1, 1], [], []>} : vector<8x64xf32>, vector<64x128xf32>, vector<8x128xf32> -> vector<8x128xf32>
    %20 = arith.addf %18, %19 : vector<8x128xf32>
    %21 = vector.extract_strided_slice %20 {offsets = [0, 0], sizes = [8, 96], strides = [1, 1]} : vector<8x128xf32> to vector<8x96xf32>
    %22 = arith.negf %21 : vector<8x96xf32>
    %23 = math.exp %22 : vector<8x96xf32>
    %cst_9 = arith.constant 1.000000e+00 : f32
    %24 = vector.broadcast %cst_9 : f32 to vector<8x96xf32>
    %25 = arith.addf %24, %23 : vector<8x96xf32>
    %26 = arith.divf %24, %25 : vector<8x96xf32>
    %27 = vector.extract_strided_slice %20 {offsets = [0, 96], sizes = [8, 32], strides = [1, 1]} : vector<8x128xf32> to vector<8x32xf32>
    %28 = math.tanh %27 : vector<8x32xf32>
    %29 = vector.extract_strided_slice %26 {offsets = [0, 0], sizes = [8, 32], strides = [1, 1]} : vector<8x96xf32> to vector<8x32xf32>
    %30 = vector.extract_strided_slice %26 {offsets = [0, 32], sizes = [8, 32], strides = [1, 1]} : vector<8x96xf32> to vector<8x32xf32>
    %31 = vector.extract_strided_slice %26 {offsets = [0, 64], sizes = [8, 32], strides = [1, 1]} : vector<8x96xf32> to vector<8x32xf32>
    %32 = arith.mulf %30, %15 : vector<8x32xf32>
    %33 = arith.mulf %29, %28 : vector<8x32xf32>
    %34 = arith.addf %32, %33 : vector<8x32xf32>
    %35 = math.tanh %34 : vector<8x32xf32>
    %36 = arith.mulf %31, %35 : vector<8x32xf32>
    %37 = vector.broadcast %11 : vector<8x1xf32> to vector<8x32xf32>
    %38 = arith.mulf %36, %37 : vector<8x32xf32>
    %39 = vector.broadcast %13 : vector<8x1xf32> to vector<8x32xf32>
    %40 = arith.mulf %36, %39 : vector<8x32xf32>
    %41 = tpu.concatenate %38, %40 in 1 : vector<8x32xf32>, vector<8x32xf32> -> vector<8x64xf32>
    %42 = vector.extract_strided_slice %6 {offsets = [4, 0], sizes = [4, 128], strides = [1, 1]} : vector<32x256xf32> to vector<4x128xf32>
    %43 = vector.extract_strided_slice %6 {offsets = [24, 128], sizes = [4, 128], strides = [1, 1]} : vector<32x256xf32> to vector<4x128xf32>
    %44 = tpu.concatenate %42, %43 in 0 : vector<4x128xf32>, vector<4x128xf32> -> vector<8x128xf32>
    %cst_10 = arith.constant dense<0.000000e+00> : vector<8x128xf32>
    %45 = tpu.matmul %41, %2, %cst_10 {dimension_numbers = #tpu.dot_dimension_numbers<[1], [0], [0], [1], [0, 0, 1, 1], [], []>} : vector<8x64xf32>, vector<64x128xf32>, vector<8x128xf32> -> vector<8x128xf32>
    %46 = arith.addf %44, %45 : vector<8x128xf32>
    %47 = vector.extract_strided_slice %46 {offsets = [0, 0], sizes = [8, 96], strides = [1, 1]} : vector<8x128xf32> to vector<8x96xf32>
    %48 = arith.negf %47 : vector<8x96xf32>
    %49 = math.exp %48 : vector<8x96xf32>
    %cst_11 = arith.constant 1.000000e+00 : f32
    %50 = vector.broadcast %cst_11 : f32 to vector<8x96xf32>
    %51 = arith.addf %50, %49 : vector<8x96xf32>
    %52 = arith.divf %50, %51 : vector<8x96xf32>
    %53 = vector.extract_strided_slice %46 {offsets = [0, 96], sizes = [8, 32], strides = [1, 1]} : vector<8x128xf32> to vector<8x32xf32>
    %54 = math.tanh %53 : vector<8x32xf32>
    %55 = vector.extract_strided_slice %52 {offsets = [0, 0], sizes = [8, 32], strides = [1, 1]} : vector<8x96xf32> to vector<8x32xf32>
    %56 = vector.extract_strided_slice %52 {offsets = [0, 32], sizes = [8, 32], strides = [1, 1]} : vector<8x96xf32> to vector<8x32xf32>
    %57 = vector.extract_strided_slice %52 {offsets = [0, 64], sizes = [8, 32], strides = [1, 1]} : vector<8x96xf32> to vector<8x32xf32>
    %58 = arith.mulf %56, %34 : vector<8x32xf32>
    %59 = arith.mulf %55, %54 : vector<8x32xf32>
    %60 = arith.addf %58, %59 : vector<8x32xf32>
    %61 = math.tanh %60 : vector<8x32xf32>
    %62 = arith.mulf %57, %61 : vector<8x32xf32>
    %63 = vector.broadcast %11 : vector<8x1xf32> to vector<8x32xf32>
    %64 = arith.mulf %62, %63 : vector<8x32xf32>
    %65 = vector.broadcast %13 : vector<8x1xf32> to vector<8x32xf32>
    %66 = arith.mulf %62, %65 : vector<8x32xf32>
    %67 = tpu.concatenate %64, %66 in 1 : vector<8x32xf32>, vector<8x32xf32> -> vector<8x64xf32>
    %68 = vector.extract_strided_slice %6 {offsets = [8, 0], sizes = [4, 128], strides = [1, 1]} : vector<32x256xf32> to vector<4x128xf32>
    %69 = vector.extract_strided_slice %6 {offsets = [20, 128], sizes = [4, 128], strides = [1, 1]} : vector<32x256xf32> to vector<4x128xf32>
    %70 = tpu.concatenate %68, %69 in 0 : vector<4x128xf32>, vector<4x128xf32> -> vector<8x128xf32>
    %cst_12 = arith.constant dense<0.000000e+00> : vector<8x128xf32>
    %71 = tpu.matmul %67, %2, %cst_12 {dimension_numbers = #tpu.dot_dimension_numbers<[1], [0], [0], [1], [0, 0, 1, 1], [], []>} : vector<8x64xf32>, vector<64x128xf32>, vector<8x128xf32> -> vector<8x128xf32>
    %72 = arith.addf %70, %71 : vector<8x128xf32>
    %73 = vector.extract_strided_slice %72 {offsets = [0, 0], sizes = [8, 96], strides = [1, 1]} : vector<8x128xf32> to vector<8x96xf32>
    %74 = arith.negf %73 : vector<8x96xf32>
    %75 = math.exp %74 : vector<8x96xf32>
    %cst_13 = arith.constant 1.000000e+00 : f32
    %76 = vector.broadcast %cst_13 : f32 to vector<8x96xf32>
    %77 = arith.addf %76, %75 : vector<8x96xf32>
    %78 = arith.divf %76, %77 : vector<8x96xf32>
    %79 = vector.extract_strided_slice %72 {offsets = [0, 96], sizes = [8, 32], strides = [1, 1]} : vector<8x128xf32> to vector<8x32xf32>
    %80 = math.tanh %79 : vector<8x32xf32>
    %81 = vector.extract_strided_slice %78 {offsets = [0, 0], sizes = [8, 32], strides = [1, 1]} : vector<8x96xf32> to vector<8x32xf32>
    %82 = vector.extract_strided_slice %78 {offsets = [0, 32], sizes = [8, 32], strides = [1, 1]} : vector<8x96xf32> to vector<8x32xf32>
    %83 = vector.extract_strided_slice %78 {offsets = [0, 64], sizes = [8, 32], strides = [1, 1]} : vector<8x96xf32> to vector<8x32xf32>
    %84 = arith.mulf %82, %60 : vector<8x32xf32>
    %85 = arith.mulf %81, %80 : vector<8x32xf32>
    %86 = arith.addf %84, %85 : vector<8x32xf32>
    %87 = math.tanh %86 : vector<8x32xf32>
    %88 = arith.mulf %83, %87 : vector<8x32xf32>
    %89 = vector.broadcast %11 : vector<8x1xf32> to vector<8x32xf32>
    %90 = arith.mulf %88, %89 : vector<8x32xf32>
    %91 = vector.broadcast %13 : vector<8x1xf32> to vector<8x32xf32>
    %92 = arith.mulf %88, %91 : vector<8x32xf32>
    %93 = tpu.concatenate %90, %92 in 1 : vector<8x32xf32>, vector<8x32xf32> -> vector<8x64xf32>
    %94 = vector.extract_strided_slice %6 {offsets = [12, 0], sizes = [4, 128], strides = [1, 1]} : vector<32x256xf32> to vector<4x128xf32>
    %95 = vector.extract_strided_slice %6 {offsets = [16, 128], sizes = [4, 128], strides = [1, 1]} : vector<32x256xf32> to vector<4x128xf32>
    %96 = tpu.concatenate %94, %95 in 0 : vector<4x128xf32>, vector<4x128xf32> -> vector<8x128xf32>
    %cst_14 = arith.constant dense<0.000000e+00> : vector<8x128xf32>
    %97 = tpu.matmul %93, %2, %cst_14 {dimension_numbers = #tpu.dot_dimension_numbers<[1], [0], [0], [1], [0, 0, 1, 1], [], []>} : vector<8x64xf32>, vector<64x128xf32>, vector<8x128xf32> -> vector<8x128xf32>
    %98 = arith.addf %96, %97 : vector<8x128xf32>
    %99 = vector.extract_strided_slice %98 {offsets = [0, 0], sizes = [8, 96], strides = [1, 1]} : vector<8x128xf32> to vector<8x96xf32>
    %100 = arith.negf %99 : vector<8x96xf32>
    %101 = math.exp %100 : vector<8x96xf32>
    %cst_15 = arith.constant 1.000000e+00 : f32
    %102 = vector.broadcast %cst_15 : f32 to vector<8x96xf32>
    %103 = arith.addf %102, %101 : vector<8x96xf32>
    %104 = arith.divf %102, %103 : vector<8x96xf32>
    %105 = vector.extract_strided_slice %98 {offsets = [0, 96], sizes = [8, 32], strides = [1, 1]} : vector<8x128xf32> to vector<8x32xf32>
    %106 = math.tanh %105 : vector<8x32xf32>
    %107 = vector.extract_strided_slice %104 {offsets = [0, 0], sizes = [8, 32], strides = [1, 1]} : vector<8x96xf32> to vector<8x32xf32>
    %108 = vector.extract_strided_slice %104 {offsets = [0, 32], sizes = [8, 32], strides = [1, 1]} : vector<8x96xf32> to vector<8x32xf32>
    %109 = vector.extract_strided_slice %104 {offsets = [0, 64], sizes = [8, 32], strides = [1, 1]} : vector<8x96xf32> to vector<8x32xf32>
    %110 = arith.mulf %108, %86 : vector<8x32xf32>
    %111 = arith.mulf %107, %106 : vector<8x32xf32>
    %112 = arith.addf %110, %111 : vector<8x32xf32>
    %113 = math.tanh %112 : vector<8x32xf32>
    %114 = arith.mulf %109, %113 : vector<8x32xf32>
    %115 = vector.broadcast %11 : vector<8x1xf32> to vector<8x32xf32>
    %116 = arith.mulf %114, %115 : vector<8x32xf32>
    %117 = vector.broadcast %13 : vector<8x1xf32> to vector<8x32xf32>
    %118 = arith.mulf %114, %117 : vector<8x32xf32>
    %119 = tpu.concatenate %116, %118 in 1 : vector<8x32xf32>, vector<8x32xf32> -> vector<8x64xf32>
    %120 = vector.extract_strided_slice %6 {offsets = [16, 0], sizes = [4, 128], strides = [1, 1]} : vector<32x256xf32> to vector<4x128xf32>
    %121 = vector.extract_strided_slice %6 {offsets = [12, 128], sizes = [4, 128], strides = [1, 1]} : vector<32x256xf32> to vector<4x128xf32>
    %122 = tpu.concatenate %120, %121 in 0 : vector<4x128xf32>, vector<4x128xf32> -> vector<8x128xf32>
    %cst_16 = arith.constant dense<0.000000e+00> : vector<8x128xf32>
    %123 = tpu.matmul %119, %2, %cst_16 {dimension_numbers = #tpu.dot_dimension_numbers<[1], [0], [0], [1], [0, 0, 1, 1], [], []>} : vector<8x64xf32>, vector<64x128xf32>, vector<8x128xf32> -> vector<8x128xf32>
    %124 = arith.addf %122, %123 : vector<8x128xf32>
    %125 = vector.extract_strided_slice %124 {offsets = [0, 0], sizes = [8, 96], strides = [1, 1]} : vector<8x128xf32> to vector<8x96xf32>
    %126 = arith.negf %125 : vector<8x96xf32>
    %127 = math.exp %126 : vector<8x96xf32>
    %cst_17 = arith.constant 1.000000e+00 : f32
    %128 = vector.broadcast %cst_17 : f32 to vector<8x96xf32>
    %129 = arith.addf %128, %127 : vector<8x96xf32>
    %130 = arith.divf %128, %129 : vector<8x96xf32>
    %131 = vector.extract_strided_slice %124 {offsets = [0, 96], sizes = [8, 32], strides = [1, 1]} : vector<8x128xf32> to vector<8x32xf32>
    %132 = math.tanh %131 : vector<8x32xf32>
    %133 = vector.extract_strided_slice %130 {offsets = [0, 0], sizes = [8, 32], strides = [1, 1]} : vector<8x96xf32> to vector<8x32xf32>
    %134 = vector.extract_strided_slice %130 {offsets = [0, 32], sizes = [8, 32], strides = [1, 1]} : vector<8x96xf32> to vector<8x32xf32>
    %135 = vector.extract_strided_slice %130 {offsets = [0, 64], sizes = [8, 32], strides = [1, 1]} : vector<8x96xf32> to vector<8x32xf32>
    %136 = arith.mulf %134, %112 : vector<8x32xf32>
    %137 = arith.mulf %133, %132 : vector<8x32xf32>
    %138 = arith.addf %136, %137 : vector<8x32xf32>
    %139 = math.tanh %138 : vector<8x32xf32>
    %140 = arith.mulf %135, %139 : vector<8x32xf32>
    %141 = vector.broadcast %11 : vector<8x1xf32> to vector<8x32xf32>
    %142 = arith.mulf %140, %141 : vector<8x32xf32>
    %143 = vector.broadcast %13 : vector<8x1xf32> to vector<8x32xf32>
    %144 = arith.mulf %140, %143 : vector<8x32xf32>
    %145 = tpu.concatenate %142, %144 in 1 : vector<8x32xf32>, vector<8x32xf32> -> vector<8x64xf32>
    %146 = vector.extract_strided_slice %6 {offsets = [20, 0], sizes = [4, 128], strides = [1, 1]} : vector<32x256xf32> to vector<4x128xf32>
    %147 = vector.extract_strided_slice %6 {offsets = [8, 128], sizes = [4, 128], strides = [1, 1]} : vector<32x256xf32> to vector<4x128xf32>
    %148 = tpu.concatenate %146, %147 in 0 : vector<4x128xf32>, vector<4x128xf32> -> vector<8x128xf32>
    %cst_18 = arith.constant dense<0.000000e+00> : vector<8x128xf32>
    %149 = tpu.matmul %145, %2, %cst_18 {dimension_numbers = #tpu.dot_dimension_numbers<[1], [0], [0], [1], [0, 0, 1, 1], [], []>} : vector<8x64xf32>, vector<64x128xf32>, vector<8x128xf32> -> vector<8x128xf32>
    %150 = arith.addf %148, %149 : vector<8x128xf32>
    %151 = vector.extract_strided_slice %150 {offsets = [0, 0], sizes = [8, 96], strides = [1, 1]} : vector<8x128xf32> to vector<8x96xf32>
    %152 = arith.negf %151 : vector<8x96xf32>
    %153 = math.exp %152 : vector<8x96xf32>
    %cst_19 = arith.constant 1.000000e+00 : f32
    %154 = vector.broadcast %cst_19 : f32 to vector<8x96xf32>
    %155 = arith.addf %154, %153 : vector<8x96xf32>
    %156 = arith.divf %154, %155 : vector<8x96xf32>
    %157 = vector.extract_strided_slice %150 {offsets = [0, 96], sizes = [8, 32], strides = [1, 1]} : vector<8x128xf32> to vector<8x32xf32>
    %158 = math.tanh %157 : vector<8x32xf32>
    %159 = vector.extract_strided_slice %156 {offsets = [0, 0], sizes = [8, 32], strides = [1, 1]} : vector<8x96xf32> to vector<8x32xf32>
    %160 = vector.extract_strided_slice %156 {offsets = [0, 32], sizes = [8, 32], strides = [1, 1]} : vector<8x96xf32> to vector<8x32xf32>
    %161 = vector.extract_strided_slice %156 {offsets = [0, 64], sizes = [8, 32], strides = [1, 1]} : vector<8x96xf32> to vector<8x32xf32>
    %162 = arith.mulf %160, %138 : vector<8x32xf32>
    %163 = arith.mulf %159, %158 : vector<8x32xf32>
    %164 = arith.addf %162, %163 : vector<8x32xf32>
    %165 = math.tanh %164 : vector<8x32xf32>
    %166 = arith.mulf %161, %165 : vector<8x32xf32>
    %167 = vector.broadcast %11 : vector<8x1xf32> to vector<8x32xf32>
    %168 = arith.mulf %166, %167 : vector<8x32xf32>
    %169 = vector.broadcast %13 : vector<8x1xf32> to vector<8x32xf32>
    %170 = arith.mulf %166, %169 : vector<8x32xf32>
    %171 = tpu.concatenate %168, %170 in 1 : vector<8x32xf32>, vector<8x32xf32> -> vector<8x64xf32>
    %172 = vector.extract_strided_slice %6 {offsets = [24, 0], sizes = [4, 128], strides = [1, 1]} : vector<32x256xf32> to vector<4x128xf32>
    %173 = vector.extract_strided_slice %6 {offsets = [4, 128], sizes = [4, 128], strides = [1, 1]} : vector<32x256xf32> to vector<4x128xf32>
    %174 = tpu.concatenate %172, %173 in 0 : vector<4x128xf32>, vector<4x128xf32> -> vector<8x128xf32>
    %cst_20 = arith.constant dense<0.000000e+00> : vector<8x128xf32>
    %175 = tpu.matmul %171, %2, %cst_20 {dimension_numbers = #tpu.dot_dimension_numbers<[1], [0], [0], [1], [0, 0, 1, 1], [], []>} : vector<8x64xf32>, vector<64x128xf32>, vector<8x128xf32> -> vector<8x128xf32>
    %176 = arith.addf %174, %175 : vector<8x128xf32>
    %177 = vector.extract_strided_slice %176 {offsets = [0, 0], sizes = [8, 96], strides = [1, 1]} : vector<8x128xf32> to vector<8x96xf32>
    %178 = arith.negf %177 : vector<8x96xf32>
    %179 = math.exp %178 : vector<8x96xf32>
    %cst_21 = arith.constant 1.000000e+00 : f32
    %180 = vector.broadcast %cst_21 : f32 to vector<8x96xf32>
    %181 = arith.addf %180, %179 : vector<8x96xf32>
    %182 = arith.divf %180, %181 : vector<8x96xf32>
    %183 = vector.extract_strided_slice %176 {offsets = [0, 96], sizes = [8, 32], strides = [1, 1]} : vector<8x128xf32> to vector<8x32xf32>
    %184 = math.tanh %183 : vector<8x32xf32>
    %185 = vector.extract_strided_slice %182 {offsets = [0, 0], sizes = [8, 32], strides = [1, 1]} : vector<8x96xf32> to vector<8x32xf32>
    %186 = vector.extract_strided_slice %182 {offsets = [0, 32], sizes = [8, 32], strides = [1, 1]} : vector<8x96xf32> to vector<8x32xf32>
    %187 = vector.extract_strided_slice %182 {offsets = [0, 64], sizes = [8, 32], strides = [1, 1]} : vector<8x96xf32> to vector<8x32xf32>
    %188 = arith.mulf %186, %164 : vector<8x32xf32>
    %189 = arith.mulf %185, %184 : vector<8x32xf32>
    %190 = arith.addf %188, %189 : vector<8x32xf32>
    %191 = math.tanh %190 : vector<8x32xf32>
    %192 = arith.mulf %187, %191 : vector<8x32xf32>
    %193 = vector.broadcast %11 : vector<8x1xf32> to vector<8x32xf32>
    %194 = arith.mulf %192, %193 : vector<8x32xf32>
    %195 = vector.broadcast %13 : vector<8x1xf32> to vector<8x32xf32>
    %196 = arith.mulf %192, %195 : vector<8x32xf32>
    %197 = tpu.concatenate %194, %196 in 1 : vector<8x32xf32>, vector<8x32xf32> -> vector<8x64xf32>
    %198 = vector.extract_strided_slice %6 {offsets = [28, 0], sizes = [4, 128], strides = [1, 1]} : vector<32x256xf32> to vector<4x128xf32>
    %199 = vector.extract_strided_slice %6 {offsets = [0, 128], sizes = [4, 128], strides = [1, 1]} : vector<32x256xf32> to vector<4x128xf32>
    %200 = tpu.concatenate %198, %199 in 0 : vector<4x128xf32>, vector<4x128xf32> -> vector<8x128xf32>
    %cst_22 = arith.constant dense<0.000000e+00> : vector<8x128xf32>
    %201 = tpu.matmul %197, %2, %cst_22 {dimension_numbers = #tpu.dot_dimension_numbers<[1], [0], [0], [1], [0, 0, 1, 1], [], []>} : vector<8x64xf32>, vector<64x128xf32>, vector<8x128xf32> -> vector<8x128xf32>
    %202 = arith.addf %200, %201 : vector<8x128xf32>
    %203 = vector.extract_strided_slice %202 {offsets = [0, 0], sizes = [8, 96], strides = [1, 1]} : vector<8x128xf32> to vector<8x96xf32>
    %204 = arith.negf %203 : vector<8x96xf32>
    %205 = math.exp %204 : vector<8x96xf32>
    %cst_23 = arith.constant 1.000000e+00 : f32
    %206 = vector.broadcast %cst_23 : f32 to vector<8x96xf32>
    %207 = arith.addf %206, %205 : vector<8x96xf32>
    %208 = arith.divf %206, %207 : vector<8x96xf32>
    %209 = vector.extract_strided_slice %202 {offsets = [0, 96], sizes = [8, 32], strides = [1, 1]} : vector<8x128xf32> to vector<8x32xf32>
    %210 = math.tanh %209 : vector<8x32xf32>
    %211 = vector.extract_strided_slice %208 {offsets = [0, 0], sizes = [8, 32], strides = [1, 1]} : vector<8x96xf32> to vector<8x32xf32>
    %212 = vector.extract_strided_slice %208 {offsets = [0, 32], sizes = [8, 32], strides = [1, 1]} : vector<8x96xf32> to vector<8x32xf32>
    %213 = vector.extract_strided_slice %208 {offsets = [0, 64], sizes = [8, 32], strides = [1, 1]} : vector<8x96xf32> to vector<8x32xf32>
    %214 = arith.mulf %212, %190 : vector<8x32xf32>
    %215 = arith.mulf %211, %210 : vector<8x32xf32>
    %216 = arith.addf %214, %215 : vector<8x32xf32>
    %217 = math.tanh %216 : vector<8x32xf32>
    %218 = arith.mulf %213, %217 : vector<8x32xf32>
    %219 = vector.broadcast %11 : vector<8x1xf32> to vector<8x32xf32>
    %220 = arith.mulf %218, %219 : vector<8x32xf32>
    %221 = vector.broadcast %13 : vector<8x1xf32> to vector<8x32xf32>
    %222 = arith.mulf %218, %221 : vector<8x32xf32>
    %223 = tpu.concatenate %220, %222 in 1 : vector<8x32xf32>, vector<8x32xf32> -> vector<8x64xf32>
    %224 = vector.extract_strided_slice %41 {offsets = [0, 0], sizes = [4, 64], strides = [1, 1]} : vector<8x64xf32> to vector<4x64xf32>
    %225 = vector.extract_strided_slice %223 {offsets = [4, 0], sizes = [4, 64], strides = [1, 1]} : vector<8x64xf32> to vector<4x64xf32>
    %226 = arith.addf %224, %225 : vector<4x64xf32>
    %227 = vector.extract_strided_slice %67 {offsets = [0, 0], sizes = [4, 64], strides = [1, 1]} : vector<8x64xf32> to vector<4x64xf32>
    %228 = vector.extract_strided_slice %197 {offsets = [4, 0], sizes = [4, 64], strides = [1, 1]} : vector<8x64xf32> to vector<4x64xf32>
    %229 = arith.addf %227, %228 : vector<4x64xf32>
    %230 = vector.extract_strided_slice %93 {offsets = [0, 0], sizes = [4, 64], strides = [1, 1]} : vector<8x64xf32> to vector<4x64xf32>
    %231 = vector.extract_strided_slice %171 {offsets = [4, 0], sizes = [4, 64], strides = [1, 1]} : vector<8x64xf32> to vector<4x64xf32>
    %232 = arith.addf %230, %231 : vector<4x64xf32>
    %233 = vector.extract_strided_slice %119 {offsets = [0, 0], sizes = [4, 64], strides = [1, 1]} : vector<8x64xf32> to vector<4x64xf32>
    %234 = vector.extract_strided_slice %145 {offsets = [4, 0], sizes = [4, 64], strides = [1, 1]} : vector<8x64xf32> to vector<4x64xf32>
    %235 = arith.addf %233, %234 : vector<4x64xf32>
    %236 = vector.extract_strided_slice %145 {offsets = [0, 0], sizes = [4, 64], strides = [1, 1]} : vector<8x64xf32> to vector<4x64xf32>
    %237 = vector.extract_strided_slice %119 {offsets = [4, 0], sizes = [4, 64], strides = [1, 1]} : vector<8x64xf32> to vector<4x64xf32>
    %238 = arith.addf %236, %237 : vector<4x64xf32>
    %239 = vector.extract_strided_slice %171 {offsets = [0, 0], sizes = [4, 64], strides = [1, 1]} : vector<8x64xf32> to vector<4x64xf32>
    %240 = vector.extract_strided_slice %93 {offsets = [4, 0], sizes = [4, 64], strides = [1, 1]} : vector<8x64xf32> to vector<4x64xf32>
    %241 = arith.addf %239, %240 : vector<4x64xf32>
    %242 = vector.extract_strided_slice %197 {offsets = [0, 0], sizes = [4, 64], strides = [1, 1]} : vector<8x64xf32> to vector<4x64xf32>
    %243 = vector.extract_strided_slice %67 {offsets = [4, 0], sizes = [4, 64], strides = [1, 1]} : vector<8x64xf32> to vector<4x64xf32>
    %244 = arith.addf %242, %243 : vector<4x64xf32>
    %245 = vector.extract_strided_slice %223 {offsets = [0, 0], sizes = [4, 64], strides = [1, 1]} : vector<8x64xf32> to vector<4x64xf32>
    %246 = vector.extract_strided_slice %41 {offsets = [4, 0], sizes = [4, 64], strides = [1, 1]} : vector<8x64xf32> to vector<4x64xf32>
    %247 = arith.addf %245, %246 : vector<4x64xf32>
    %248 = tpu.concatenate %226, %229, %232, %235, %238, %241, %244, %247 in 0 : vector<4x64xf32>, vector<4x64xf32>, vector<4x64xf32>, vector<4x64xf32>, vector<4x64xf32>, vector<4x64xf32>, vector<4x64xf32>, vector<4x64xf32> -> vector<32x64xf32>
    %c8 = arith.constant 8 : index
    %c0_24 = arith.constant 0 : index
    %249 = vector.load %arg1[%c8, %c0_24] : memref<456x256xf32, #tpu.memory_space<vmem>>, vector<64x256xf32>
    %c136 = arith.constant 136 : index
    %c0_25 = arith.constant 0 : index
    %250 = vector.load %arg1[%c136, %c0_25] : memref<456x256xf32, #tpu.memory_space<vmem>>, vector<64x128xf32>
    %c208 = arith.constant 208 : index
    %c0_26 = arith.constant 0 : index
    %251 = vector.load %arg1[%c208, %c0_26] : memref<456x256xf32, #tpu.memory_space<vmem>>, vector<1x256xf32>
    %cst_27 = arith.constant dense<0.000000e+00> : vector<32x256xf32>
    %252 = tpu.matmul %248, %249, %cst_27 {dimension_numbers = #tpu.dot_dimension_numbers<[1], [0], [0], [1], [0, 0, 1, 1], [], []>} : vector<32x64xf32>, vector<64x256xf32>, vector<32x256xf32> -> vector<32x256xf32>
    %253 = vector.broadcast %251 : vector<1x256xf32> to vector<32x256xf32>
    %254 = arith.addf %252, %253 : vector<32x256xf32>
    %255 = tpu.iota {dimensions = array<i32: 0>} : vector<8x1xi32>
    %c4_i32_28 = arith.constant 4 : i32
    %256 = vector.broadcast %c4_i32_28 : i32 to vector<8x1xi32>
    %257 = arith.cmpi slt, %255, %256 : vector<8x1xi32>
    %258 = arith.extui %257 : vector<8x1xi1> to vector<8x1xi32>
    %259 = arith.sitofp %258 : vector<8x1xi32> to vector<8x1xf32>
    %cst_29 = arith.constant 1.000000e+00 : f32
    %260 = vector.broadcast %cst_29 : f32 to vector<8x1xf32>
    %261 = arith.subf %260, %259 : vector<8x1xf32>
    %cst_30 = arith.constant 0.000000e+00 : f32
    %262 = vector.broadcast %cst_30 : f32 to vector<8x64xf32>
    %cst_31 = arith.constant 0.000000e+00 : f32
    %263 = vector.broadcast %cst_31 : f32 to vector<8x32xf32>
    %264 = vector.extract_strided_slice %254 {offsets = [0, 0], sizes = [4, 128], strides = [1, 1]} : vector<32x256xf32> to vector<4x128xf32>
    %265 = vector.extract_strided_slice %254 {offsets = [28, 128], sizes = [4, 128], strides = [1, 1]} : vector<32x256xf32> to vector<4x128xf32>
    %266 = tpu.concatenate %264, %265 in 0 : vector<4x128xf32>, vector<4x128xf32> -> vector<8x128xf32>
    %cst_32 = arith.constant dense<0.000000e+00> : vector<8x128xf32>
    %267 = tpu.matmul %262, %250, %cst_32 {dimension_numbers = #tpu.dot_dimension_numbers<[1], [0], [0], [1], [0, 0, 1, 1], [], []>} : vector<8x64xf32>, vector<64x128xf32>, vector<8x128xf32> -> vector<8x128xf32>
    %268 = arith.addf %266, %267 : vector<8x128xf32>
    %269 = vector.extract_strided_slice %268 {offsets = [0, 0], sizes = [8, 96], strides = [1, 1]} : vector<8x128xf32> to vector<8x96xf32>
    %270 = arith.negf %269 : vector<8x96xf32>
    %271 = math.exp %270 : vector<8x96xf32>
    %cst_33 = arith.constant 1.000000e+00 : f32
    %272 = vector.broadcast %cst_33 : f32 to vector<8x96xf32>
    %273 = arith.addf %272, %271 : vector<8x96xf32>
    %274 = arith.divf %272, %273 : vector<8x96xf32>
    %275 = vector.extract_strided_slice %268 {offsets = [0, 96], sizes = [8, 32], strides = [1, 1]} : vector<8x128xf32> to vector<8x32xf32>
    %276 = math.tanh %275 : vector<8x32xf32>
    %277 = vector.extract_strided_slice %274 {offsets = [0, 0], sizes = [8, 32], strides = [1, 1]} : vector<8x96xf32> to vector<8x32xf32>
    %278 = vector.extract_strided_slice %274 {offsets = [0, 32], sizes = [8, 32], strides = [1, 1]} : vector<8x96xf32> to vector<8x32xf32>
    %279 = vector.extract_strided_slice %274 {offsets = [0, 64], sizes = [8, 32], strides = [1, 1]} : vector<8x96xf32> to vector<8x32xf32>
    %280 = arith.mulf %278, %263 : vector<8x32xf32>
    %281 = arith.mulf %277, %276 : vector<8x32xf32>
    %282 = arith.addf %280, %281 : vector<8x32xf32>
    %283 = math.tanh %282 : vector<8x32xf32>
    %284 = arith.mulf %279, %283 : vector<8x32xf32>
    %285 = vector.broadcast %259 : vector<8x1xf32> to vector<8x32xf32>
    %286 = arith.mulf %284, %285 : vector<8x32xf32>
    %287 = vector.broadcast %261 : vector<8x1xf32> to vector<8x32xf32>
    %288 = arith.mulf %284, %287 : vector<8x32xf32>
    %289 = tpu.concatenate %286, %288 in 1 : vector<8x32xf32>, vector<8x32xf32> -> vector<8x64xf32>
    %290 = vector.extract_strided_slice %254 {offsets = [4, 0], sizes = [4, 128], strides = [1, 1]} : vector<32x256xf32> to vector<4x128xf32>
    %291 = vector.extract_strided_slice %254 {offsets = [24, 128], sizes = [4, 128], strides = [1, 1]} : vector<32x256xf32> to vector<4x128xf32>
    %292 = tpu.concatenate %290, %291 in 0 : vector<4x128xf32>, vector<4x128xf32> -> vector<8x128xf32>
    %cst_34 = arith.constant dense<0.000000e+00> : vector<8x128xf32>
    %293 = tpu.matmul %289, %250, %cst_34 {dimension_numbers = #tpu.dot_dimension_numbers<[1], [0], [0], [1], [0, 0, 1, 1], [], []>} : vector<8x64xf32>, vector<64x128xf32>, vector<8x128xf32> -> vector<8x128xf32>
    %294 = arith.addf %292, %293 : vector<8x128xf32>
    %295 = vector.extract_strided_slice %294 {offsets = [0, 0], sizes = [8, 96], strides = [1, 1]} : vector<8x128xf32> to vector<8x96xf32>
    %296 = arith.negf %295 : vector<8x96xf32>
    %297 = math.exp %296 : vector<8x96xf32>
    %cst_35 = arith.constant 1.000000e+00 : f32
    %298 = vector.broadcast %cst_35 : f32 to vector<8x96xf32>
    %299 = arith.addf %298, %297 : vector<8x96xf32>
    %300 = arith.divf %298, %299 : vector<8x96xf32>
    %301 = vector.extract_strided_slice %294 {offsets = [0, 96], sizes = [8, 32], strides = [1, 1]} : vector<8x128xf32> to vector<8x32xf32>
    %302 = math.tanh %301 : vector<8x32xf32>
    %303 = vector.extract_strided_slice %300 {offsets = [0, 0], sizes = [8, 32], strides = [1, 1]} : vector<8x96xf32> to vector<8x32xf32>
    %304 = vector.extract_strided_slice %300 {offsets = [0, 32], sizes = [8, 32], strides = [1, 1]} : vector<8x96xf32> to vector<8x32xf32>
    %305 = vector.extract_strided_slice %300 {offsets = [0, 64], sizes = [8, 32], strides = [1, 1]} : vector<8x96xf32> to vector<8x32xf32>
    %306 = arith.mulf %304, %282 : vector<8x32xf32>
    %307 = arith.mulf %303, %302 : vector<8x32xf32>
    %308 = arith.addf %306, %307 : vector<8x32xf32>
    %309 = math.tanh %308 : vector<8x32xf32>
    %310 = arith.mulf %305, %309 : vector<8x32xf32>
    %311 = vector.broadcast %259 : vector<8x1xf32> to vector<8x32xf32>
    %312 = arith.mulf %310, %311 : vector<8x32xf32>
    %313 = vector.broadcast %261 : vector<8x1xf32> to vector<8x32xf32>
    %314 = arith.mulf %310, %313 : vector<8x32xf32>
    %315 = tpu.concatenate %312, %314 in 1 : vector<8x32xf32>, vector<8x32xf32> -> vector<8x64xf32>
    %316 = vector.extract_strided_slice %254 {offsets = [8, 0], sizes = [4, 128], strides = [1, 1]} : vector<32x256xf32> to vector<4x128xf32>
    %317 = vector.extract_strided_slice %254 {offsets = [20, 128], sizes = [4, 128], strides = [1, 1]} : vector<32x256xf32> to vector<4x128xf32>
    %318 = tpu.concatenate %316, %317 in 0 : vector<4x128xf32>, vector<4x128xf32> -> vector<8x128xf32>
    %cst_36 = arith.constant dense<0.000000e+00> : vector<8x128xf32>
    %319 = tpu.matmul %315, %250, %cst_36 {dimension_numbers = #tpu.dot_dimension_numbers<[1], [0], [0], [1], [0, 0, 1, 1], [], []>} : vector<8x64xf32>, vector<64x128xf32>, vector<8x128xf32> -> vector<8x128xf32>
    %320 = arith.addf %318, %319 : vector<8x128xf32>
    %321 = vector.extract_strided_slice %320 {offsets = [0, 0], sizes = [8, 96], strides = [1, 1]} : vector<8x128xf32> to vector<8x96xf32>
    %322 = arith.negf %321 : vector<8x96xf32>
    %323 = math.exp %322 : vector<8x96xf32>
    %cst_37 = arith.constant 1.000000e+00 : f32
    %324 = vector.broadcast %cst_37 : f32 to vector<8x96xf32>
    %325 = arith.addf %324, %323 : vector<8x96xf32>
    %326 = arith.divf %324, %325 : vector<8x96xf32>
    %327 = vector.extract_strided_slice %320 {offsets = [0, 96], sizes = [8, 32], strides = [1, 1]} : vector<8x128xf32> to vector<8x32xf32>
    %328 = math.tanh %327 : vector<8x32xf32>
    %329 = vector.extract_strided_slice %326 {offsets = [0, 0], sizes = [8, 32], strides = [1, 1]} : vector<8x96xf32> to vector<8x32xf32>
    %330 = vector.extract_strided_slice %326 {offsets = [0, 32], sizes = [8, 32], strides = [1, 1]} : vector<8x96xf32> to vector<8x32xf32>
    %331 = vector.extract_strided_slice %326 {offsets = [0, 64], sizes = [8, 32], strides = [1, 1]} : vector<8x96xf32> to vector<8x32xf32>
    %332 = arith.mulf %330, %308 : vector<8x32xf32>
    %333 = arith.mulf %329, %328 : vector<8x32xf32>
    %334 = arith.addf %332, %333 : vector<8x32xf32>
    %335 = math.tanh %334 : vector<8x32xf32>
    %336 = arith.mulf %331, %335 : vector<8x32xf32>
    %337 = vector.broadcast %259 : vector<8x1xf32> to vector<8x32xf32>
    %338 = arith.mulf %336, %337 : vector<8x32xf32>
    %339 = vector.broadcast %261 : vector<8x1xf32> to vector<8x32xf32>
    %340 = arith.mulf %336, %339 : vector<8x32xf32>
    %341 = tpu.concatenate %338, %340 in 1 : vector<8x32xf32>, vector<8x32xf32> -> vector<8x64xf32>
    %342 = vector.extract_strided_slice %254 {offsets = [12, 0], sizes = [4, 128], strides = [1, 1]} : vector<32x256xf32> to vector<4x128xf32>
    %343 = vector.extract_strided_slice %254 {offsets = [16, 128], sizes = [4, 128], strides = [1, 1]} : vector<32x256xf32> to vector<4x128xf32>
    %344 = tpu.concatenate %342, %343 in 0 : vector<4x128xf32>, vector<4x128xf32> -> vector<8x128xf32>
    %cst_38 = arith.constant dense<0.000000e+00> : vector<8x128xf32>
    %345 = tpu.matmul %341, %250, %cst_38 {dimension_numbers = #tpu.dot_dimension_numbers<[1], [0], [0], [1], [0, 0, 1, 1], [], []>} : vector<8x64xf32>, vector<64x128xf32>, vector<8x128xf32> -> vector<8x128xf32>
    %346 = arith.addf %344, %345 : vector<8x128xf32>
    %347 = vector.extract_strided_slice %346 {offsets = [0, 0], sizes = [8, 96], strides = [1, 1]} : vector<8x128xf32> to vector<8x96xf32>
    %348 = arith.negf %347 : vector<8x96xf32>
    %349 = math.exp %348 : vector<8x96xf32>
    %cst_39 = arith.constant 1.000000e+00 : f32
    %350 = vector.broadcast %cst_39 : f32 to vector<8x96xf32>
    %351 = arith.addf %350, %349 : vector<8x96xf32>
    %352 = arith.divf %350, %351 : vector<8x96xf32>
    %353 = vector.extract_strided_slice %346 {offsets = [0, 96], sizes = [8, 32], strides = [1, 1]} : vector<8x128xf32> to vector<8x32xf32>
    %354 = math.tanh %353 : vector<8x32xf32>
    %355 = vector.extract_strided_slice %352 {offsets = [0, 0], sizes = [8, 32], strides = [1, 1]} : vector<8x96xf32> to vector<8x32xf32>
    %356 = vector.extract_strided_slice %352 {offsets = [0, 32], sizes = [8, 32], strides = [1, 1]} : vector<8x96xf32> to vector<8x32xf32>
    %357 = vector.extract_strided_slice %352 {offsets = [0, 64], sizes = [8, 32], strides = [1, 1]} : vector<8x96xf32> to vector<8x32xf32>
    %358 = arith.mulf %356, %334 : vector<8x32xf32>
    %359 = arith.mulf %355, %354 : vector<8x32xf32>
    %360 = arith.addf %358, %359 : vector<8x32xf32>
    %361 = math.tanh %360 : vector<8x32xf32>
    %362 = arith.mulf %357, %361 : vector<8x32xf32>
    %363 = vector.broadcast %259 : vector<8x1xf32> to vector<8x32xf32>
    %364 = arith.mulf %362, %363 : vector<8x32xf32>
    %365 = vector.broadcast %261 : vector<8x1xf32> to vector<8x32xf32>
    %366 = arith.mulf %362, %365 : vector<8x32xf32>
    %367 = tpu.concatenate %364, %366 in 1 : vector<8x32xf32>, vector<8x32xf32> -> vector<8x64xf32>
    %368 = vector.extract_strided_slice %254 {offsets = [16, 0], sizes = [4, 128], strides = [1, 1]} : vector<32x256xf32> to vector<4x128xf32>
    %369 = vector.extract_strided_slice %254 {offsets = [12, 128], sizes = [4, 128], strides = [1, 1]} : vector<32x256xf32> to vector<4x128xf32>
    %370 = tpu.concatenate %368, %369 in 0 : vector<4x128xf32>, vector<4x128xf32> -> vector<8x128xf32>
    %cst_40 = arith.constant dense<0.000000e+00> : vector<8x128xf32>
    %371 = tpu.matmul %367, %250, %cst_40 {dimension_numbers = #tpu.dot_dimension_numbers<[1], [0], [0], [1], [0, 0, 1, 1], [], []>} : vector<8x64xf32>, vector<64x128xf32>, vector<8x128xf32> -> vector<8x128xf32>
    %372 = arith.addf %370, %371 : vector<8x128xf32>
    %373 = vector.extract_strided_slice %372 {offsets = [0, 0], sizes = [8, 96], strides = [1, 1]} : vector<8x128xf32> to vector<8x96xf32>
    %374 = arith.negf %373 : vector<8x96xf32>
    %375 = math.exp %374 : vector<8x96xf32>
    %cst_41 = arith.constant 1.000000e+00 : f32
    %376 = vector.broadcast %cst_41 : f32 to vector<8x96xf32>
    %377 = arith.addf %376, %375 : vector<8x96xf32>
    %378 = arith.divf %376, %377 : vector<8x96xf32>
    %379 = vector.extract_strided_slice %372 {offsets = [0, 96], sizes = [8, 32], strides = [1, 1]} : vector<8x128xf32> to vector<8x32xf32>
    %380 = math.tanh %379 : vector<8x32xf32>
    %381 = vector.extract_strided_slice %378 {offsets = [0, 0], sizes = [8, 32], strides = [1, 1]} : vector<8x96xf32> to vector<8x32xf32>
    %382 = vector.extract_strided_slice %378 {offsets = [0, 32], sizes = [8, 32], strides = [1, 1]} : vector<8x96xf32> to vector<8x32xf32>
    %383 = vector.extract_strided_slice %378 {offsets = [0, 64], sizes = [8, 32], strides = [1, 1]} : vector<8x96xf32> to vector<8x32xf32>
    %384 = arith.mulf %382, %360 : vector<8x32xf32>
    %385 = arith.mulf %381, %380 : vector<8x32xf32>
    %386 = arith.addf %384, %385 : vector<8x32xf32>
    %387 = math.tanh %386 : vector<8x32xf32>
    %388 = arith.mulf %383, %387 : vector<8x32xf32>
    %389 = vector.broadcast %259 : vector<8x1xf32> to vector<8x32xf32>
    %390 = arith.mulf %388, %389 : vector<8x32xf32>
    %391 = vector.broadcast %261 : vector<8x1xf32> to vector<8x32xf32>
    %392 = arith.mulf %388, %391 : vector<8x32xf32>
    %393 = tpu.concatenate %390, %392 in 1 : vector<8x32xf32>, vector<8x32xf32> -> vector<8x64xf32>
    %394 = vector.extract_strided_slice %254 {offsets = [20, 0], sizes = [4, 128], strides = [1, 1]} : vector<32x256xf32> to vector<4x128xf32>
    %395 = vector.extract_strided_slice %254 {offsets = [8, 128], sizes = [4, 128], strides = [1, 1]} : vector<32x256xf32> to vector<4x128xf32>
    %396 = tpu.concatenate %394, %395 in 0 : vector<4x128xf32>, vector<4x128xf32> -> vector<8x128xf32>
    %cst_42 = arith.constant dense<0.000000e+00> : vector<8x128xf32>
    %397 = tpu.matmul %393, %250, %cst_42 {dimension_numbers = #tpu.dot_dimension_numbers<[1], [0], [0], [1], [0, 0, 1, 1], [], []>} : vector<8x64xf32>, vector<64x128xf32>, vector<8x128xf32> -> vector<8x128xf32>
    %398 = arith.addf %396, %397 : vector<8x128xf32>
    %399 = vector.extract_strided_slice %398 {offsets = [0, 0], sizes = [8, 96], strides = [1, 1]} : vector<8x128xf32> to vector<8x96xf32>
    %400 = arith.negf %399 : vector<8x96xf32>
    %401 = math.exp %400 : vector<8x96xf32>
    %cst_43 = arith.constant 1.000000e+00 : f32
    %402 = vector.broadcast %cst_43 : f32 to vector<8x96xf32>
    %403 = arith.addf %402, %401 : vector<8x96xf32>
    %404 = arith.divf %402, %403 : vector<8x96xf32>
    %405 = vector.extract_strided_slice %398 {offsets = [0, 96], sizes = [8, 32], strides = [1, 1]} : vector<8x128xf32> to vector<8x32xf32>
    %406 = math.tanh %405 : vector<8x32xf32>
    %407 = vector.extract_strided_slice %404 {offsets = [0, 0], sizes = [8, 32], strides = [1, 1]} : vector<8x96xf32> to vector<8x32xf32>
    %408 = vector.extract_strided_slice %404 {offsets = [0, 32], sizes = [8, 32], strides = [1, 1]} : vector<8x96xf32> to vector<8x32xf32>
    %409 = vector.extract_strided_slice %404 {offsets = [0, 64], sizes = [8, 32], strides = [1, 1]} : vector<8x96xf32> to vector<8x32xf32>
    %410 = arith.mulf %408, %386 : vector<8x32xf32>
    %411 = arith.mulf %407, %406 : vector<8x32xf32>
    %412 = arith.addf %410, %411 : vector<8x32xf32>
    %413 = math.tanh %412 : vector<8x32xf32>
    %414 = arith.mulf %409, %413 : vector<8x32xf32>
    %415 = vector.broadcast %259 : vector<8x1xf32> to vector<8x32xf32>
    %416 = arith.mulf %414, %415 : vector<8x32xf32>
    %417 = vector.broadcast %261 : vector<8x1xf32> to vector<8x32xf32>
    %418 = arith.mulf %414, %417 : vector<8x32xf32>
    %419 = tpu.concatenate %416, %418 in 1 : vector<8x32xf32>, vector<8x32xf32> -> vector<8x64xf32>
    %420 = vector.extract_strided_slice %254 {offsets = [24, 0], sizes = [4, 128], strides = [1, 1]} : vector<32x256xf32> to vector<4x128xf32>
    %421 = vector.extract_strided_slice %254 {offsets = [4, 128], sizes = [4, 128], strides = [1, 1]} : vector<32x256xf32> to vector<4x128xf32>
    %422 = tpu.concatenate %420, %421 in 0 : vector<4x128xf32>, vector<4x128xf32> -> vector<8x128xf32>
    %cst_44 = arith.constant dense<0.000000e+00> : vector<8x128xf32>
    %423 = tpu.matmul %419, %250, %cst_44 {dimension_numbers = #tpu.dot_dimension_numbers<[1], [0], [0], [1], [0, 0, 1, 1], [], []>} : vector<8x64xf32>, vector<64x128xf32>, vector<8x128xf32> -> vector<8x128xf32>
    %424 = arith.addf %422, %423 : vector<8x128xf32>
    %425 = vector.extract_strided_slice %424 {offsets = [0, 0], sizes = [8, 96], strides = [1, 1]} : vector<8x128xf32> to vector<8x96xf32>
    %426 = arith.negf %425 : vector<8x96xf32>
    %427 = math.exp %426 : vector<8x96xf32>
    %cst_45 = arith.constant 1.000000e+00 : f32
    %428 = vector.broadcast %cst_45 : f32 to vector<8x96xf32>
    %429 = arith.addf %428, %427 : vector<8x96xf32>
    %430 = arith.divf %428, %429 : vector<8x96xf32>
    %431 = vector.extract_strided_slice %424 {offsets = [0, 96], sizes = [8, 32], strides = [1, 1]} : vector<8x128xf32> to vector<8x32xf32>
    %432 = math.tanh %431 : vector<8x32xf32>
    %433 = vector.extract_strided_slice %430 {offsets = [0, 0], sizes = [8, 32], strides = [1, 1]} : vector<8x96xf32> to vector<8x32xf32>
    %434 = vector.extract_strided_slice %430 {offsets = [0, 32], sizes = [8, 32], strides = [1, 1]} : vector<8x96xf32> to vector<8x32xf32>
    %435 = vector.extract_strided_slice %430 {offsets = [0, 64], sizes = [8, 32], strides = [1, 1]} : vector<8x96xf32> to vector<8x32xf32>
    %436 = arith.mulf %434, %412 : vector<8x32xf32>
    %437 = arith.mulf %433, %432 : vector<8x32xf32>
    %438 = arith.addf %436, %437 : vector<8x32xf32>
    %439 = math.tanh %438 : vector<8x32xf32>
    %440 = arith.mulf %435, %439 : vector<8x32xf32>
    %441 = vector.broadcast %259 : vector<8x1xf32> to vector<8x32xf32>
    %442 = arith.mulf %440, %441 : vector<8x32xf32>
    %443 = vector.broadcast %261 : vector<8x1xf32> to vector<8x32xf32>
    %444 = arith.mulf %440, %443 : vector<8x32xf32>
    %445 = tpu.concatenate %442, %444 in 1 : vector<8x32xf32>, vector<8x32xf32> -> vector<8x64xf32>
    %446 = vector.extract_strided_slice %254 {offsets = [28, 0], sizes = [4, 128], strides = [1, 1]} : vector<32x256xf32> to vector<4x128xf32>
    %447 = vector.extract_strided_slice %254 {offsets = [0, 128], sizes = [4, 128], strides = [1, 1]} : vector<32x256xf32> to vector<4x128xf32>
    %448 = tpu.concatenate %446, %447 in 0 : vector<4x128xf32>, vector<4x128xf32> -> vector<8x128xf32>
    %cst_46 = arith.constant dense<0.000000e+00> : vector<8x128xf32>
    %449 = tpu.matmul %445, %250, %cst_46 {dimension_numbers = #tpu.dot_dimension_numbers<[1], [0], [0], [1], [0, 0, 1, 1], [], []>} : vector<8x64xf32>, vector<64x128xf32>, vector<8x128xf32> -> vector<8x128xf32>
    %450 = arith.addf %448, %449 : vector<8x128xf32>
    %451 = vector.extract_strided_slice %450 {offsets = [0, 0], sizes = [8, 96], strides = [1, 1]} : vector<8x128xf32> to vector<8x96xf32>
    %452 = arith.negf %451 : vector<8x96xf32>
    %453 = math.exp %452 : vector<8x96xf32>
    %cst_47 = arith.constant 1.000000e+00 : f32
    %454 = vector.broadcast %cst_47 : f32 to vector<8x96xf32>
    %455 = arith.addf %454, %453 : vector<8x96xf32>
    %456 = arith.divf %454, %455 : vector<8x96xf32>
    %457 = vector.extract_strided_slice %450 {offsets = [0, 96], sizes = [8, 32], strides = [1, 1]} : vector<8x128xf32> to vector<8x32xf32>
    %458 = math.tanh %457 : vector<8x32xf32>
    %459 = vector.extract_strided_slice %456 {offsets = [0, 0], sizes = [8, 32], strides = [1, 1]} : vector<8x96xf32> to vector<8x32xf32>
    %460 = vector.extract_strided_slice %456 {offsets = [0, 32], sizes = [8, 32], strides = [1, 1]} : vector<8x96xf32> to vector<8x32xf32>
    %461 = vector.extract_strided_slice %456 {offsets = [0, 64], sizes = [8, 32], strides = [1, 1]} : vector<8x96xf32> to vector<8x32xf32>
    %462 = arith.mulf %460, %438 : vector<8x32xf32>
    %463 = arith.mulf %459, %458 : vector<8x32xf32>
    %464 = arith.addf %462, %463 : vector<8x32xf32>
    %465 = math.tanh %464 : vector<8x32xf32>
    %466 = arith.mulf %461, %465 : vector<8x32xf32>
    %467 = vector.broadcast %259 : vector<8x1xf32> to vector<8x32xf32>
    %468 = arith.mulf %466, %467 : vector<8x32xf32>
    %469 = vector.broadcast %261 : vector<8x1xf32> to vector<8x32xf32>
    %470 = arith.mulf %466, %469 : vector<8x32xf32>
    %471 = tpu.concatenate %468, %470 in 1 : vector<8x32xf32>, vector<8x32xf32> -> vector<8x64xf32>
    %472 = vector.extract_strided_slice %289 {offsets = [0, 0], sizes = [4, 64], strides = [1, 1]} : vector<8x64xf32> to vector<4x64xf32>
    %473 = vector.extract_strided_slice %471 {offsets = [4, 0], sizes = [4, 64], strides = [1, 1]} : vector<8x64xf32> to vector<4x64xf32>
    %474 = arith.addf %472, %473 : vector<4x64xf32>
    %475 = vector.extract_strided_slice %315 {offsets = [0, 0], sizes = [4, 64], strides = [1, 1]} : vector<8x64xf32> to vector<4x64xf32>
    %476 = vector.extract_strided_slice %445 {offsets = [4, 0], sizes = [4, 64], strides = [1, 1]} : vector<8x64xf32> to vector<4x64xf32>
    %477 = arith.addf %475, %476 : vector<4x64xf32>
    %478 = vector.extract_strided_slice %341 {offsets = [0, 0], sizes = [4, 64], strides = [1, 1]} : vector<8x64xf32> to vector<4x64xf32>
    %479 = vector.extract_strided_slice %419 {offsets = [4, 0], sizes = [4, 64], strides = [1, 1]} : vector<8x64xf32> to vector<4x64xf32>
    %480 = arith.addf %478, %479 : vector<4x64xf32>
    %481 = vector.extract_strided_slice %367 {offsets = [0, 0], sizes = [4, 64], strides = [1, 1]} : vector<8x64xf32> to vector<4x64xf32>
    %482 = vector.extract_strided_slice %393 {offsets = [4, 0], sizes = [4, 64], strides = [1, 1]} : vector<8x64xf32> to vector<4x64xf32>
    %483 = arith.addf %481, %482 : vector<4x64xf32>
    %484 = vector.extract_strided_slice %393 {offsets = [0, 0], sizes = [4, 64], strides = [1, 1]} : vector<8x64xf32> to vector<4x64xf32>
    %485 = vector.extract_strided_slice %367 {offsets = [4, 0], sizes = [4, 64], strides = [1, 1]} : vector<8x64xf32> to vector<4x64xf32>
    %486 = arith.addf %484, %485 : vector<4x64xf32>
    %487 = vector.extract_strided_slice %419 {offsets = [0, 0], sizes = [4, 64], strides = [1, 1]} : vector<8x64xf32> to vector<4x64xf32>
    %488 = vector.extract_strided_slice %341 {offsets = [4, 0], sizes = [4, 64], strides = [1, 1]} : vector<8x64xf32> to vector<4x64xf32>
    %489 = arith.addf %487, %488 : vector<4x64xf32>
    %490 = vector.extract_strided_slice %445 {offsets = [0, 0], sizes = [4, 64], strides = [1, 1]} : vector<8x64xf32> to vector<4x64xf32>
    %491 = vector.extract_strided_slice %315 {offsets = [4, 0], sizes = [4, 64], strides = [1, 1]} : vector<8x64xf32> to vector<4x64xf32>
    %492 = arith.addf %490, %491 : vector<4x64xf32>
    %493 = vector.extract_strided_slice %471 {offsets = [0, 0], sizes = [4, 64], strides = [1, 1]} : vector<8x64xf32> to vector<4x64xf32>
    %494 = vector.extract_strided_slice %289 {offsets = [4, 0], sizes = [4, 64], strides = [1, 1]} : vector<8x64xf32> to vector<4x64xf32>
    %495 = arith.addf %493, %494 : vector<4x64xf32>
    %496 = tpu.concatenate %474, %477, %480, %483, %486, %489, %492, %495 in 0 : vector<4x64xf32>, vector<4x64xf32>, vector<4x64xf32>, vector<4x64xf32>, vector<4x64xf32>, vector<4x64xf32>, vector<4x64xf32>, vector<4x64xf32> -> vector<32x64xf32>
    %c216 = arith.constant 216 : index
    %c0_48 = arith.constant 0 : index
    %497 = vector.load %arg1[%c216, %c0_48] : memref<456x256xf32, #tpu.memory_space<vmem>>, vector<64x192xf32>
    %cst_49 = arith.constant dense<0.000000e+00> : vector<32x192xf32>
    %498 = tpu.matmul %496, %497, %cst_49 {dimension_numbers = #tpu.dot_dimension_numbers<[1], [0], [0], [1], [0, 0, 1, 1], [], []>} : vector<32x64xf32>, vector<64x192xf32>, vector<32x192xf32> -> vector<32x192xf32>
    %499 = vector.extract_strided_slice %498 {offsets = [0, 0], sizes = [32, 64], strides = [1, 1]} : vector<32x192xf32> to vector<32x64xf32>
    %500 = vector.shape_cast %499 : vector<32x64xf32> to vector<8x4x64xf32>
    %501 = vector.extract_strided_slice %498 {offsets = [0, 64], sizes = [32, 64], strides = [1, 1]} : vector<32x192xf32> to vector<32x64xf32>
    %502 = vector.shape_cast %501 : vector<32x64xf32> to vector<8x4x64xf32>
    %503 = vector.extract_strided_slice %498 {offsets = [28, 128], sizes = [4, 64], strides = [1, 1]} : vector<32x192xf32> to vector<4x64xf32>
    %504 = vector.shape_cast %503 : vector<4x64xf32> to vector<1x4x64xf32>
    %505 = vector.broadcast %504 : vector<1x4x64xf32> to vector<8x4x64xf32>
    %506 = arith.mulf %500, %505 : vector<8x4x64xf32>
    %cst_50 = arith.constant dense<0.000000e+00> : vector<8x4xf32>
    %507 = vector.multi_reduction <add>, %506, %cst_50 [2] : vector<8x4x64xf32> to vector<8x4xf32>
    %508 = vector.shape_cast %507 : vector<8x4xf32> to vector<8x4x1xf32>
    %cst_51 = arith.constant 1.250000e-01 : f32
    %509 = vector.broadcast %cst_51 : f32 to vector<8x4x1xf32>
    %510 = arith.mulf %508, %509 : vector<8x4x1xf32>
    %cst_52 = arith.constant dense<0xFF800000> : vector<4x1xf32>
    %511 = vector.multi_reduction <maximumf>, %510, %cst_52 [0] : vector<8x4x1xf32> to vector<4x1xf32>
    %512 = vector.shape_cast %511 : vector<4x1xf32> to vector<1x4x1xf32>
    %513 = vector.broadcast %512 : vector<1x4x1xf32> to vector<8x4x1xf32>
    %514 = arith.subf %510, %513 : vector<8x4x1xf32>
    %515 = math.exp %514 : vector<8x4x1xf32>
    %cst_53 = arith.constant dense<0.000000e+00> : vector<4x1xf32>
    %516 = vector.multi_reduction <add>, %515, %cst_53 [0] : vector<8x4x1xf32> to vector<4x1xf32>
    %517 = vector.shape_cast %516 : vector<4x1xf32> to vector<1x4x1xf32>
    %518 = vector.broadcast %517 : vector<1x4x1xf32> to vector<8x4x1xf32>
    %519 = arith.divf %515, %518 : vector<8x4x1xf32>
    %520 = vector.broadcast %519 : vector<8x4x1xf32> to vector<8x4x64xf32>
    %521 = arith.mulf %520, %502 : vector<8x4x64xf32>
    %cst_54 = arith.constant dense<0.000000e+00> : vector<4x64xf32>
    %522 = vector.multi_reduction <add>, %521, %cst_54 [0] : vector<8x4x64xf32> to vector<4x64xf32>
    %523 = vector.extract_strided_slice %502 {offsets = [7, 0, 0], sizes = [1, 4, 64], strides = [1, 1, 1]} : vector<8x4x64xf32> to vector<1x4x64xf32>
    %524 = vector.shape_cast %523 : vector<1x4x64xf32> to vector<4x64xf32>
    %525 = arith.addf %522, %524 : vector<4x64xf32>
    %cst_55 = arith.constant dense<0.000000e+00> : vector<4xf32>
    %526 = vector.multi_reduction <add>, %525, %cst_55 [1] : vector<4x64xf32> to vector<4xf32>
    %527 = vector.shape_cast %526 : vector<4xf32> to vector<4x1xf32>
    %cst_56 = arith.constant 6.400000e+01 : f32
    %528 = vector.broadcast %cst_56 : f32 to vector<4x1xf32>
    %529 = arith.divf %527, %528 : vector<4x1xf32>
    %530 = vector.broadcast %529 : vector<4x1xf32> to vector<4x64xf32>
    %531 = arith.subf %525, %530 : vector<4x64xf32>
    %532 = vector.broadcast %529 : vector<4x1xf32> to vector<4x64xf32>
    %533 = arith.subf %525, %532 : vector<4x64xf32>
    %534 = arith.mulf %531, %533 : vector<4x64xf32>
    %cst_57 = arith.constant dense<0.000000e+00> : vector<4xf32>
    %535 = vector.multi_reduction <add>, %534, %cst_57 [1] : vector<4x64xf32> to vector<4xf32>
    %536 = vector.shape_cast %535 : vector<4xf32> to vector<4x1xf32>
    %cst_58 = arith.constant 6.400000e+01 : f32
    %537 = vector.broadcast %cst_58 : f32 to vector<4x1xf32>
    %538 = arith.divf %536, %537 : vector<4x1xf32>
    %539 = vector.broadcast %529 : vector<4x1xf32> to vector<4x64xf32>
    %540 = arith.subf %525, %539 : vector<4x64xf32>
    %cst_59 = arith.constant 9.99999974E-6 : f32
    %541 = vector.broadcast %cst_59 : f32 to vector<4x1xf32>
    %542 = arith.addf %538, %541 : vector<4x1xf32>
    %543 = math.rsqrt %542 : vector<4x1xf32>
    %544 = vector.broadcast %543 : vector<4x1xf32> to vector<4x64xf32>
    %545 = arith.mulf %540, %544 : vector<4x64xf32>
    %c280 = arith.constant 280 : index
    %c0_60 = arith.constant 0 : index
    %546 = vector.load %arg1[%c280, %c0_60] : memref<456x256xf32, #tpu.memory_space<vmem>>, vector<1x64xf32>
    %547 = vector.broadcast %546 : vector<1x64xf32> to vector<4x64xf32>
    %548 = arith.mulf %545, %547 : vector<4x64xf32>
    %c288 = arith.constant 288 : index
    %c0_61 = arith.constant 0 : index
    %549 = vector.load %arg1[%c288, %c0_61] : memref<456x256xf32, #tpu.memory_space<vmem>>, vector<1x64xf32>
    %550 = vector.broadcast %549 : vector<1x64xf32> to vector<4x64xf32>
    %551 = arith.addf %548, %550 : vector<4x64xf32>
    %c296 = arith.constant 296 : index
    %c0_62 = arith.constant 0 : index
    %552 = vector.load %arg1[%c296, %c0_62] : memref<456x256xf32, #tpu.memory_space<vmem>>, vector<64x64xf32>
    %cst_63 = arith.constant dense<0.000000e+00> : vector<4x64xf32>
    %553 = tpu.matmul %551, %552, %cst_63 {dimension_numbers = #tpu.dot_dimension_numbers<[1], [0], [0], [1], [0, 0, 1, 1], [], []>} : vector<4x64xf32>, vector<64x64xf32>, vector<4x64xf32> -> vector<4x64xf32>
    %c360 = arith.constant 360 : index
    %c0_64 = arith.constant 0 : index
    %554 = vector.load %arg1[%c360, %c0_64] : memref<456x256xf32, #tpu.memory_space<vmem>>, vector<1x64xf32>
    %555 = vector.broadcast %554 : vector<1x64xf32> to vector<4x64xf32>
    %556 = arith.addf %553, %555 : vector<4x64xf32>
    %cst_65 = arith.constant 0.000000e+00 : f32
    %557 = vector.broadcast %cst_65 : f32 to vector<4x64xf32>
    %558 = arith.maximumf %556, %557 : vector<4x64xf32>
    %c368 = arith.constant 368 : index
    %c0_66 = arith.constant 0 : index
    %559 = vector.load %arg1[%c368, %c0_66] : memref<456x256xf32, #tpu.memory_space<vmem>>, vector<64x32xf32>
    %cst_67 = arith.constant dense<0.000000e+00> : vector<4x32xf32>
    %560 = tpu.matmul %558, %559, %cst_67 {dimension_numbers = #tpu.dot_dimension_numbers<[1], [0], [0], [1], [0, 0, 1, 1], [], []>} : vector<4x64xf32>, vector<64x32xf32>, vector<4x32xf32> -> vector<4x32xf32>
    %c432 = arith.constant 432 : index
    %c0_68 = arith.constant 0 : index
    %561 = vector.load %arg1[%c432, %c0_68] : memref<456x256xf32, #tpu.memory_space<vmem>>, vector<1x32xf32>
    %562 = vector.broadcast %561 : vector<1x32xf32> to vector<4x32xf32>
    %563 = arith.addf %560, %562 : vector<4x32xf32>
    %cst_69 = arith.constant 0.000000e+00 : f32
    %564 = vector.broadcast %cst_69 : f32 to vector<4x32xf32>
    %565 = arith.maximumf %563, %564 : vector<4x32xf32>
    %c440 = arith.constant 440 : index
    %c0_70 = arith.constant 0 : index
    %566 = vector.load %arg1[%c440, %c0_70] : memref<456x256xf32, #tpu.memory_space<vmem>>, vector<1x32xf32>
    %567 = vector.broadcast %566 : vector<1x32xf32> to vector<4x32xf32>
    %568 = arith.mulf %565, %567 : vector<4x32xf32>
    %cst_71 = arith.constant dense<0.000000e+00> : vector<4xf32>
    %569 = vector.multi_reduction <add>, %568, %cst_71 [1] : vector<4x32xf32> to vector<4xf32>
    %570 = vector.shape_cast %569 : vector<4xf32> to vector<4x1xf32>
    %c448 = arith.constant 448 : index
    %c0_72 = arith.constant 0 : index
    %571 = vector.load %arg1[%c448, %c0_72] : memref<456x256xf32, #tpu.memory_space<vmem>>, vector<1x1xf32>
    %572 = vector.broadcast %571 : vector<1x1xf32> to vector<4x1xf32>
    %573 = arith.addf %570, %572 : vector<4x1xf32>
    %c0_73 = arith.constant 0 : index
    %c0_74 = arith.constant 0 : index
    %574 = vector.load %arg2[%c0_73, %c0_74] : memref<4x1xf32, #tpu.memory_space<vmem>>, vector<4x1xf32>
    tpu.vector_store %arg2[%c0_73, %c0_74], %573 {strides = array<i32>} : memref<4x1xf32, #tpu.memory_space<vmem>>, vector<4x1xf32>,
    return
  }
}

</mosaic_0001>

<llo_original>
// kernel: attn_bilstm_forward.1
$region0: #{attn_bilstm_forward.1}
  #allocation0 [shape = 'u32[]', space=smem, size = 0x4, offset = 0x4, fixed_abs, tag = 'smem constant byte address 0x4 - core index']
  #allocation1 [shape = 'u32[144,128]{1,0:T(1,128)}', space=vmem, size = 0x12000, scoped, tag = 'internal scratch']
  %s0 = inlined_call_operand.vmem [shape: f32[32,8], index: 0, kind: input, shape index: {}]
  %s1 = inlined_call_operand.vmem [shape: f32[456,256], index: 1, kind: input, shape index: {}]
  %s2 = inlined_call_operand.vmem [shape: f32[4,1], index: 2, kind: output, shape index: {}]
  %s3 = sld [smem:[#allocation0]]
  $region18: #{attn_bilstm_forward.1} parent=0
    _
  %s5 = ssub.s32 1, %s3
  %s6 = scalar_select 0, %s5, %s3
  // Predicated region
  $region2: #{attn_bilstm_forward.1} parent=0 // pred_check
    _
  $region3: #{attn_bilstm_forward.1} parent=0 // pred_check_branch
    %8 = sbr.rel (0) target = $region5
  $region4: #{attn_bilstm_forward.1} parent=0 // pred_region
    _
  $region5: #{attn_bilstm_forward.1} parent=0 // pred_fallthru
    _
  // Predicated region
  $region6: #{attn_bilstm_forward.1} parent=0 // pred_check
    _
  $region7: #{attn_bilstm_forward.1} parent=0 // pred_check_branch
    %10 = sbr.rel (0) target = $region9
  $region8: #{attn_bilstm_forward.1} parent=0 // pred_region
    _
  $region9: #{attn_bilstm_forward.1} parent=0 // pred_fallthru
    _
  %v11 = vld [vmem:[%s0] sm:$0xff]
  %v12 = vld [vmem:[%s0 + $0x8] sm:$0xff]
  %v13 = vld [vmem:[%s0 + $0x10] sm:$0xff]
  %v14 = vld [vmem:[%s0 + $0x18] sm:$0xff]
  %v15 = vld [vmem:[%s1] sm:$0xff]
  %v16 = vld [vmem:[%s1 + $0x8] sm:$0xff]
  %v17 = vld [vmem:[%s1 + $0x90] sm:$0xff]
  %v18 = vld [vmem:[%s1 + $0xa0] sm:$0xff]
  %v19 = vld [vmem:[%s1 + $0xb0] sm:$0xff]
  %v20 = vld [vmem:[%s1 + $0xc0] sm:$0xff]
  %v21 = vld [vmem:[%s1 + $0xd0] sm:$0xff]
  %v22 = vld [vmem:[%s1 + $0xe0] sm:$0xff]
  %v23 = vld [vmem:[%s1 + $0xf0] sm:$0xff]
  %v24 = vld [vmem:[%s1 + $0x100] sm:$0xff]
  %s25 = scalar_lea.vmem %s1, 400
  %v26 = vld [vmem:[%s25] ss:$8 sm:$0x3]
  %v28 = vlaneseq
  %v29 = vshrl.u32 %v28, 7
  %v30 = vsub.s32 0, %v29
  %v31 = vrot.slane %v26, %v30
  %v32 = vlaneseq
  %v33 = vshrl.u32 %v32, 7
  %v34 = vsub.s32 1, %v33
  %v35 = vrot.slane %v26, %v34
  %vm38 = vcmask 64512
  %v40 = vsel %vm38, %v11, 0
  %v43 = vsel %vm38, %v12, 0
  %v46 = vsel %vm38, %v13, 0
  %v49 = vsel %vm38, %v14, 0
  %51 = vmatprep.subr.mxu0 %v16
  %52 = vmatpush1.msra.mxu0 %v15
  %53 = vmatprep.subr.mxu0 0.0
  %54 = vmatpush1.msra.mxu0 0.0
  %55 = vmatprep.subr.mxu0 0.0
  %56 = vmatpush1.msra.mxu0 0.0
  %57 = vmatprep.subr.mxu0 0.0
  %58 = vmatpush1.msra.mxu0 0.0
  %59 = vmatprep.subr.mxu0 0.0
  %60 = vmatpush1.msra.mxu0 0.0
  %61 = vmatprep.subr.mxu0 0.0
  %62 = vmatpush1.msra.mxu0 0.0
  %63 = vmatprep.subr.mxu0 0.0
  %64 = vmatpush1.msra.mxu0 0.0
  %65 = vmatprep.subr.mxu0 0.0
  %66 = vmatpush1.msra.mxu0 0.0
  %67 = vmatprep.subr.mxu0 0.0
  %68 = vmatpush1.msra.mxu0 0.0
  %69 = vmatprep.subr.mxu0 0.0
  %70 = vmatpush1.msra.mxu0 0.0
  %71 = vmatprep.subr.mxu0 0.0
  %72 = vmatpush1.msra.mxu0 0.0
  %73 = vmatprep.subr.mxu0 0.0
  %74 = vmatpush1.msra.mxu0 0.0
  %75 = vmatprep.subr.mxu0 0.0
  %76 = vmatpush1.msra.mxu0 0.0
  %77 = vmatprep.subr.mxu0 0.0
  %78 = vmatpush1.msra.mxu0 0.0
  %79 = vmatprep.subr.mxu0 0.0
  %80 = vmatpush1.msra.mxu0 0.0
  %81 = vmatprep.subr.mxu0 0.0
  %82 = vmatpush1.msra.mxu0 0.0
  %83 = vmatprep.subr.mxu0 0.0
  %84 = vmatpush1.msra.mxu0 0.0
  %85 = vmatprep.subr.mxu0 0.0
  %86 = vmatpush1.msra.mxu0 0.0
  %87 = vmatprep.subr.mxu0 0.0
  %88 = vmatpush1.msra.mxu0 0.0
  %89 = vmatprep.subr.mxu0 0.0
  %90 = vmatpush1.msra.mxu0 0.0
  %91 = vmatprep.subr.mxu0 0.0
  %92 = vmatpush1.msra.mxu0 0.0
  %93 = vmatprep.subr.mxu0 0.0
  %94 = vmatpush1.msra.mxu0 0.0
  %95 = vmatprep.subr.mxu0 0.0
  %96 = vmatpush1.msra.mxu0 0.0
  %97 = vmatprep.subr.mxu0 0.0
  %98 = vmatpush1.msra.mxu0 0.0
  %99 = vmatprep.subr.mxu0 0.0
  %100 = vmatpush1.msra.mxu0 0.0
  %101 = vmatprep.subr.mxu0 0.0
  %102 = vmatpush1.msra.mxu0 0.0
  %103 = vmatprep.subr.mxu0 0.0
  %104 = vmatpush1.msra.mxu0 0.0
  %105 = vmatprep.subr.mxu0 0.0
  %106 = vmatpush1.msra.mxu0 0.0
  %107 = vmatprep.subr.mxu0 0.0
  %108 = vmatpush1.msra.mxu0 0.0
  %109 = vmatprep.subr.mxu0 0.0
  %110 = vmatpush1.msra.mxu0 0.0
  %111 = vmatprep.subr.mxu0 0.0
  %112 = vmatpush1.msra.mxu0 0.0
  %113 = vmatprep.subr.mxu0 0.0
  %114 = vmatpush1.msra.mxu0 0.0
  %115 = vmatprep.mubr.f32.mxu0 0.0
  %116 = vmatmul.mubr.f32.gmra.mrb[0].mxu0 %v40
  %v117 = vpop.f32.mrb[0].mxu0
  %v118 = vadd.f32 %v31, %v117
  %v119 = vpop.f32.mrb[0].mxu0
  %v120 = vadd.f32 %v35, %v119
  %121 = vmatprep.mubr.f32.mxu0 0.0
  %122 = vmatmul.mubr.f32.gmra.mrb[0].mxu0 %v43
  %v123 = vpop.f32.mrb[0].mxu0
  %v124 = vadd.f32 %v31, %v123
  %v125 = vpop.f32.mrb[0].mxu0
  %v126 = vadd.f32 %v35, %v125
  %127 = vmatprep.mubr.f32.mxu0 0.0
  %128 = vmatmul.mubr.f32.gmra.mrb[0].mxu0 %v46
  %v129 = vpop.f32.mrb[0].mxu0
  %v130 = vadd.f32 %v31, %v129
  %v131 = vpop.f32.mrb[0].mxu0
  %v132 = vadd.f32 %v35, %v131
  %133 = vmatprep.mubr.f32.mxu0 0.0
  %134 = vmatmul.mubr.f32.gmra.mrb[0].mxu0 %v49
  %v135 = vpop.f32.mrb[0].mxu0
  %v136 = vadd.f32 %v31, %v135
  %v137 = vpop.f32.mrb[0].mxu0
  %v138 = vadd.f32 %v35, %v137
  %139 = vdwg.mxu0
  %v140 = vlaneseq
  %v141 = vshrl.u32 %v140, 7
  %vm142 = vcmp.lt.s32.totalorder %v141, 4
  %v143 = vsel %vm142, 1, 0
  %v144 = vcvt.s32.f32 %v143
  %v145 = vsub.f32 1.0, %v144
  %vm146 = vcmask 1043456
  %v147 = vsel %vm146, %v118, %v138
  %vm148 = vcmask 523264
  %v150 = vsel %vm148, 0.0, 0
  %152 = vmatprep.subr.mxu0 0.0
  %153 = vmatpush1.msra.mxu0 %v17
  %154 = vmatprep.subr.mxu0 0.0
  %155 = vmatpush1.msra.mxu0 %v18
  %156 = vmatprep.subr.mxu0 0.0
  %157 = vmatpush1.msra.mxu0 %v19
  %158 = vmatprep.subr.mxu0 0.0
  %159 = vmatpush1.msra.mxu0 %v20
  %160 = vmatprep.subr.mxu0 0.0
  %161 = vmatpush1.msra.mxu0 %v21
  %162 = vmatprep.subr.mxu0 0.0
  %163 = vmatpush1.msra.mxu0 %v22
  %164 = vmatprep.subr.mxu0 0.0
  %165 = vmatpush1.msra.mxu0 %v23
  %166 = vmatprep.subr.mxu0 0.0
  %167 = vmatpush1.msra.mxu0 %v24
  %168 = vmatprep.subr.mxu0 0.0
  %169 = vmatpush1.msra.mxu0 0.0
  %170 = vmatprep.subr.mxu0 0.0
  %171 = vmatpush1.msra.mxu0 0.0
  %172 = vmatprep.subr.mxu0 0.0
  %173 = vmatpush1.msra.mxu0 0.0
  %174 = vmatprep.subr.mxu0 0.0
  %175 = vmatpush1.msra.mxu0 0.0
  %176 = vmatprep.subr.mxu0 0.0
  %177 = vmatpush1.msra.mxu0 0.0
  %178 = vmatprep.subr.mxu0 0.0
  %179 = vmatpush1.msra.mxu0 0.0
  %180 = vmatprep.subr.mxu0 0.0
  %181 = vmatpush1.msra.mxu0 0.0
  %182 = vmatprep.subr.mxu0 0.0
  %183 = vmatpush1.msra.mxu0 0.0
  %184 = vmatprep.subr.mxu0 0.0
  %185 = vmatpush1.msra.mxu0 0.0
  %186 = vmatprep.subr.mxu0 0.0
  %187 = vmatpush1.msra.mxu0 0.0
  %188 = vmatprep.subr.mxu0 0.0
  %189 = vmatpush1.msra.mxu0 0.0
  %190 = vmatprep.subr.mxu0 0.0
  %191 = vmatpush1.msra.mxu0 0.0
  %192 = vmatprep.subr.mxu0 0.0
  %193 = vmatpush1.msra.mxu0 0.0
  %194 = vmatprep.subr.mxu0 0.0
  %195 = vmatpush1.msra.mxu0 0.0
  %196 = vmatprep.subr.mxu0 0.0
  %197 = vmatpush1.msra.mxu0 0.0
  %198 = vmatprep.subr.mxu0 0.0
  %199 = vmatpush1.msra.mxu0 0.0
  %200 = vmatprep.subr.mxu0 0.0
  %201 = vmatpush1.msra.mxu0 0.0
  %202 = vmatprep.subr.mxu0 0.0
  %203 = vmatpush1.msra.mxu0 0.0
  %204 = vmatprep.subr.mxu0 0.0
  %205 = vmatpush1.msra.mxu0 0.0
  %206 = vmatprep.subr.mxu0 0.0
  %207 = vmatpush1.msra.mxu0 0.0
  %208 = vmatprep.subr.mxu0 0.0
  %209 = vmatpush1.msra.mxu0 0.0
  %210 = vmatprep.subr.mxu0 0.0
  %211 = vmatpush1.msra.mxu0 0.0
  %212 = vmatprep.subr.mxu0 0.0
  %213 = vmatpush1.msra.mxu0 0.0
  %214 = vmatprep.subr.mxu0 0.0
  %215 = vmatpush1.msra.mxu0 0.0
  %216 = vmatprep.mubr.f32.mxu0 0.0
  %217 = vmatmul.mubr.f32.gmra.mrb[0].mxu0 %v150
  %v218 = vpop.f32.mrb[0].mxu0
  %v219 = vadd.f32 0.0, %v218
  %v220 = vpop.f32.mrb[0].mxu0
  %221 = vdwg.mxu0
  %v222 = vadd.f32 %v147, %v219
  %v223 = vxor.u32 %v222, 2147483648
  %v224 = vmul.f32 %v223, 1.442695
  %v225 = vpow.pop %v224
  %v226 = vadd.f32 %v225, 1.0
  %v227 = vrcp.pop %v226
  %v228 = vmul.f32 1.0, %v227
  %v229 = vtanh.pop %v222
  %v230 = vmul.f32 %v228, 0.0
  %232 = vrot.lane.b32.xlu0 %v229, 32
  %v233 = vpop.permute.xlu0 %232
  %v235 = vmul.f32 %v228, %v233
  %237 = vrot.lane.b32.xlu0 %v235, 32
  %v238 = vpop.permute.xlu0 %237
  %v240 = vadd.f32 %v230, %v238
  %v241 = vtanh.pop %v240
  %243 = vrot.lane.b32.xlu0 %v241, 32
  %v244 = vpop.permute.xlu0 %243
  %v246 = vmul.f32 %v228, %v244
  %v247 = vmul.f32 %v246, %v144
  %v248 = vmul.f32 %v246, %v145
  %250 = vrot.lane.b32.xlu0 %v247, 64
  %v251 = vpop.permute.xlu0 %250
  %254 = vrot.lane.b32.xlu0 %v248, 96
  %v255 = vpop.permute.xlu0 %254
  %vm257 = vcmask 261120
  %v258 = vsel %vm257, %v251, %v255
  %v260 = vrot.slane %v118, 4
  %v263 = vrot.slane %v138, 4
  %v265 = vsel %vm146, %v260, %v263
  %v267 = vsel %vm148, %v258, 0
  %269 = vmatprep.subr.mxu0 0.0
  %270 = vmatpush1.msra.mxu0 %v17
  %271 = vmatprep.subr.mxu0 0.0
  %272 = vmatpush1.msra.mxu0 %v18
  %273 = vmatprep.subr.mxu0 0.0
  %274 = vmatpush1.msra.mxu0 %v19
  %275 = vmatprep.subr.mxu0 0.0
  %276 = vmatpush1.msra.mxu0 %v20
  %277 = vmatprep.subr.mxu0 0.0
  %278 = vmatpush1.msra.mxu0 %v21
  %279 = vmatprep.subr.mxu0 0.0
  %280 = vmatpush1.msra.mxu0 %v22
  %281 = vmatprep.subr.mxu0 0.0
  %282 = vmatpush1.msra.mxu0 %v23
  %283 = vmatprep.subr.mxu0 0.0
  %284 = vmatpush1.msra.mxu0 %v24
  %285 = vmatprep.subr.mxu0 0.0
  %286 = vmatpush1.msra.mxu0 0.0
  %287 = vmatprep.subr.mxu0 0.0
  %288 = vmatpush1.msra.mxu0 0.0
  %289 = vmatprep.subr.mxu0 0.0
  %290 = vmatpush1.msra.mxu0 0.0
  %291 = vmatprep.subr.mxu0 0.0
  %292 = vmatpush1.msra.mxu0 0.0
  %293 = vmatprep.subr.mxu0 0.0
  %294 = vmatpush1.msra.mxu0 0.0
  %295 = vmatprep.subr.mxu0 0.0
  %296 = vmatpush1.msra.mxu0 0.0
  %297 = vmatprep.subr.mxu0 0.0
  %298 = vmatpush1.msra.mxu0 0.0
  %299 = vmatprep.subr.mxu0 0.0
  %300 = vmatpush1.msra.mxu0 0.0
  %301 = vmatprep.subr.mxu0 0.0
  %302 = vmatpush1.msra.mxu0 0.0
  %303 = vmatprep.subr.mxu0 0.0
  %304 = vmatpush1.msra.mxu0 0.0
  %305 = vmatprep.subr.mxu0 0.0
  %306 = vmatpush1.msra.mxu0 0.0
  %307 = vmatprep.subr.mxu0 0.0
  %308 = vmatpush1.msra.mxu0 0.0
  %309 = vmatprep.subr.mxu0 0.0
  %310 = vmatpush1.msra.mxu0 0.0
  %311 = vmatprep.subr.mxu0 0.0
  %312 = vmatpush1.msra.mxu0 0.0
  %313 = vmatprep.subr.mxu0 0.0
  %314 = vmatpush1.msra.mxu0 0.0
  %315 = vmatprep.subr.mxu0 0.0
  %316 = vmatpush1.msra.mxu0 0.0
  %317 = vmatprep.subr.mxu0 0.0
  %318 = vmatpush1.msra.mxu0 0.0
  %319 = vmatprep.subr.mxu0 0.0
  %320 = vmatpush1.msra.mxu0 0.0
  %321 = vmatprep.subr.mxu0 0.0
  %322 = vmatpush1.msra.mxu0 0.0
  %323 = vmatprep.subr.mxu0 0.0
  %324 = vmatpush1.msra.mxu0 0.0
  %325 = vmatprep.subr.mxu0 0.0
  %326 = vmatpush1.msra.mxu0 0.0
  %327 = vmatprep.subr.mxu0 0.0
  %328 = vmatpush1.msra.mxu0 0.0
  %329 = vmatprep.subr.mxu0 0.0
  %330 = vmatpush1.msra.mxu0 0.0
  %331 = vmatprep.subr.mxu0 0.0
  %332 = vmatpush1.msra.mxu0 0.0
  %333 = vmatprep.mubr.f32.mxu0 0.0
  %334 = vmatmul.mubr.f32.gmra.mrb[0].mxu0 %v267
  %v335 = vpop.f32.mrb[0].mxu0
  %v336 = vadd.f32 0.0, %v335
  %v337 = vpop.f32.mrb[0].mxu0
  %338 = vdwg.mxu0
  %v339 = vadd.f32 %v265, %v336
  %v340 = vxor.u32 %v339, 2147483648
  %v341 = vmul.f32 %v340, 1.442695
  %v342 = vpow.pop %v341
  %v343 = vadd.f32 %v342, 1.0
  %v344 = vrcp.pop %v343
  %v345 = vmul.f32 1.0, %v344
  %v346 = vtanh.pop %v339
  %v347 = vmul.f32 %v345, %v240
  %349 = vrot.lane.b32.xlu0 %v346, 32
  %v350 = vpop.permute.xlu0 %349
  %v352 = vmul.f32 %v345, %v350
  %354 = vrot.lane.b32.xlu0 %v352, 32
  %v355 = vpop.permute.xlu0 %354
  %v357 = vadd.f32 %v347, %v355
  %v358 = vtanh.pop %v357
  %360 = vrot.lane.b32.xlu0 %v358, 32
  %v361 = vpop.permute.xlu0 %360
  %v363 = vmul.f32 %v345, %v361
  %v364 = vmul.f32 %v363, %v144
  %v365 = vmul.f32 %v363, %v145
  %367 = vrot.lane.b32.xlu0 %v364, 64
  %v368 = vpop.permute.xlu0 %367
  %371 = vrot.lane.b32.xlu0 %v365, 96
  %v372 = vpop.permute.xlu0 %371
  %v374 = vsel %vm257, %v368, %v372
  %v375 = vsel %vm146, %v124, %v132
  %v377 = vsel %vm148, %v374, 0
  %379 = vmatprep.subr.mxu0 0.0
  %380 = vmatpush1.msra.mxu0 %v17
  %381 = vmatprep.subr.mxu0 0.0
  %382 = vmatpush1.msra.mxu0 %v18
  %383 = vmatprep.subr.mxu0 0.0
  %384 = vmatpush1.msra.mxu0 %v19
  %385 = vmatprep.subr.mxu0 0.0
  %386 = vmatpush1.msra.mxu0 %v20
  %387 = vmatprep.subr.mxu0 0.0
  %388 = vmatpush1.msra.mxu0 %v21
  %389 = vmatprep.subr.mxu0 0.0
  %390 = vmatpush1.msra.mxu0 %v22
  %391 = vmatprep.subr.mxu0 0.0
  %392 = vmatpush1.msra.mxu0 %v23
  %393 = vmatprep.subr.mxu0 0.0
  %394 = vmatpush1.msra.mxu0 %v24
  %395 = vmatprep.subr.mxu0 0.0
  %396 = vmatpush1.msra.mxu0 0.0
  %397 = vmatprep.subr.mxu0 0.0
  %398 = vmatpush1.msra.mxu0 0.0
  %399 = vmatprep.subr.mxu0 0.0
  %400 = vmatpush1.msra.mxu0 0.0
  %401 = vmatprep.subr.mxu0 0.0
  %402 = vmatpush1.msra.mxu0 0.0
  %403 = vmatprep.subr.mxu0 0.0
  %404 = vmatpush1.msra.mxu0 0.0
  %405 = vmatprep.subr.mxu0 0.0
  %406 = vmatpush1.msra.mxu0 0.0
  %407 = vmatprep.subr.mxu0 0.0
  %408 = vmatpush1.msra.mxu0 0.0
  %409 = vmatprep.subr.mxu0 0.0
  %410 = vmatpush1.msra.mxu0 0.0
  %411 = vmatprep.subr.mxu0 0.0
  %412 = vmatpush1.msra.mxu0 0.0
  %413 = vmatprep.subr.mxu0 0.0
  %414 = vmatpush1.msra.mxu0 0.0
  %415 = vmatprep.subr.mxu0 0.0
  %416 = vmatpush1.msra.mxu0 0.0
  %417 = vmatprep.subr.mxu0 0.0
  %418 = vmatpush1.msra.mxu0 0.0
  %419 = vmatprep.subr.mxu0 0.0
  %420 = vmatpush1.msra.mxu0 0.0
  %421 = vmatprep.subr.mxu0 0.0
  %422 = vmatpush1.msra.mxu0 0.0
  %423 = vmatprep.subr.mxu0 0.0
  %424 = vmatpush1.msra.mxu0 0.0
  %425 = vmatprep.subr.mxu0 0.0
  %426 = vmatpush1.msra.mxu0 0.0
  %427 = vmatprep.subr.mxu0 0.0
  %428 = vmatpush1.msra.mxu0 0.0
  %429 = vmatprep.subr.mxu0 0.0
  %430 = vmatpush1.msra.mxu0 0.0
  %431 = vmatprep.subr.mxu0 0.0
  %432 = vmatpush1.msra.mxu0 0.0
  %433 = vmatprep.subr.mxu0 0.0
  %434 = vmatpush1.msra.mxu0 0.0
  %435 = vmatprep.subr.mxu0 0.0
  %436 = vmatpush1.msra.mxu0 0.0
  %437 = vmatprep.subr.mxu0 0.0
  %438 = vmatpush1.msra.mxu0 0.0
  %439 = vmatprep.subr.mxu0 0.0
  %440 = vmatpush1.msra.mxu0 0.0
  %441 = vmatprep.subr.mxu0 0.0
  %442 = vmatpush1.msra.mxu0 0.0
  %443 = vmatprep.mubr.f32.mxu0 0.0
  %444 = vmatmul.mubr.f32.gmra.mrb[0].mxu0 %v377
  %v445 = vpop.f32.mrb[0].mxu0
  %v446 = vadd.f32 0.0, %v445
  %v447 = vpop.f32.mrb[0].mxu0
  %448 = vdwg.mxu0
  %v449 = vadd.f32 %v375, %v446
  %v450 = vxor.u32 %v449, 2147483648
  %v451 = vmul.f32 %v450, 1.442695
  %v452 = vpow.pop %v451
  %v453 = vadd.f32 %v452, 1.0
  %v454 = vrcp.pop %v453
  %v455 = vmul.f32 1.0, %v454
  %v456 = vtanh.pop %v449
  %v457 = vmul.f32 %v455, %v357
  %459 = vrot.lane.b32.xlu0 %v456, 32
  %v460 = vpop.permute.xlu0 %459
  %v462 = vmul.f32 %v455, %v460
  %464 = vrot.lane.b32.xlu0 %v462, 32
  %v465 = vpop.permute.xlu0 %464
  %v467 = vadd.f32 %v457, %v465
  %v468 = vtanh.pop %v467
  %470 = vrot.lane.b32.xlu0 %v468, 32
  %v471 = vpop.permute.xlu0 %470
  %v473 = vmul.f32 %v455, %v471
  %v474 = vmul.f32 %v473, %v144
  %v475 = vmul.f32 %v473, %v145
  %477 = vrot.lane.b32.xlu0 %v474, 64
  %v478 = vpop.permute.xlu0 %477
  %481 = vrot.lane.b32.xlu0 %v475, 96
  %v482 = vpop.permute.xlu0 %481
  %v484 = vsel %vm257, %v478, %v482
  %v486 = vrot.slane %v124, 4
  %v489 = vrot.slane %v132, 4
  %v491 = vsel %vm146, %v486, %v489
  %v493 = vsel %vm148, %v484, 0
  %495 = vmatprep.subr.mxu0 0.0
  %496 = vmatpush1.msra.mxu0 %v17
  %497 = vmatprep.subr.mxu0 0.0
  %498 = vmatpush1.msra.mxu0 %v18
  %499 = vmatprep.subr.mxu0 0.0
  %500 = vmatpush1.msra.mxu0 %v19
  %501 = vmatprep.subr.mxu0 0.0
  %502 = vmatpush1.msra.mxu0 %v20
  %503 = vmatprep.subr.mxu0 0.0
  %504 = vmatpush1.msra.mxu0 %v21
  %505 = vmatprep.subr.mxu0 0.0
  %506 = vmatpush1.msra.mxu0 %v22
  %507 = vmatprep.subr.mxu0 0.0
  %508 = vmatpush1.msra.mxu0 %v23
  %509 = vmatprep.subr.mxu0 0.0
  %510 = vmatpush1.msra.mxu0 %v24
  %511 = vmatprep.subr.mxu0 0.0
  %512 = vmatpush1.msra.mxu0 0.0
  %513 = vmatprep.subr.mxu0 0.0
  %514 = vmatpush1.msra.mxu0 0.0
  %515 = vmatprep.subr.mxu0 0.0
  %516 = vmatpush1.msra.mxu0 0.0
  %517 = vmatprep.subr.mxu0 0.0
  %518 = vmatpush1.msra.mxu0 0.0
  %519 = vmatprep.subr.mxu0 0.0
  %520 = vmatpush1.msra.mxu0 0.0
  %521 = vmatprep.subr.mxu0 0.0
  %522 = vmatpush1.msra.mxu0 0.0
  %523 = vmatprep.subr.mxu0 0.0
  %524 = vmatpush1.msra.mxu0 0.0
  %525 = vmatprep.subr.mxu0 0.0
  %526 = vmatpush1.msra.mxu0 0.0
  %527 = vmatprep.subr.mxu0 0.0
  %528 = vmatpush1.msra.mxu0 0.0
  %529 = vmatprep.subr.mxu0 0.0
  %530 = vmatpush1.msra.mxu0 0.0
  %531 = vmatprep.subr.mxu0 0.0
  %532 = vmatpush1.msra.mxu0 0.0
  %533 = vmatprep.subr.mxu0 0.0
  %534 = vmatpush1.msra.mxu0 0.0
  %535 = vmatprep.subr.mxu0 0.0
  %536 = vmatpush1.msra.mxu0 0.0
  %537 = vmatprep.subr.mxu0 0.0
  %538 = vmatpush1.msra.mxu0 0.0
  %539 = vmatprep.subr.mxu0 0.0
  %540 = vmatpush1.msra.mxu0 0.0
  %541 = vmatprep.subr.mxu0 0.0
  %542 = vmatpush1.msra.mxu0 0.0
  %543 = vmatprep.subr.mxu0 0.0
  %544 = vmatpush1.msra.mxu0 0.0
  %545 = vmatprep.subr.mxu0 0.0
  %546 = vmatpush1.msra.mxu0 0.0
  %547 = vmatprep.subr.mxu0 0.0
  %548 = vmatpush1.msra.mxu0 0.0
  %549 = vmatprep.subr.mxu0 0.0
  %550 = vmatpush1.msra.mxu0 0.0
  %551 = vmatprep.subr.mxu0 0.0
  %552 = vmatpush1.msra.mxu0 0.0
  %553 = vmatprep.subr.mxu0 0.0
  %554 = vmatpush1.msra.mxu0 0.0
  %555 = vmatprep.subr.mxu0 0.0
  %556 = vmatpush1.msra.mxu0 0.0
  %557 = vmatprep.subr.mxu0 0.0
  %558 = vmatpush1.msra.mxu0 0.0
  %559 = vmatprep.mubr.f32.mxu0 0.0
  %560 = vmatmul.mubr.f32.gmra.mrb[0].mxu0 %v493
  %v561 = vpop.f32.mrb[0].mxu0
  %v562 = vadd.f32 0.0, %v561
  %v563 = vpop.f32.mrb[0].mxu0
  %564 = vdwg.mxu0
  %v565 = vadd.f32 %v491, %v562
  %v566 = vxor.u32 %v565, 2147483648
  %v567 = vmul.f32 %v566, 1.442695
  %v568 = vpow.pop %v567
  %v569 = vadd.f32 %v568, 1.0
  %v570 = vrcp.pop %v569
  %v571 = vmul.f32 1.0, %v570
  %v572 = vtanh.pop %v565
  %v573 = vmul.f32 %v571, %v467
  %575 = vrot.lane.b32.xlu0 %v572, 32
  %v576 = vpop.permute.xlu0 %575
  %v578 = vmul.f32 %v571, %v576
  %580 = vrot.lane.b32.xlu0 %v578, 32
  %v581 = vpop.permute.xlu0 %580
  %v583 = vadd.f32 %v573, %v581
  %v584 = vtanh.pop %v583
  %586 = vrot.lane.b32.xlu0 %v584, 32
  %v587 = vpop.permute.xlu0 %586
  %v589 = vmul.f32 %v571, %v587
  %v590 = vmul.f32 %v589, %v144
  %v591 = vmul.f32 %v589, %v145
  %593 = vrot.lane.b32.xlu0 %v590, 64
  %v594 = vpop.permute.xlu0 %593
  %597 = vrot.lane.b32.xlu0 %v591, 96
  %v598 = vpop.permute.xlu0 %597
  %v600 = vsel %vm257, %v594, %v598
  %v601 = vsel %vm146, %v130, %v126
  %v603 = vsel %vm148, %v600, 0
  %605 = vmatprep.subr.mxu0 0.0
  %606 = vmatpush1.msra.mxu0 %v17
  %607 = vmatprep.subr.mxu0 0.0
  %608 = vmatpush1.msra.mxu0 %v18
  %609 = vmatprep.subr.mxu0 0.0
  %610 = vmatpush1.msra.mxu0 %v19
  %611 = vmatprep.subr.mxu0 0.0
  %612 = vmatpush1.msra.mxu0 %v20
  %613 = vmatprep.subr.mxu0 0.0
  %614 = vmatpush1.msra.mxu0 %v21
  %615 = vmatprep.subr.mxu0 0.0
  %616 = vmatpush1.msra.mxu0 %v22
  %617 = vmatprep.subr.mxu0 0.0
  %618 = vmatpush1.msra.mxu0 %v23
  %619 = vmatprep.subr.mxu0 0.0
  %620 = vmatpush1.msra.mxu0 %v24
  %621 = vmatprep.subr.mxu0 0.0
  %622 = vmatpush1.msra.mxu0 0.0
  %623 = vmatprep.subr.mxu0 0.0
  %624 = vmatpush1.msra.mxu0 0.0
  %625 = vmatprep.subr.mxu0 0.0
  %626 = vmatpush1.msra.mxu0 0.0
  %627 = vmatprep.subr.mxu0 0.0
  %628 = vmatpush1.msra.mxu0 0.0
  %629 = vmatprep.subr.mxu0 0.0
  %630 = vmatpush1.msra.mxu0 0.0
  %631 = vmatprep.subr.mxu0 0.0
  %632 = vmatpush1.msra.mxu0 0.0
  %633 = vmatprep.subr.mxu0 0.0
  %634 = vmatpush1.msra.mxu0 0.0
  %635 = vmatprep.subr.mxu0 0.0
  %636 = vmatpush1.msra.mxu0 0.0
  %637 = vmatprep.subr.mxu0 0.0
  %638 = vmatpush1.msra.mxu0 0.0
  %639 = vmatprep.subr.mxu0 0.0
  %640 = vmatpush1.msra.mxu0 0.0
  %641 = vmatprep.subr.mxu0 0.0
  %642 = vmatpush1.msra.mxu0 0.0
  %643 = vmatprep.subr.mxu0 0.0
  %644 = vmatpush1.msra.mxu0 0.0
  %645 = vmatprep.subr.mxu0 0.0
  %646 = vmatpush1.msra.mxu0 0.0
  %647 = vmatprep.subr.mxu0 0.0
  %648 = vmatpush1.msra.mxu0 0.0
  %649 = vmatprep.subr.mxu0 0.0
  %650 = vmatpush1.msra.mxu0 0.0
  %651 = vmatprep.subr.mxu0 0.0
  %652 = vmatpush1.msra.mxu0 0.0
  %653 = vmatprep.subr.mxu0 0.0
  %654 = vmatpush1.msra.mxu0 0.0
  %655 = vmatprep.subr.mxu0 0.0
  %656 = vmatpush1.msra.mxu0 0.0
  %657 = vmatprep.subr.mxu0 0.0
  %658 = vmatpush1.msra.mxu0 0.0
  %659 = vmatprep.subr.mxu0 0.0
  %660 = vmatpush1.msra.mxu0 0.0
  %661 = vmatprep.subr.mxu0 0.0
  %662 = vmatpush1.msra.mxu0 0.0
  %663 = vmatprep.subr.mxu0 0.0
  %664 = vmatpush1.msra.mxu0 0.0
  %665 = vmatprep.subr.mxu0 0.0
  %666 = vmatpush1.msra.mxu0 0.0
  %667 = vmatprep.subr.mxu0 0.0
  %668 = vmatpush1.msra.mxu0 0.0
  %669 = vmatprep.mubr.f32.mxu0 0.0
  %670 = vmatmul.mubr.f32.gmra.mrb[0].mxu0 %v603
  %v671 = vpop.f32.mrb[0].mxu0
  %v672 = vadd.f32 0.0, %v671
  %v673 = vpop.f32.mrb[0].mxu0
  %674 = vdwg.mxu0
  %v675 = vadd.f32 %v601, %v672
  %v676 = vxor.u32 %v675, 2147483648
  %v677 = vmul.f32 %v676, 1.442695
  %v678 = vpow.pop %v677
  %v679 = vadd.f32 %v678, 1.0
  %v680 = vrcp.pop %v679
  %v681 = vmul.f32 1.0, %v680
  %v682 = vtanh.pop %v675
  %v683 = vmul.f32 %v681, %v583
  %685 = vrot.lane.b32.xlu0 %v682, 32
  %v686 = vpop.permute.xlu0 %685
  %v688 = vmul.f32 %v681, %v686
  %690 = vrot.lane.b32.xlu0 %v688, 32
  %v691 = vpop.permute.xlu0 %690
  %v693 = vadd.f32 %v683, %v691
  %v694 = vtanh.pop %v693
  %696 = vrot.lane.b32.xlu0 %v694, 32
  %v697 = vpop.permute.xlu0 %696
  %v699 = vmul.f32 %v681, %v697
  %v700 = vmul.f32 %v699, %v144
  %v701 = vmul.f32 %v699, %v145
  %703 = vrot.lane.b32.xlu0 %v700, 64
  %v704 = vpop.permute.xlu0 %703
  %707 = vrot.lane.b32.xlu0 %v701, 96
  %v708 = vpop.permute.xlu0 %707
  %v710 = vsel %vm257, %v704, %v708
  %v712 = vrot.slane %v130, 4
  %v715 = vrot.slane %v126, 4
  %v717 = vsel %vm146, %v712, %v715
  %v719 = vsel %vm148, %v710, 0
  %721 = vmatprep.subr.mxu0 0.0
  %722 = vmatpush1.msra.mxu0 %v17
  %723 = vmatprep.subr.mxu0 0.0
  %724 = vmatpush1.msra.mxu0 %v18
  %725 = vmatprep.subr.mxu0 0.0
  %726 = vmatpush1.msra.mxu0 %v19
  %727 = vmatprep.subr.mxu0 0.0
  %728 = vmatpush1.msra.mxu0 %v20
  %729 = vmatprep.subr.mxu0 0.0
  %730 = vmatpush1.msra.mxu0 %v21
  %731 = vmatprep.subr.mxu0 0.0
  %732 = vmatpush1.msra.mxu0 %v22
  %733 = vmatprep.subr.mxu0 0.0
  %734 = vmatpush1.msra.mxu0 %v23
  %735 = vmatprep.subr.mxu0 0.0
  %736 = vmatpush1.msra.mxu0 %v24
  %737 = vmatprep.subr.mxu0 0.0
  %738 = vmatpush1.msra.mxu0 0.0
  %739 = vmatprep.subr.mxu0 0.0
  %740 = vmatpush1.msra.mxu0 0.0
  %741 = vmatprep.subr.mxu0 0.0
  %742 = vmatpush1.msra.mxu0 0.0
  %743 = vmatprep.subr.mxu0 0.0
  %744 = vmatpush1.msra.mxu0 0.0
  %745 = vmatprep.subr.mxu0 0.0
  %746 = vmatpush1.msra.mxu0 0.0
  %747 = vmatprep.subr.mxu0 0.0
  %748 = vmatpush1.msra.mxu0 0.0
  %749 = vmatprep.subr.mxu0 0.0
  %750 = vmatpush1.msra.mxu0 0.0
  %751 = vmatprep.subr.mxu0 0.0
  %752 = vmatpush1.msra.mxu0 0.0
  %753 = vmatprep.subr.mxu0 0.0
  %754 = vmatpush1.msra.mxu0 0.0
  %755 = vmatprep.subr.mxu0 0.0
  %756 = vmatpush1.msra.mxu0 0.0
  %757 = vmatprep.subr.mxu0 0.0
  %758 = vmatpush1.msra.mxu0 0.0
  %759 = vmatprep.subr.mxu0 0.0
  %760 = vmatpush1.msra.mxu0 0.0
  %761 = vmatprep.subr.mxu0 0.0
  %762 = vmatpush1.msra.mxu0 0.0
  %763 = vmatprep.subr.mxu0 0.0
  %764 = vmatpush1.msra.mxu0 0.0
  %765 = vmatprep.subr.mxu0 0.0
  %766 = vmatpush1.msra.mxu0 0.0
  %767 = vmatprep.subr.mxu0 0.0
  %768 = vmatpush1.msra.mxu0 0.0
  %769 = vmatprep.subr.mxu0 0.0
  %770 = vmatpush1.msra.mxu0 0.0
  %771 = vmatprep.subr.mxu0 0.0
  %772 = vmatpush1.msra.mxu0 0.0
  %773 = vmatprep.subr.mxu0 0.0
  %774 = vmatpush1.msra.mxu0 0.0
  %775 = vmatprep.subr.mxu0 0.0
  %776 = vmatpush1.msra.mxu0 0.0
  %777 = vmatprep.subr.mxu0 0.0
  %778 = vmatpush1.msra.mxu0 0.0
  %779 = vmatprep.subr.mxu0 0.0
  %780 = vmatpush1.msra.mxu0 0.0
  %781 = vmatprep.subr.mxu0 0.0
  %782 = vmatpush1.msra.mxu0 0.0
  %783 = vmatprep.subr.mxu0 0.0
  %784 = vmatpush1.msra.mxu0 0.0
  %785 = vmatprep.mubr.f32.mxu0 0.0
  %786 = vmatmul.mubr.f32.gmra.mrb[0].mxu0 %v719
  %v787 = vpop.f32.mrb[0].mxu0
  %v788 = vadd.f32 0.0, %v787
  %v789 = vpop.f32.mrb[0].mxu0
  %790 = vdwg.mxu0
  %v791 = vadd.f32 %v717, %v788
  %v792 = vxor.u32 %v791, 2147483648
  %v793 = vmul.f32 %v792, 1.442695
  %v794 = vpow.pop %v793
  %v795 = vadd.f32 %v794, 1.0
  %v796 = vrcp.pop %v795
  %v797 = vmul.f32 1.0, %v796
  %v798 = vtanh.pop %v791
  %v799 = vmul.f32 %v797, %v693
  %801 = vrot.lane.b32.xlu0 %v798, 32
  %v802 = vpop.permute.xlu0 %801
  %v804 = vmul.f32 %v797, %v802
  %806 = vrot.lane.b32.xlu0 %v804, 32
  %v807 = vpop.permute.xlu0 %806
  %v809 = vadd.f32 %v799, %v807
  %v810 = vtanh.pop %v809
  %812 = vrot.lane.b32.xlu0 %v810, 32
  %v813 = vpop.permute.xlu0 %812
  %v815 = vmul.f32 %v797, %v813
  %v816 = vmul.f32 %v815, %v144
  %v817 = vmul.f32 %v815, %v145
  %819 = vrot.lane.b32.xlu0 %v816, 64
  %v820 = vpop.permute.xlu0 %819
  %823 = vrot.lane.b32.xlu0 %v817, 96
  %v824 = vpop.permute.xlu0 %823
  %v826 = vsel %vm257, %v820, %v824
  %v827 = vsel %vm146, %v136, %v120
  %v829 = vsel %vm148, %v826, 0
  %831 = vmatprep.subr.mxu0 0.0
  %832 = vmatpush1.msra.mxu0 %v17
  %833 = vmatprep.subr.mxu0 0.0
  %834 = vmatpush1.msra.mxu0 %v18
  %835 = vmatprep.subr.mxu0 0.0
  %836 = vmatpush1.msra.mxu0 %v19
  %837 = vmatprep.subr.mxu0 0.0
  %838 = vmatpush1.msra.mxu0 %v20
  %839 = vmatprep.subr.mxu0 0.0
  %840 = vmatpush1.msra.mxu0 %v21
  %841 = vmatprep.subr.mxu0 0.0
  %842 = vmatpush1.msra.mxu0 %v22
  %843 = vmatprep.subr.mxu0 0.0
  %844 = vmatpush1.msra.mxu0 %v23
  %845 = vmatprep.subr.mxu0 0.0
  %846 = vmatpush1.msra.mxu0 %v24
  %847 = vmatprep.subr.mxu0 0.0
  %848 = vmatpush1.msra.mxu0 0.0
  %849 = vmatprep.subr.mxu0 0.0
  %850 = vmatpush1.msra.mxu0 0.0
  %851 = vmatprep.subr.mxu0 0.0
  %852 = vmatpush1.msra.mxu0 0.0
  %853 = vmatprep.subr.mxu0 0.0
  %854 = vmatpush1.msra.mxu0 0.0
  %855 = vmatprep.subr.mxu0 0.0
  %856 = vmatpush1.msra.mxu0 0.0
  %857 = vmatprep.subr.mxu0 0.0
  %858 = vmatpush1.msra.mxu0 0.0
  %859 = vmatprep.subr.mxu0 0.0
  %860 = vmatpush1.msra.mxu0 0.0
  %861 = vmatprep.subr.mxu0 0.0
  %862 = vmatpush1.msra.mxu0 0.0
  %863 = vmatprep.subr.mxu0 0.0
  %864 = vmatpush1.msra.mxu0 0.0
  %865 = vmatprep.subr.mxu0 0.0
  %866 = vmatpush1.msra.mxu0 0.0
  %867 = vmatprep.subr.mxu0 0.0
  %868 = vmatpush1.msra.mxu0 0.0
  %869 = vmatprep.subr.mxu0 0.0
  %870 = vmatpush1.msra.mxu0 0.0
  %871 = vmatprep.subr.mxu0 0.0
  %872 = vmatpush1.msra.mxu0 0.0
  %873 = vmatprep.subr.mxu0 0.0
  %874 = vmatpush1.msra.mxu0 0.0
  %875 = vmatprep.subr.mxu0 0.0
  %876 = vmatpush1.msra.mxu0 0.0
  %877 = vmatprep.subr.mxu0 0.0
  %878 = vmatpush1.msra.mxu0 0.0
  %879 = vmatprep.subr.mxu0 0.0
  %880 = vmatpush1.msra.mxu0 0.0
  %881 = vmatprep.subr.mxu0 0.0
  %882 = vmatpush1.msra.mxu0 0.0
  %883 = vmatprep.subr.mxu0 0.0
  %884 = vmatpush1.msra.mxu0 0.0
  %885 = vmatprep.subr.mxu0 0.0
  %886 = vmatpush1.msra.mxu0 0.0
  %887 = vmatprep.subr.mxu0 0.0
  %888 = vmatpush1.msra.mxu0 0.0
  %889 = vmatprep.subr.mxu0 0.0
  %890 = vmatpush1.msra.mxu0 0.0
  %891 = vmatprep.subr.mxu0 0.0
  %892 = vmatpush1.msra.mxu0 0.0
  %893 = vmatprep.subr.mxu0 0.0
  %894 = vmatpush1.msra.mxu0 0.0
  %895 = vmatprep.mubr.f32.mxu0 0.0
  %896 = vmatmul.mubr.f32.gmra.mrb[0].mxu0 %v829
  %v897 = vpop.f32.mrb[0].mxu0
  %v898 = vadd.f32 0.0, %v897
  %v899 = vpop.f32.mrb[0].mxu0
  %900 = vdwg.mxu0
  %v901 = vadd.f32 %v827, %v898
  %v902 = vxor.u32 %v901, 2147483648
  %v903 = vmul.f32 %v902, 1.442695
  %v904 = vpow.pop %v903
  %v905 = vadd.f32 %v904, 1.0
  %v906 = vrcp.pop %v905
  %v907 = vmul.f32 1.0, %v906
  %v908 = vtanh.pop %v901
  %v909 = vmul.f32 %v907, %v809
  %911 = vrot.lane.b32.xlu0 %v908, 32
  %v912 = vpop.permute.xlu0 %911
  %v914 = vmul.f32 %v907, %v912
  %916 = vrot.lane.b32.xlu0 %v914, 32
  %v917 = vpop.permute.xlu0 %916
  %v919 = vadd.f32 %v909, %v917
  %v920 = vtanh.pop %v919
  %922 = vrot.lane.b32.xlu0 %v920, 32
  %v923 = vpop.permute.xlu0 %922
  %v925 = vmul.f32 %v907, %v923
  %v926 = vmul.f32 %v925, %v144
  %v927 = vmul.f32 %v925, %v145
  %929 = vrot.lane.b32.xlu0 %v926, 64
  %v930 = vpop.permute.xlu0 %929
  %933 = vrot.lane.b32.xlu0 %v927, 96
  %v934 = vpop.permute.xlu0 %933
  %v936 = vsel %vm257, %v930, %v934
  %v938 = vrot.slane %v136, 4
  %v941 = vrot.slane %v120, 4
  %v943 = vsel %vm146, %v938, %v941
  %v945 = vsel %vm148, %v936, 0
  %947 = vmatprep.subr.mxu0 0.0
  %948 = vmatpush1.msra.mxu0 %v17
  %949 = vmatprep.subr.mxu0 0.0
  %950 = vmatpush1.msra.mxu0 %v18
  %951 = vmatprep.subr.mxu0 0.0
  %952 = vmatpush1.msra.mxu0 %v19
  %953 = vmatprep.subr.mxu0 0.0
  %954 = vmatpush1.msra.mxu0 %v20
  %955 = vmatprep.subr.mxu0 0.0
  %956 = vmatpush1.msra.mxu0 %v21
  %957 = vmatprep.subr.mxu0 0.0
  %958 = vmatpush1.msra.mxu0 %v22
  %959 = vmatprep.subr.mxu0 0.0
  %960 = vmatpush1.msra.mxu0 %v23
  %961 = vmatprep.subr.mxu0 0.0
  %962 = vmatpush1.msra.mxu0 %v24
  %963 = vmatprep.subr.mxu0 0.0
  %964 = vmatpush1.msra.mxu0 0.0
  %965 = vmatprep.subr.mxu0 0.0
  %966 = vmatpush1.msra.mxu0 0.0
  %967 = vmatprep.subr.mxu0 0.0
  %968 = vmatpush1.msra.mxu0 0.0
  %969 = vmatprep.subr.mxu0 0.0
  %970 = vmatpush1.msra.mxu0 0.0
  %971 = vmatprep.subr.mxu0 0.0
  %972 = vmatpush1.msra.mxu0 0.0
  %973 = vmatprep.subr.mxu0 0.0
  %974 = vmatpush1.msra.mxu0 0.0
  %975 = vmatprep.subr.mxu0 0.0
  %976 = vmatpush1.msra.mxu0 0.0
  %977 = vmatprep.subr.mxu0 0.0
  %978 = vmatpush1.msra.mxu0 0.0
  %979 = vmatprep.subr.mxu0 0.0
  %980 = vmatpush1.msra.mxu0 0.0
  %981 = vmatprep.subr.mxu0 0.0
  %982 = vmatpush1.msra.mxu0 0.0
  %983 = vmatprep.subr.mxu0 0.0
  %984 = vmatpush1.msra.mxu0 0.0
  %985 = vmatprep.subr.mxu0 0.0
  %986 = vmatpush1.msra.mxu0 0.0
  %987 = vmatprep.subr.mxu0 0.0
  %988 = vmatpush1.msra.mxu0 0.0
  %989 = vmatprep.subr.mxu0 0.0
  %990 = vmatpush1.msra.mxu0 0.0
  %991 = vmatprep.subr.mxu0 0.0
  %992 = vmatpush1.msra.mxu0 0.0
  %993 = vmatprep.subr.mxu0 0.0
  %994 = vmatpush1.msra.mxu0 0.0
  %995 = vmatprep.subr.mxu0 0.0
  %996 = vmatpush1.msra.mxu0 0.0
  %997 = vmatprep.subr.mxu0 0.0
  %998 = vmatpush1.msra.mxu0 0.0
  %999 = vmatprep.subr.mxu0 0.0
  %1000 = vmatpush1.msra.mxu0 0.0
  %1001 = vmatprep.subr.mxu0 0.0
  %1002 = vmatpush1.msra.mxu0 0.0
  %1003 = vmatprep.subr.mxu0 0.0
  %1004 = vmatpush1.msra.mxu0 0.0
  %1005 = vmatprep.subr.mxu0 0.0
  %1006 = vmatpush1.msra.mxu0 0.0
  %1007 = vmatprep.subr.mxu0 0.0
  %1008 = vmatpush1.msra.mxu0 0.0
  %1009 = vmatprep.subr.mxu0 0.0
  %1010 = vmatpush1.msra.mxu0 0.0
  %1011 = vmatprep.mubr.f32.mxu0 0.0
  %1012 = vmatmul.mubr.f32.gmra.mrb[0].mxu0 %v945
  %v1013 = vpop.f32.mrb[0].mxu0
  %v1014 = vadd.f32 0.0, %v1013
  %v1015 = vpop.f32.mrb[0].mxu0
  %1016 = vdwg.mxu0
  %v1017 = vadd.f32 %v943, %v1014
  %v1018 = vxor.u32 %v1017, 2147483648
  %v1019 = vmul.f32 %v1018, 1.442695
  %v1020 = vpow.pop %v1019
  %v1021 = vadd.f32 %v1020, 1.0
  %v1022 = vrcp.pop %v1021
  %v1023 = vmul.f32 1.0, %v1022
  %v1024 = vtanh.pop %v1017
  %v1025 = vmul.f32 %v1023, %v919
  %1027 = vrot.lane.b32.xlu0 %v1024, 32
  %v1028 = vpop.permute.xlu0 %1027
  %v1030 = vmul.f32 %v1023, %v1028
  %1032 = vrot.lane.b32.xlu0 %v1030, 32
  %v1033 = vpop.permute.xlu0 %1032
  %v1035 = vadd.f32 %v1025, %v1033
  %v1036 = vtanh.pop %v1035
  %1038 = vrot.lane.b32.xlu0 %v1036, 32
  %v1039 = vpop.permute.xlu0 %1038
  %v1041 = vmul.f32 %v1023, %v1039
  %v1042 = vmul.f32 %v1041, %v144
  %v1043 = vmul.f32 %v1041, %v145
  %1045 = vrot.lane.b32.xlu0 %v1042, 64
  %v1046 = vpop.permute.xlu0 %1045
  %1049 = vrot.lane.b32.xlu0 %v1043, 96
  %v1050 = vpop.permute.xlu0 %1049
  %v1052 = vsel %vm257, %v1046, %v1050
  %v1054 = vrot.slane %v1052, 4
  %v1056 = vadd.f32 %v258, %v1054
  %v1057 = vrot.slane %v936, 4
  %v1059 = vadd.f32 %v374, %v1057
  %v1060 = vrot.slane %v826, 4
  %v1062 = vadd.f32 %v484, %v1060
  %v1063 = vrot.slane %v710, 4
  %v1065 = vadd.f32 %v600, %v1063
  %v1066 = vrot.slane %v600, 4
  %v1068 = vadd.f32 %v710, %v1066
  %v1069 = vrot.slane %v484, 4
  %v1071 = vadd.f32 %v826, %v1069
  %v1072 = vrot.slane %v374, 4
  %v1074 = vadd.f32 %v936, %v1072
  %v1075 = vrot.slane %v258, 4
  %v1077 = vadd.f32 %v1052, %v1075
  %v1079 = vrot.slane %v1059, 4
  %v1082 = vrot.slane %v1065, 4
  %v1085 = vrot.slane %v1071, 4
  %v1088 = vrot.slane %v1077, 4
  %v1090 = vsel %vm146, %v1056, %v1079
  %v1091 = vsel %vm146, %v1062, %v1082
  %v1092 = vsel %vm146, %v1068, %v1085
  %v1093 = vsel %vm146, %v1074, %v1088
  %v1094 = vld [vmem:[%s1 + $0x10] sm:$0xff]
  %v1095 = vld [vmem:[%s1 + $0x18] sm:$0xff]
  %v1096 = vld [vmem:[%s1 + $0x20] sm:$0xff]
  %v1097 = vld [vmem:[%s1 + $0x28] sm:$0xff]
  %v1098 = vld [vmem:[%s1 + $0x30] sm:$0xff]
  %v1099 = vld [vmem:[%s1 + $0x38] sm:$0xff]
  %v1100 = vld [vmem:[%s1 + $0x40] sm:$0xff]
  %v1101 = vld [vmem:[%s1 + $0x48] sm:$0xff]
  %v1102 = vld [vmem:[%s1 + $0x50] sm:$0xff]
  %v1103 = vld [vmem:[%s1 + $0x58] sm:$0xff]
  %v1104 = vld [vmem:[%s1 + $0x60] sm:$0xff]
  %v1105 = vld [vmem:[%s1 + $0x68] sm:$0xff]
  %v1106 = vld [vmem:[%s1 + $0x70] sm:$0xff]
  %v1107 = vld [vmem:[%s1 + $0x78] sm:$0xff]
  %v1108 = vld [vmem:[%s1 + $0x80] sm:$0xff]
  %v1109 = vld [vmem:[%s1 + $0x88] sm:$0xff]
  %v1110 = vld [vmem:[%s1 + $0x110] sm:$0xff]
  %v1111 = vld [vmem:[%s1 + $0x120] sm:$0xff]
  %v1112 = vld [vmem:[%s1 + $0x130] sm:$0xff]
  %v1113 = vld [vmem:[%s1 + $0x140] sm:$0xff]
  %v1114 = vld [vmem:[%s1 + $0x150] sm:$0xff]
  %v1115 = vld [vmem:[%s1 + $0x160] sm:$0xff]
  %v1116 = vld [vmem:[%s1 + $0x170] sm:$0xff]
  %v1117 = vld [vmem:[%s1 + $0x180] sm:$0xff]
  %s1118 = scalar_lea.vmem %s1, 416
  %v1119 = vld [vmem:[%s1118] ss:$8 sm:$0x3]
  %v1121 = vlaneseq
  %v1122 = vshrl.u32 %v1121, 7
  %v1123 = vsub.s32 0, %v1122
  %v1124 = vrot.slane %v1119, %v1123
  %v1125 = vlaneseq
  %v1126 = vshrl.u32 %v1125, 7
  %v1127 = vsub.s32 1, %v1126
  %v1128 = vrot.slane %v1119, %v1127
  %v1132 = vsel %vm148, %v1090, 0
  %v1135 = vsel %vm148, %v1091, 0
  %v1138 = vsel %vm148, %v1092, 0
  %v1141 = vsel %vm148, %v1093, 0
  %1143 = vmatprep.subr.mxu0 %v1095
  %1144 = vmatpush1.msra.mxu0 %v1094
  %1145 = vmatprep.subr.mxu0 %v1097
  %1146 = vmatpush1.msra.mxu0 %v1096
  %1147 = vmatprep.subr.mxu0 %v1099
  %1148 = vmatpush1.msra.mxu0 %v1098
  %1149 = vmatprep.subr.mxu0 %v1101
  %1150 = vmatpush1.msra.mxu0 %v1100
  %1151 = vmatprep.subr.mxu0 %v1103
  %1152 = vmatpush1.msra.mxu0 %v1102
  %1153 = vmatprep.subr.mxu0 %v1105
  %1154 = vmatpush1.msra.mxu0 %v1104
  %1155 = vmatprep.subr.mxu0 %v1107
  %1156 = vmatpush1.msra.mxu0 %v1106
  %1157 = vmatprep.subr.mxu0 %v1109
  %1158 = vmatpush1.msra.mxu0 %v1108
  %1159 = vmatprep.subr.mxu0 0.0
  %1160 = vmatpush1.msra.mxu0 0.0
  %1161 = vmatprep.subr.mxu0 0.0
  %1162 = vmatpush1.msra.mxu0 0.0
  %1163 = vmatprep.subr.mxu0 0.0
  %1164 = vmatpush1.msra.mxu0 0.0
  %1165 = vmatprep.subr.mxu0 0.0
  %1166 = vmatpush1.msra.mxu0 0.0
  %1167 = vmatprep.subr.mxu0 0.0
  %1168 = vmatpush1.msra.mxu0 0.0
  %1169 = vmatprep.subr.mxu0 0.0
  %1170 = vmatpush1.msra.mxu0 0.0
  %1171 = vmatprep.subr.mxu0 0.0
  %1172 = vmatpush1.msra.mxu0 0.0
  %1173 = vmatprep.subr.mxu0 0.0
  %1174 = vmatpush1.msra.mxu0 0.0
  %1175 = vmatprep.subr.mxu0 0.0
  %1176 = vmatpush1.msra.mxu0 0.0
  %1177 = vmatprep.subr.mxu0 0.0
  %1178 = vmatpush1.msra.mxu0 0.0
  %1179 = vmatprep.subr.mxu0 0.0
  %1180 = vmatpush1.msra.mxu0 0.0
  %1181 = vmatprep.subr.mxu0 0.0
  %1182 = vmatpush1.msra.mxu0 0.0
  %1183 = vmatprep.subr.mxu0 0.0
  %1184 = vmatpush1.msra.mxu0 0.0
  %1185 = vmatprep.subr.mxu0 0.0
  %1186 = vmatpush1.msra.mxu0 0.0
  %1187 = vmatprep.subr.mxu0 0.0
  %1188 = vmatpush1.msra.mxu0 0.0
  %1189 = vmatprep.subr.mxu0 0.0
  %1190 = vmatpush1.msra.mxu0 0.0
  %1191 = vmatprep.subr.mxu0 0.0
  %1192 = vmatpush1.msra.mxu0 0.0
  %1193 = vmatprep.subr.mxu0 0.0
  %1194 = vmatpush1.msra.mxu0 0.0
  %1195 = vmatprep.subr.mxu0 0.0
  %1196 = vmatpush1.msra.mxu0 0.0
  %1197 = vmatprep.subr.mxu0 0.0
  %1198 = vmatpush1.msra.mxu0 0.0
  %1199 = vmatprep.subr.mxu0 0.0
  %1200 = vmatpush1.msra.mxu0 0.0
  %1201 = vmatprep.subr.mxu0 0.0
  %1202 = vmatpush1.msra.mxu0 0.0
  %1203 = vmatprep.subr.mxu0 0.0
  %1204 = vmatpush1.msra.mxu0 0.0
  %1205 = vmatprep.subr.mxu0 0.0
  %1206 = vmatpush1.msra.mxu0 0.0
  %1207 = vmatprep.mubr.f32.mxu0 0.0
  %1208 = vmatmul.mubr.f32.gmra.mrb[0].mxu0 %v1132
  %v1209 = vpop.f32.mrb[0].mxu0
  %v1210 = vadd.f32 %v1124, %v1209
  %v1211 = vpop.f32.mrb[0].mxu0
  %v1212 = vadd.f32 %v1128, %v1211
  %1213 = vmatprep.mubr.f32.mxu0 0.0
  %1214 = vmatmul.mubr.f32.gmra.mrb[0].mxu0 %v1135
  %v1215 = vpop.f32.mrb[0].mxu0
  %v1216 = vadd.f32 %v1124, %v1215
  %v1217 = vpop.f32.mrb[0].mxu0
  %v1218 = vadd.f32 %v1128, %v1217
  %1219 = vmatprep.mubr.f32.mxu0 0.0
  %1220 = vmatmul.mubr.f32.gmra.mrb[0].mxu0 %v1138
  %v1221 = vpop.f32.mrb[0].mxu0
  %v1222 = vadd.f32 %v1124, %v1221
  %v1223 = vpop.f32.mrb[0].mxu0
  %v1224 = vadd.f32 %v1128, %v1223
  %1225 = vmatprep.mubr.f32.mxu0 0.0
  %1226 = vmatmul.mubr.f32.gmra.mrb[0].mxu0 %v1141
  %v1227 = vpop.f32.mrb[0].mxu0
  %v1228 = vadd.f32 %v1124, %v1227
  %v1229 = vpop.f32.mrb[0].mxu0
  %v1230 = vadd.f32 %v1128, %v1229
  %1231 = vdwg.mxu0
  %v1232 = vsel %vm146, %v1210, %v1230
  %1233 = vmatprep.subr.mxu0 0.0
  %1234 = vmatpush1.msra.mxu0 %v1110
  %1235 = vmatprep.subr.mxu0 0.0
  %1236 = vmatpush1.msra.mxu0 %v1111
  %1237 = vmatprep.subr.mxu0 0.0
  %1238 = vmatpush1.msra.mxu0 %v1112
  %1239 = vmatprep.subr.mxu0 0.0
  %1240 = vmatpush1.msra.mxu0 %v1113
  %1241 = vmatprep.subr.mxu0 0.0
  %1242 = vmatpush1.msra.mxu0 %v1114
  %1243 = vmatprep.subr.mxu0 0.0
  %1244 = vmatpush1.msra.mxu0 %v1115
  %1245 = vmatprep.subr.mxu0 0.0
  %1246 = vmatpush1.msra.mxu0 %v1116
  %1247 = vmatprep.subr.mxu0 0.0
  %1248 = vmatpush1.msra.mxu0 %v1117
  %1249 = vmatprep.subr.mxu0 0.0
  %1250 = vmatpush1.msra.mxu0 0.0
  %1251 = vmatprep.subr.mxu0 0.0
  %1252 = vmatpush1.msra.mxu0 0.0
  %1253 = vmatprep.subr.mxu0 0.0
  %1254 = vmatpush1.msra.mxu0 0.0
  %1255 = vmatprep.subr.mxu0 0.0
  %1256 = vmatpush1.msra.mxu0 0.0
  %1257 = vmatprep.subr.mxu0 0.0
  %1258 = vmatpush1.msra.mxu0 0.0
  %1259 = vmatprep.subr.mxu0 0.0
  %1260 = vmatpush1.msra.mxu0 0.0
  %1261 = vmatprep.subr.mxu0 0.0
  %1262 = vmatpush1.msra.mxu0 0.0
  %1263 = vmatprep.subr.mxu0 0.0
  %1264 = vmatpush1.msra.mxu0 0.0
  %1265 = vmatprep.subr.mxu0 0.0
  %1266 = vmatpush1.msra.mxu0 0.0
  %1267 = vmatprep.subr.mxu0 0.0
  %1268 = vmatpush1.msra.mxu0 0.0
  %1269 = vmatprep.subr.mxu0 0.0
  %1270 = vmatpush1.msra.mxu0 0.0
  %1271 = vmatprep.subr.mxu0 0.0
  %1272 = vmatpush1.msra.mxu0 0.0
  %1273 = vmatprep.subr.mxu0 0.0
  %1274 = vmatpush1.msra.mxu0 0.0
  %1275 = vmatprep.subr.mxu0 0.0
  %1276 = vmatpush1.msra.mxu0 0.0
  %1277 = vmatprep.subr.mxu0 0.0
  %1278 = vmatpush1.msra.mxu0 0.0
  %1279 = vmatprep.subr.mxu0 0.0
  %1280 = vmatpush1.msra.mxu0 0.0
  %1281 = vmatprep.subr.mxu0 0.0
  %1282 = vmatpush1.msra.mxu0 0.0
  %1283 = vmatprep.subr.mxu0 0.0
  %1284 = vmatpush1.msra.mxu0 0.0
  %1285 = vmatprep.subr.mxu0 0.0
  %1286 = vmatpush1.msra.mxu0 0.0
  %1287 = vmatprep.subr.mxu0 0.0
  %1288 = vmatpush1.msra.mxu0 0.0
  %1289 = vmatprep.subr.mxu0 0.0
  %1290 = vmatpush1.msra.mxu0 0.0
  %1291 = vmatprep.subr.mxu0 0.0
  %1292 = vmatpush1.msra.mxu0 0.0
  %1293 = vmatprep.subr.mxu0 0.0
  %1294 = vmatpush1.msra.mxu0 0.0
  %1295 = vmatprep.subr.mxu0 0.0
  %1296 = vmatpush1.msra.mxu0 0.0
  %1297 = vmatprep.mubr.f32.mxu0 0.0
  %1298 = vmatmul.mubr.f32.gmra.mrb[0].mxu0 %v150
  %v1299 = vpop.f32.mrb[0].mxu0
  %v1300 = vadd.f32 0.0, %v1299
  %v1301 = vpop.f32.mrb[0].mxu0
  %1302 = vdwg.mxu0
  %v1303 = vadd.f32 %v1232, %v1300
  %v1304 = vxor.u32 %v1303, 2147483648
  %v1305 = vmul.f32 %v1304, 1.442695
  %v1306 = vpow.pop %v1305
  %v1307 = vadd.f32 %v1306, 1.0
  %v1308 = vrcp.pop %v1307
  %v1309 = vmul.f32 1.0, %v1308
  %v1310 = vtanh.pop %v1303
  %v1311 = vmul.f32 %v1309, 0.0
  %1313 = vrot.lane.b32.xlu0 %v1310, 32
  %v1314 = vpop.permute.xlu0 %1313
  %v1316 = vmul.f32 %v1309, %v1314
  %1318 = vrot.lane.b32.xlu0 %v1316, 32
  %v1319 = vpop.permute.xlu0 %1318
  %v1321 = vadd.f32 %v1311, %v1319
  %v1322 = vtanh.pop %v1321
  %1324 = vrot.lane.b32.xlu0 %v1322, 32
  %v1325 = vpop.permute.xlu0 %1324
  %v1327 = vmul.f32 %v1309, %v1325
  %v1328 = vmul.f32 %v1327, %v144
  %v1329 = vmul.f32 %v1327, %v145
  %1331 = vrot.lane.b32.xlu0 %v1328, 64
  %v1332 = vpop.permute.xlu0 %1331
  %1335 = vrot.lane.b32.xlu0 %v1329, 96
  %v1336 = vpop.permute.xlu0 %1335
  %v1338 = vsel %vm257, %v1332, %v1336
  %v1340 = vrot.slane %v1210, 4
  %v1343 = vrot.slane %v1230, 4
  %v1345 = vsel %vm146, %v1340, %v1343
  %v1347 = vsel %vm148, %v1338, 0
  %1349 = vmatprep.subr.mxu0 0.0
  %1350 = vmatpush1.msra.mxu0 %v1110
  %1351 = vmatprep.subr.mxu0 0.0
  %1352 = vmatpush1.msra.mxu0 %v1111
  %1353 = vmatprep.subr.mxu0 0.0
  %1354 = vmatpush1.msra.mxu0 %v1112
  %1355 = vmatprep.subr.mxu0 0.0
  %1356 = vmatpush1.msra.mxu0 %v1113
  %1357 = vmatprep.subr.mxu0 0.0
  %1358 = vmatpush1.msra.mxu0 %v1114
  %1359 = vmatprep.subr.mxu0 0.0
  %1360 = vmatpush1.msra.mxu0 %v1115
  %1361 = vmatprep.subr.mxu0 0.0
  %1362 = vmatpush1.msra.mxu0 %v1116
  %1363 = vmatprep.subr.mxu0 0.0
  %1364 = vmatpush1.msra.mxu0 %v1117
  %1365 = vmatprep.subr.mxu0 0.0
  %1366 = vmatpush1.msra.mxu0 0.0
  %1367 = vmatprep.subr.mxu0 0.0
  %1368 = vmatpush1.msra.mxu0 0.0
  %1369 = vmatprep.subr.mxu0 0.0
  %1370 = vmatpush1.msra.mxu0 0.0
  %1371 = vmatprep.subr.mxu0 0.0
  %1372 = vmatpush1.msra.mxu0 0.0
  %1373 = vmatprep.subr.mxu0 0.0
  %1374 = vmatpush1.msra.mxu0 0.0
  %1375 = vmatprep.subr.mxu0 0.0
  %1376 = vmatpush1.msra.mxu0 0.0
  %1377 = vmatprep.subr.mxu0 0.0
  %1378 = vmatpush1.msra.mxu0 0.0
  %1379 = vmatprep.subr.mxu0 0.0
  %1380 = vmatpush1.msra.mxu0 0.0
  %1381 = vmatprep.subr.mxu0 0.0
  %1382 = vmatpush1.msra.mxu0 0.0
  %1383 = vmatprep.subr.mxu0 0.0
  %1384 = vmatpush1.msra.mxu0 0.0
  %1385 = vmatprep.subr.mxu0 0.0
  %1386 = vmatpush1.msra.mxu0 0.0
  %1387 = vmatprep.subr.mxu0 0.0
  %1388 = vmatpush1.msra.mxu0 0.0
  %1389 = vmatprep.subr.mxu0 0.0
  %1390 = vmatpush1.msra.mxu0 0.0
  %1391 = vmatprep.subr.mxu0 0.0
  %1392 = vmatpush1.msra.mxu0 0.0
  %1393 = vmatprep.subr.mxu0 0.0
  %1394 = vmatpush1.msra.mxu0 0.0
  %1395 = vmatprep.subr.mxu0 0.0
  %1396 = vmatpush1.msra.mxu0 0.0
  %1397 = vmatprep.subr.mxu0 0.0
  %1398 = vmatpush1.msra.mxu0 0.0
  %1399 = vmatprep.subr.mxu0 0.0
  %1400 = vmatpush1.msra.mxu0 0.0
  %1401 = vmatprep.subr.mxu0 0.0
  %1402 = vmatpush1.msra.mxu0 0.0
  %1403 = vmatprep.subr.mxu0 0.0
  %1404 = vmatpush1.msra.mxu0 0.0
  %1405 = vmatprep.subr.mxu0 0.0
  %1406 = vmatpush1.msra.mxu0 0.0
  %1407 = vmatprep.subr.mxu0 0.0
  %1408 = vmatpush1.msra.mxu0 0.0
  %1409 = vmatprep.subr.mxu0 0.0
  %1410 = vmatpush1.msra.mxu0 0.0
  %1411 = vmatprep.subr.mxu0 0.0
  %1412 = vmatpush1.msra.mxu0 0.0
  %1413 = vmatprep.mubr.f32.mxu0 0.0
  %1414 = vmatmul.mubr.f32.gmra.mrb[0].mxu0 %v1347
  %v1415 = vpop.f32.mrb[0].mxu0
  %v1416 = vadd.f32 0.0, %v1415
  %v1417 = vpop.f32.mrb[0].mxu0
  %1418 = vdwg.mxu0
  %v1419 = vadd.f32 %v1345, %v1416
  %v1420 = vxor.u32 %v1419, 2147483648
  %v1421 = vmul.f32 %v1420, 1.442695
  %v1422 = vpow.pop %v1421
  %v1423 = vadd.f32 %v1422, 1.0
  %v1424 = vrcp.pop %v1423
  %v1425 = vmul.f32 1.0, %v1424
  %v1426 = vtanh.pop %v1419
  %v1427 = vmul.f32 %v1425, %v1321
  %1429 = vrot.lane.b32.xlu0 %v1426, 32
  %v1430 = vpop.permute.xlu0 %1429
  %v1432 = vmul.f32 %v1425, %v1430
  %1434 = vrot.lane.b32.xlu0 %v1432, 32
  %v1435 = vpop.permute.xlu0 %1434
  %v1437 = vadd.f32 %v1427, %v1435
  %v1438 = vtanh.pop %v1437
  %1440 = vrot.lane.b32.xlu0 %v1438, 32
  %v1441 = vpop.permute.xlu0 %1440
  %v1443 = vmul.f32 %v1425, %v1441
  %v1444 = vmul.f32 %v1443, %v144
  %v1445 = vmul.f32 %v1443, %v145
  %1447 = vrot.lane.b32.xlu0 %v1444, 64
  %v1448 = vpop.permute.xlu0 %1447
  %1451 = vrot.lane.b32.xlu0 %v1445, 96
  %v1452 = vpop.permute.xlu0 %1451
  %v1454 = vsel %vm257, %v1448, %v1452
  %v1455 = vsel %vm146, %v1216, %v1224
  %v1457 = vsel %vm148, %v1454, 0
  %1459 = vmatprep.subr.mxu0 0.0
  %1460 = vmatpush1.msra.mxu0 %v1110
  %1461 = vmatprep.subr.mxu0 0.0
  %1462 = vmatpush1.msra.mxu0 %v1111
  %1463 = vmatprep.subr.mxu0 0.0
  %1464 = vmatpush1.msra.mxu0 %v1112
  %1465 = vmatprep.subr.mxu0 0.0
  %1466 = vmatpush1.msra.mxu0 %v1113
  %1467 = vmatprep.subr.mxu0 0.0
  %1468 = vmatpush1.msra.mxu0 %v1114
  %1469 = vmatprep.subr.mxu0 0.0
  %1470 = vmatpush1.msra.mxu0 %v1115
  %1471 = vmatprep.subr.mxu0 0.0
  %1472 = vmatpush1.msra.mxu0 %v1116
  %1473 = vmatprep.subr.mxu0 0.0
  %1474 = vmatpush1.msra.mxu0 %v1117
  %1475 = vmatprep.subr.mxu0 0.0
  %1476 = vmatpush1.msra.mxu0 0.0
  %1477 = vmatprep.subr.mxu0 0.0
  %1478 = vmatpush1.msra.mxu0 0.0
  %1479 = vmatprep.subr.mxu0 0.0
  %1480 = vmatpush1.msra.mxu0 0.0
  %1481 = vmatprep.subr.mxu0 0.0
  %1482 = vmatpush1.msra.mxu0 0.0
  %1483 = vmatprep.subr.mxu0 0.0
  %1484 = vmatpush1.msra.mxu0 0.0
  %1485 = vmatprep.subr.mxu0 0.0
  %1486 = vmatpush1.msra.mxu0 0.0
  %1487 = vmatprep.subr.mxu0 0.0
  %1488 = vmatpush1.msra.mxu0 0.0
  %1489 = vmatprep.subr.mxu0 0.0
  %1490 = vmatpush1.msra.mxu0 0.0
  %1491 = vmatprep.subr.mxu0 0.0
  %1492 = vmatpush1.msra.mxu0 0.0
  %1493 = vmatprep.subr.mxu0 0.0
  %1494 = vmatpush1.msra.mxu0 0.0
  %1495 = vmatprep.subr.mxu0 0.0
  %1496 = vmatpush1.msra.mxu0 0.0
  %1497 = vmatprep.subr.mxu0 0.0
  %1498 = vmatpush1.msra.mxu0 0.0
  %1499 = vmatprep.subr.mxu0 0.0
  %1500 = vmatpush1.msra.mxu0 0.0
  %1501 = vmatprep.subr.mxu0 0.0
  %1502 = vmatpush1.msra.mxu0 0.0
  %1503 = vmatprep.subr.mxu0 0.0
  %1504 = vmatpush1.msra.mxu0 0.0
  %1505 = vmatprep.subr.mxu0 0.0
  %1506 = vmatpush1.msra.mxu0 0.0
  %1507 = vmatprep.subr.mxu0 0.0
  %1508 = vmatpush1.msra.mxu0 0.0
  %1509 = vmatprep.subr.mxu0 0.0
  %1510 = vmatpush1.msra.mxu0 0.0
  %1511 = vmatprep.subr.mxu0 0.0
  %1512 = vmatpush1.msra.mxu0 0.0
  %1513 = vmatprep.subr.mxu0 0.0
  %1514 = vmatpush1.msra.mxu0 0.0
  %1515 = vmatprep.subr.mxu0 0.0
  %1516 = vmatpush1.msra.mxu0 0.0
  %1517 = vmatprep.subr.mxu0 0.0
  %1518 = vmatpush1.msra.mxu0 0.0
  %1519 = vmatprep.subr.mxu0 0.0
  %1520 = vmatpush1.msra.mxu0 0.0
  %1521 = vmatprep.subr.mxu0 0.0
  %1522 = vmatpush1.msra.mxu0 0.0
  %1523 = vmatprep.mubr.f32.mxu0 0.0
  %1524 = vmatmul.mubr.f32.gmra.mrb[0].mxu0 %v1457
  %v1525 = vpop.f32.mrb[0].mxu0
  %v1526 = vadd.f32 0.0, %v1525
  %v1527 = vpop.f32.mrb[0].mxu0
  %1528 = vdwg.mxu0
  %v1529 = vadd.f32 %v1455, %v1526
  %v1530 = vxor.u32 %v1529, 2147483648
  %v1531 = vmul.f32 %v1530, 1.442695
  %v1532 = vpow.pop %v1531
  %v1533 = vadd.f32 %v1532, 1.0
  %v1534 = vrcp.pop %v1533
  %v1535 = vmul.f32 1.0, %v1534
  %v1536 = vtanh.pop %v1529
  %v1537 = vmul.f32 %v1535, %v1437
  %1539 = vrot.lane.b32.xlu0 %v1536, 32
  %v1540 = vpop.permute.xlu0 %1539
  %v1542 = vmul.f32 %v1535, %v1540
  %1544 = vrot.lane.b32.xlu0 %v1542, 32
  %v1545 = vpop.permute.xlu0 %1544
  %v1547 = vadd.f32 %v1537, %v1545
  %v1548 = vtanh.pop %v1547
  %1550 = vrot.lane.b32.xlu0 %v1548, 32
  %v1551 = vpop.permute.xlu0 %1550
  %v1553 = vmul.f32 %v1535, %v1551
  %v1554 = vmul.f32 %v1553, %v144
  %v1555 = vmul.f32 %v1553, %v145
  %1557 = vrot.lane.b32.xlu0 %v1554, 64
  %v1558 = vpop.permute.xlu0 %1557
  %1561 = vrot.lane.b32.xlu0 %v1555, 96
  %v1562 = vpop.permute.xlu0 %1561
  %v1564 = vsel %vm257, %v1558, %v1562
  %v1566 = vrot.slane %v1216, 4
  %v1569 = vrot.slane %v1224, 4
  %v1571 = vsel %vm146, %v1566, %v1569
  %v1573 = vsel %vm148, %v1564, 0
  %1575 = vmatprep.subr.mxu0 0.0
  %1576 = vmatpush1.msra.mxu0 %v1110
  %1577 = vmatprep.subr.mxu0 0.0
  %1578 = vmatpush1.msra.mxu0 %v1111
  %1579 = vmatprep.subr.mxu0 0.0
  %1580 = vmatpush1.msra.mxu0 %v1112
  %1581 = vmatprep.subr.mxu0 0.0
  %1582 = vmatpush1.msra.mxu0 %v1113
  %1583 = vmatprep.subr.mxu0 0.0
  %1584 = vmatpush1.msra.mxu0 %v1114
  %1585 = vmatprep.subr.mxu0 0.0
  %1586 = vmatpush1.msra.mxu0 %v1115
  %1587 = vmatprep.subr.mxu0 0.0
  %1588 = vmatpush1.msra.mxu0 %v1116
  %1589 = vmatprep.subr.mxu0 0.0
  %1590 = vmatpush1.msra.mxu0 %v1117
  %1591 = vmatprep.subr.mxu0 0.0
  %1592 = vmatpush1.msra.mxu0 0.0
  %1593 = vmatprep.subr.mxu0 0.0
  %1594 = vmatpush1.msra.mxu0 0.0
  %1595 = vmatprep.subr.mxu0 0.0
  %1596 = vmatpush1.msra.mxu0 0.0
  %1597 = vmatprep.subr.mxu0 0.0
  %1598 = vmatpush1.msra.mxu0 0.0
  %1599 = vmatprep.subr.mxu0 0.0
  %1600 = vmatpush1.msra.mxu0 0.0
  %1601 = vmatprep.subr.mxu0 0.0
  %1602 = vmatpush1.msra.mxu0 0.0
  %1603 = vmatprep.subr.mxu0 0.0
  %1604 = vmatpush1.msra.mxu0 0.0
  %1605 = vmatprep.subr.mxu0 0.0
  %1606 = vmatpush1.msra.mxu0 0.0
  %1607 = vmatprep.subr.mxu0 0.0
  %1608 = vmatpush1.msra.mxu0 0.0
  %1609 = vmatprep.subr.mxu0 0.0
  %1610 = vmatpush1.msra.mxu0 0.0
  %1611 = vmatprep.subr.mxu0 0.0
  %1612 = vmatpush1.msra.mxu0 0.0
  %1613 = vmatprep.subr.mxu0 0.0
  %1614 = vmatpush1.msra.mxu0 0.0
  %1615 = vmatprep.subr.mxu0 0.0
  %1616 = vmatpush1.msra.mxu0 0.0
  %1617 = vmatprep.subr.mxu0 0.0
  %1618 = vmatpush1.msra.mxu0 0.0
  %1619 = vmatprep.subr.mxu0 0.0
  %1620 = vmatpush1.msra.mxu0 0.0
  %1621 = vmatprep.subr.mxu0 0.0
  %1622 = vmatpush1.msra.mxu0 0.0
  %1623 = vmatprep.subr.mxu0 0.0
  %1624 = vmatpush1.msra.mxu0 0.0
  %1625 = vmatprep.subr.mxu0 0.0
  %1626 = vmatpush1.msra.mxu0 0.0
  %1627 = vmatprep.subr.mxu0 0.0
  %1628 = vmatpush1.msra.mxu0 0.0
  %1629 = vmatprep.subr.mxu0 0.0
  %1630 = vmatpush1.msra.mxu0 0.0
  %1631 = vmatprep.subr.mxu0 0.0
  %1632 = vmatpush1.msra.mxu0 0.0
  %1633 = vmatprep.subr.mxu0 0.0
  %1634 = vmatpush1.msra.mxu0 0.0
  %1635 = vmatprep.subr.mxu0 0.0
  %1636 = vmatpush1.msra.mxu0 0.0
  %1637 = vmatprep.subr.mxu0 0.0
  %1638 = vmatpush1.msra.mxu0 0.0
  %1639 = vmatprep.mubr.f32.mxu0 0.0
  %1640 = vmatmul.mubr.f32.gmra.mrb[0].mxu0 %v1573
  %v1641 = vpop.f32.mrb[0].mxu0
  %v1642 = vadd.f32 0.0, %v1641
  %v1643 = vpop.f32.mrb[0].mxu0
  %1644 = vdwg.mxu0
  %v1645 = vadd.f32 %v1571, %v1642
  %v1646 = vxor.u32 %v1645, 2147483648
  %v1647 = vmul.f32 %v1646, 1.442695
  %v1648 = vpow.pop %v1647
  %v1649 = vadd.f32 %v1648, 1.0
  %v1650 = vrcp.pop %v1649
  %v1651 = vmul.f32 1.0, %v1650
  %v1652 = vtanh.pop %v1645
  %v1653 = vmul.f32 %v1651, %v1547
  %1655 = vrot.lane.b32.xlu0 %v1652, 32
  %v1656 = vpop.permute.xlu0 %1655
  %v1658 = vmul.f32 %v1651, %v1656
  %1660 = vrot.lane.b32.xlu0 %v1658, 32
  %v1661 = vpop.permute.xlu0 %1660
  %v1663 = vadd.f32 %v1653, %v1661
  %v1664 = vtanh.pop %v1663
  %1666 = vrot.lane.b32.xlu0 %v1664, 32
  %v1667 = vpop.permute.xlu0 %1666
  %v1669 = vmul.f32 %v1651, %v1667
  %v1670 = vmul.f32 %v1669, %v144
  %v1671 = vmul.f32 %v1669, %v145
  %1673 = vrot.lane.b32.xlu0 %v1670, 64
  %v1674 = vpop.permute.xlu0 %1673
  %1677 = vrot.lane.b32.xlu0 %v1671, 96
  %v1678 = vpop.permute.xlu0 %1677
  %v1680 = vsel %vm257, %v1674, %v1678
  %v1681 = vsel %vm146, %v1222, %v1218
  %v1683 = vsel %vm148, %v1680, 0
  %1685 = vmatprep.subr.mxu0 0.0
  %1686 = vmatpush1.msra.mxu0 %v1110
  %1687 = vmatprep.subr.mxu0 0.0
  %1688 = vmatpush1.msra.mxu0 %v1111
  %1689 = vmatprep.subr.mxu0 0.0
  %1690 = vmatpush1.msra.mxu0 %v1112
  %1691 = vmatprep.subr.mxu0 0.0
  %1692 = vmatpush1.msra.mxu0 %v1113
  %1693 = vmatprep.subr.mxu0 0.0
  %1694 = vmatpush1.msra.mxu0 %v1114
  %1695 = vmatprep.subr.mxu0 0.0
  %1696 = vmatpush1.msra.mxu0 %v1115
  %1697 = vmatprep.subr.mxu0 0.0
  %1698 = vmatpush1.msra.mxu0 %v1116
  %1699 = vmatprep.subr.mxu0 0.0
  %1700 = vmatpush1.msra.mxu0 %v1117
  %1701 = vmatprep.subr.mxu0 0.0
  %1702 = vmatpush1.msra.mxu0 0.0
  %1703 = vmatprep.subr.mxu0 0.0
  %1704 = vmatpush1.msra.mxu0 0.0
  %1705 = vmatprep.subr.mxu0 0.0
  %1706 = vmatpush1.msra.mxu0 0.0
  %1707 = vmatprep.subr.mxu0 0.0
  %1708 = vmatpush1.msra.mxu0 0.0
  %1709 = vmatprep.subr.mxu0 0.0
  %1710 = vmatpush1.msra.mxu0 0.0
  %1711 = vmatprep.subr.mxu0 0.0
  %1712 = vmatpush1.msra.mxu0 0.0
  %1713 = vmatprep.subr.mxu0 0.0
  %1714 = vmatpush1.msra.mxu0 0.0
  %1715 = vmatprep.subr.mxu0 0.0
  %1716 = vmatpush1.msra.mxu0 0.0
  %1717 = vmatprep.subr.mxu0 0.0
  %1718 = vmatpush1.msra.mxu0 0.0
  %1719 = vmatprep.subr.mxu0 0.0
  %1720 = vmatpush1.msra.mxu0 0.0
  %1721 = vmatprep.subr.mxu0 0.0
  %1722 = vmatpush1.msra.mxu0 0.0
  %1723 = vmatprep.subr.mxu0 0.0
  %1724 = vmatpush1.msra.mxu0 0.0
  %1725 = vmatprep.subr.mxu0 0.0
  %1726 = vmatpush1.msra.mxu0 0.0
  %1727 = vmatprep.subr.mxu0 0.0
  %1728 = vmatpush1.msra.mxu0 0.0
  %1729 = vmatprep.subr.mxu0 0.0
  %1730 = vmatpush1.msra.mxu0 0.0
  %1731 = vmatprep.subr.mxu0 0.0
  %1732 = vmatpush1.msra.mxu0 0.0
  %1733 = vmatprep.subr.mxu0 0.0
  %1734 = vmatpush1.msra.mxu0 0.0
  %1735 = vmatprep.subr.mxu0 0.0
  %1736 = vmatpush1.msra.mxu0 0.0
  %1737 = vmatprep.subr.mxu0 0.0
  %1738 = vmatpush1.msra.mxu0 0.0
  %1739 = vmatprep.subr.mxu0 0.0
  %1740 = vmatpush1.msra.mxu0 0.0
  %1741 = vmatprep.subr.mxu0 0.0
  %1742 = vmatpush1.msra.mxu0 0.0
  %1743 = vmatprep.subr.mxu0 0.0
  %1744 = vmatpush1.msra.mxu0 0.0
  %1745 = vmatprep.subr.mxu0 0.0
  %1746 = vmatpush1.msra.mxu0 0.0
  %1747 = vmatprep.subr.mxu0 0.0
  %1748 = vmatpush1.msra.mxu0 0.0
  %1749 = vmatprep.mubr.f32.mxu0 0.0
  %1750 = vmatmul.mubr.f32.gmra.mrb[0].mxu0 %v1683
  %v1751 = vpop.f32.mrb[0].mxu0
  %v1752 = vadd.f32 0.0, %v1751
  %v1753 = vpop.f32.mrb[0].mxu0
  %1754 = vdwg.mxu0
  %v1755 = vadd.f32 %v1681, %v1752
  %v1756 = vxor.u32 %v1755, 2147483648
  %v1757 = vmul.f32 %v1756, 1.442695
  %v1758 = vpow.pop %v1757
  %v1759 = vadd.f32 %v1758, 1.0
  %v1760 = vrcp.pop %v1759
  %v1761 = vmul.f32 1.0, %v1760
  %v1762 = vtanh.pop %v1755
  %v1763 = vmul.f32 %v1761, %v1663
  %1765 = vrot.lane.b32.xlu0 %v1762, 32
  %v1766 = vpop.permute.xlu0 %1765
  %v1768 = vmul.f32 %v1761, %v1766
  %1770 = vrot.lane.b32.xlu0 %v1768, 32
  %v1771 = vpop.permute.xlu0 %1770
  %v1773 = vadd.f32 %v1763, %v1771
  %v1774 = vtanh.pop %v1773
  %1776 = vrot.lane.b32.xlu0 %v1774, 32
  %v1777 = vpop.permute.xlu0 %1776
  %v1779 = vmul.f32 %v1761, %v1777
  %v1780 = vmul.f32 %v1779, %v144
  %v1781 = vmul.f32 %v1779, %v145
  %1783 = vrot.lane.b32.xlu0 %v1780, 64
  %v1784 = vpop.permute.xlu0 %1783
  %1787 = vrot.lane.b32.xlu0 %v1781, 96
  %v1788 = vpop.permute.xlu0 %1787
  %v1790 = vsel %vm257, %v1784, %v1788
  %v1792 = vrot.slane %v1222, 4
  %v1795 = vrot.slane %v1218, 4
  %v1797 = vsel %vm146, %v1792, %v1795
  %v1799 = vsel %vm148, %v1790, 0
  %1801 = vmatprep.subr.mxu0 0.0
  %1802 = vmatpush1.msra.mxu0 %v1110
  %1803 = vmatprep.subr.mxu0 0.0
  %1804 = vmatpush1.msra.mxu0 %v1111
  %1805 = vmatprep.subr.mxu0 0.0
  %1806 = vmatpush1.msra.mxu0 %v1112
  %1807 = vmatprep.subr.mxu0 0.0
  %1808 = vmatpush1.msra.mxu0 %v1113
  %1809 = vmatprep.subr.mxu0 0.0
  %1810 = vmatpush1.msra.mxu0 %v1114
  %1811 = vmatprep.subr.mxu0 0.0
  %1812 = vmatpush1.msra.mxu0 %v1115
  %1813 = vmatprep.subr.mxu0 0.0
  %1814 = vmatpush1.msra.mxu0 %v1116
  %1815 = vmatprep.subr.mxu0 0.0
  %1816 = vmatpush1.msra.mxu0 %v1117
  %1817 = vmatprep.subr.mxu0 0.0
  %1818 = vmatpush1.msra.mxu0 0.0
  %1819 = vmatprep.subr.mxu0 0.0
  %1820 = vmatpush1.msra.mxu0 0.0
  %1821 = vmatprep.subr.mxu0 0.0
  %1822 = vmatpush1.msra.mxu0 0.0
  %1823 = vmatprep.subr.mxu0 0.0
  %1824 = vmatpush1.msra.mxu0 0.0
  %1825 = vmatprep.subr.mxu0 0.0
  %1826 = vmatpush1.msra.mxu0 0.0
  %1827 = vmatprep.subr.mxu0 0.0
  %1828 = vmatpush1.msra.mxu0 0.0
  %1829 = vmatprep.subr.mxu0 0.0
  %1830 = vmatpush1.msra.mxu0 0.0
  %1831 = vmatprep.subr.mxu0 0.0
  %1832 = vmatpush1.msra.mxu0 0.0
  %1833 = vmatprep.subr.mxu0 0.0
  %1834 = vmatpush1.msra.mxu0 0.0
  %1835 = vmatprep.subr.mxu0 0.0
  %1836 = vmatpush1.msra.mxu0 0.0
  %1837 = vmatprep.subr.mxu0 0.0
  %1838 = vmatpush1.msra.mxu0 0.0
  %1839 = vmatprep.subr.mxu0 0.0
  %1840 = vmatpush1.msra.mxu0 0.0
  %1841 = vmatprep.subr.mxu0 0.0
  %1842 = vmatpush1.msra.mxu0 0.0
  %1843 = vmatprep.subr.mxu0 0.0
  %1844 = vmatpush1.msra.mxu0 0.0
  %1845 = vmatprep.subr.mxu0 0.0
  %1846 = vmatpush1.msra.mxu0 0.0
  %1847 = vmatprep.subr.mxu0 0.0
  %1848 = vmatpush1.msra.mxu0 0.0
  %1849 = vmatprep.subr.mxu0 0.0
  %1850 = vmatpush1.msra.mxu0 0.0
  %1851 = vmatprep.subr.mxu0 0.0
  %1852 = vmatpush1.msra.mxu0 0.0
  %1853 = vmatprep.subr.mxu0 0.0
  %1854 = vmatpush1.msra.mxu0 0.0
  %1855 = vmatprep.subr.mxu0 0.0
  %1856 = vmatpush1.msra.mxu0 0.0
  %1857 = vmatprep.subr.mxu0 0.0
  %1858 = vmatpush1.msra.mxu0 0.0
  %1859 = vmatprep.subr.mxu0 0.0
  %1860 = vmatpush1.msra.mxu0 0.0
  %1861 = vmatprep.subr.mxu0 0.0
  %1862 = vmatpush1.msra.mxu0 0.0
  %1863 = vmatprep.subr.mxu0 0.0
  %1864 = vmatpush1.msra.mxu0 0.0
  %1865 = vmatprep.mubr.f32.mxu0 0.0
  %1866 = vmatmul.mubr.f32.gmra.mrb[0].mxu0 %v1799
  %v1867 = vpop.f32.mrb[0].mxu0
  %v1868 = vadd.f32 0.0, %v1867
  %v1869 = vpop.f32.mrb[0].mxu0
  %1870 = vdwg.mxu0
  %v1871 = vadd.f32 %v1797, %v1868
  %v1872 = vxor.u32 %v1871, 2147483648
  %v1873 = vmul.f32 %v1872, 1.442695
  %v1874 = vpow.pop %v1873
  %v1875 = vadd.f32 %v1874, 1.0
  %v1876 = vrcp.pop %v1875
  %v1877 = vmul.f32 1.0, %v1876
  %v1878 = vtanh.pop %v1871
  %v1879 = vmul.f32 %v1877, %v1773
  %1881 = vrot.lane.b32.xlu0 %v1878, 32
  %v1882 = vpop.permute.xlu0 %1881
  %v1884 = vmul.f32 %v1877, %v1882
  %1886 = vrot.lane.b32.xlu0 %v1884, 32
  %v1887 = vpop.permute.xlu0 %1886
  %v1889 = vadd.f32 %v1879, %v1887
  %v1890 = vtanh.pop %v1889
  %1892 = vrot.lane.b32.xlu0 %v1890, 32
  %v1893 = vpop.permute.xlu0 %1892
  %v1895 = vmul.f32 %v1877, %v1893
  %v1896 = vmul.f32 %v1895, %v144
  %v1897 = vmul.f32 %v1895, %v145
  %1899 = vrot.lane.b32.xlu0 %v1896, 64
  %v1900 = vpop.permute.xlu0 %1899
  %1903 = vrot.lane.b32.xlu0 %v1897, 96
  %v1904 = vpop.permute.xlu0 %1903
  %v1906 = vsel %vm257, %v1900, %v1904
  %v1907 = vsel %vm146, %v1228, %v1212
  %v1909 = vsel %vm148, %v1906, 0
  %1911 = vmatprep.subr.mxu0 0.0
  %1912 = vmatpush1.msra.mxu0 %v1110
  %1913 = vmatprep.subr.mxu0 0.0
  %1914 = vmatpush1.msra.mxu0 %v1111
  %1915 = vmatprep.subr.mxu0 0.0
  %1916 = vmatpush1.msra.mxu0 %v1112
  %1917 = vmatprep.subr.mxu0 0.0
  %1918 = vmatpush1.msra.mxu0 %v1113
  %1919 = vmatprep.subr.mxu0 0.0
  %1920 = vmatpush1.msra.mxu0 %v1114
  %1921 = vmatprep.subr.mxu0 0.0
  %1922 = vmatpush1.msra.mxu0 %v1115
  %1923 = vmatprep.subr.mxu0 0.0
  %1924 = vmatpush1.msra.mxu0 %v1116
  %1925 = vmatprep.subr.mxu0 0.0
  %1926 = vmatpush1.msra.mxu0 %v1117
  %1927 = vmatprep.subr.mxu0 0.0
  %1928 = vmatpush1.msra.mxu0 0.0
  %1929 = vmatprep.subr.mxu0 0.0
  %1930 = vmatpush1.msra.mxu0 0.0
  %1931 = vmatprep.subr.mxu0 0.0
  %1932 = vmatpush1.msra.mxu0 0.0
  %1933 = vmatprep.subr.mxu0 0.0
  %1934 = vmatpush1.msra.mxu0 0.0
  %1935 = vmatprep.subr.mxu0 0.0
  %1936 = vmatpush1.msra.mxu0 0.0
  %1937 = vmatprep.subr.mxu0 0.0
  %1938 = vmatpush1.msra.mxu0 0.0
  %1939 = vmatprep.subr.mxu0 0.0
  %1940 = vmatpush1.msra.mxu0 0.0
  %1941 = vmatprep.subr.mxu0 0.0
  %1942 = vmatpush1.msra.mxu0 0.0
  %1943 = vmatprep.subr.mxu0 0.0
  %1944 = vmatpush1.msra.mxu0 0.0
  %1945 = vmatprep.subr.mxu0 0.0
  %1946 = vmatpush1.msra.mxu0 0.0
  %1947 = vmatprep.subr.mxu0 0.0
  %1948 = vmatpush1.msra.mxu0 0.0
  %1949 = vmatprep.subr.mxu0 0.0
  %1950 = vmatpush1.msra.mxu0 0.0
  %1951 = vmatprep.subr.mxu0 0.0
  %1952 = vmatpush1.msra.mxu0 0.0
  %1953 = vmatprep.subr.mxu0 0.0
  %1954 = vmatpush1.msra.mxu0 0.0
  %1955 = vmatprep.subr.mxu0 0.0
  %1956 = vmatpush1.msra.mxu0 0.0
  %1957 = vmatprep.subr.mxu0 0.0
  %1958 = vmatpush1.msra.mxu0 0.0
  %1959 = vmatprep.subr.mxu0 0.0
  %1960 = vmatpush1.msra.mxu0 0.0
  %1961 = vmatprep.subr.mxu0 0.0
  %1962 = vmatpush1.msra.mxu0 0.0
  %1963 = vmatprep.subr.mxu0 0.0
  %1964 = vmatpush1.msra.mxu0 0.0
  %1965 = vmatprep.subr.mxu0 0.0
  %1966 = vmatpush1.msra.mxu0 0.0
  %1967 = vmatprep.subr.mxu0 0.0
  %1968 = vmatpush1.msra.mxu0 0.0
  %1969 = vmatprep.subr.mxu0 0.0
  %1970 = vmatpush1.msra.mxu0 0.0
  %1971 = vmatprep.subr.mxu0 0.0
  %1972 = vmatpush1.msra.mxu0 0.0
  %1973 = vmatprep.subr.mxu0 0.0
  %1974 = vmatpush1.msra.mxu0 0.0
  %1975 = vmatprep.mubr.f32.mxu0 0.0
  %1976 = vmatmul.mubr.f32.gmra.mrb[0].mxu0 %v1909
  %v1977 = vpop.f32.mrb[0].mxu0
  %v1978 = vadd.f32 0.0, %v1977
  %v1979 = vpop.f32.mrb[0].mxu0
  %1980 = vdwg.mxu0
  %v1981 = vadd.f32 %v1907, %v1978
  %v1982 = vxor.u32 %v1981, 2147483648
  %v1983 = vmul.f32 %v1982, 1.442695
  %v1984 = vpow.pop %v1983
  %v1985 = vadd.f32 %v1984, 1.0
  %v1986 = vrcp.pop %v1985
  %v1987 = vmul.f32 1.0, %v1986
  %v1988 = vtanh.pop %v1981
  %v1989 = vmul.f32 %v1987, %v1889
  %1991 = vrot.lane.b32.xlu0 %v1988, 32
  %v1992 = vpop.permute.xlu0 %1991
  %v1994 = vmul.f32 %v1987, %v1992
  %1996 = vrot.lane.b32.xlu0 %v1994, 32
  %v1997 = vpop.permute.xlu0 %1996
  %v1999 = vadd.f32 %v1989, %v1997
  %v2000 = vtanh.pop %v1999
  %2002 = vrot.lane.b32.xlu0 %v2000, 32
  %v2003 = vpop.permute.xlu0 %2002
  %v2005 = vmul.f32 %v1987, %v2003
  %v2006 = vmul.f32 %v2005, %v144
  %v2007 = vmul.f32 %v2005, %v145
  %2009 = vrot.lane.b32.xlu0 %v2006, 64
  %v2010 = vpop.permute.xlu0 %2009
  %2013 = vrot.lane.b32.xlu0 %v2007, 96
  %v2014 = vpop.permute.xlu0 %2013
  %v2016 = vsel %vm257, %v2010, %v2014
  %v2018 = vrot.slane %v1228, 4
  %v2021 = vrot.slane %v1212, 4
  %v2023 = vsel %vm146, %v2018, %v2021
  %v2025 = vsel %vm148, %v2016, 0
  %2027 = vmatprep.subr.mxu0 0.0
  %2028 = vmatpush1.msra.mxu0 %v1110
  %2029 = vmatprep.subr.mxu0 0.0
  %2030 = vmatpush1.msra.mxu0 %v1111
  %2031 = vmatprep.subr.mxu0 0.0
  %2032 = vmatpush1.msra.mxu0 %v1112
  %2033 = vmatprep.subr.mxu0 0.0
  %2034 = vmatpush1.msra.mxu0 %v1113
  %2035 = vmatprep.subr.mxu0 0.0
  %2036 = vmatpush1.msra.mxu0 %v1114
  %2037 = vmatprep.subr.mxu0 0.0
  %2038 = vmatpush1.msra.mxu0 %v1115
  %2039 = vmatprep.subr.mxu0 0.0
  %2040 = vmatpush1.msra.mxu0 %v1116
  %2041 = vmatprep.subr.mxu0 0.0
  %2042 = vmatpush1.msra.mxu0 %v1117
  %2043 = vmatprep.subr.mxu0 0.0
  %2044 = vmatpush1.msra.mxu0 0.0
  %2045 = vmatprep.subr.mxu0 0.0
  %2046 = vmatpush1.msra.mxu0 0.0
  %2047 = vmatprep.subr.mxu0 0.0
  %2048 = vmatpush1.msra.mxu0 0.0
  %2049 = vmatprep.subr.mxu0 0.0
  %2050 = vmatpush1.msra.mxu0 0.0
  %2051 = vmatprep.subr.mxu0 0.0
  %2052 = vmatpush1.msra.mxu0 0.0
  %2053 = vmatprep.subr.mxu0 0.0
  %2054 = vmatpush1.msra.mxu0 0.0
  %2055 = vmatprep.subr.mxu0 0.0
  %2056 = vmatpush1.msra.mxu0 0.0
  %2057 = vmatprep.subr.mxu0 0.0
  %2058 = vmatpush1.msra.mxu0 0.0
  %2059 = vmatprep.subr.mxu0 0.0
  %2060 = vmatpush1.msra.mxu0 0.0
  %2061 = vmatprep.subr.mxu0 0.0
  %2062 = vmatpush1.msra.mxu0 0.0
  %2063 = vmatprep.subr.mxu0 0.0
  %2064 = vmatpush1.msra.mxu0 0.0
  %2065 = vmatprep.subr.mxu0 0.0
  %2066 = vmatpush1.msra.mxu0 0.0
  %2067 = vmatprep.subr.mxu0 0.0
  %2068 = vmatpush1.msra.mxu0 0.0
  %2069 = vmatprep.subr.mxu0 0.0
  %2070 = vmatpush1.msra.mxu0 0.0
  %2071 = vmatprep.subr.mxu0 0.0
  %2072 = vmatpush1.msra.mxu0 0.0
  %2073 = vmatprep.subr.mxu0 0.0
  %2074 = vmatpush1.msra.mxu0 0.0
  %2075 = vmatprep.subr.mxu0 0.0
  %2076 = vmatpush1.msra.mxu0 0.0
  %2077 = vmatprep.subr.mxu0 0.0
  %2078 = vmatpush1.msra.mxu0 0.0
  %2079 = vmatprep.subr.mxu0 0.0
  %2080 = vmatpush1.msra.mxu0 0.0
  %2081 = vmatprep.subr.mxu0 0.0
  %2082 = vmatpush1.msra.mxu0 0.0
  %2083 = vmatprep.subr.mxu0 0.0
  %2084 = vmatpush1.msra.mxu0 0.0
  %2085 = vmatprep.subr.mxu0 0.0
  %2086 = vmatpush1.msra.mxu0 0.0
  %2087 = vmatprep.subr.mxu0 0.0
  %2088 = vmatpush1.msra.mxu0 0.0
  %2089 = vmatprep.subr.mxu0 0.0
  %2090 = vmatpush1.msra.mxu0 0.0
  %2091 = vmatprep.mubr.f32.mxu0 0.0
  %2092 = vmatmul.mubr.f32.gmra.mrb[0].mxu0 %v2025
  %v2093 = vpop.f32.mrb[0].mxu0
  %v2094 = vadd.f32 0.0, %v2093
  %v2095 = vpop.f32.mrb[0].mxu0
  %2096 = vdwg.mxu0
  %v2097 = vadd.f32 %v2023, %v2094
  %v2098 = vxor.u32 %v2097, 2147483648
  %v2099 = vmul.f32 %v2098, 1.442695
  %v2100 = vpow.pop %v2099
  %v2101 = vadd.f32 %v2100, 1.0
  %v2102 = vrcp.pop %v2101
  %v2103 = vmul.f32 1.0, %v2102
  %v2104 = vtanh.pop %v2097
  %v2105 = vmul.f32 %v2103, %v1999
  %2107 = vrot.lane.b32.xlu0 %v2104, 32
  %v2108 = vpop.permute.xlu0 %2107
  %v2110 = vmul.f32 %v2103, %v2108
  %2112 = vrot.lane.b32.xlu0 %v2110, 32
  %v2113 = vpop.permute.xlu0 %2112
  %v2115 = vadd.f32 %v2105, %v2113
  %v2116 = vtanh.pop %v2115
  %2118 = vrot.lane.b32.xlu0 %v2116, 32
  %v2119 = vpop.permute.xlu0 %2118
  %v2121 = vmul.f32 %v2103, %v2119
  %v2122 = vmul.f32 %v2121, %v144
  %v2123 = vmul.f32 %v2121, %v145
  %2125 = vrot.lane.b32.xlu0 %v2122, 64
  %v2126 = vpop.permute.xlu0 %2125
  %2129 = vrot.lane.b32.xlu0 %v2123, 96
  %v2130 = vpop.permute.xlu0 %2129
  %v2132 = vsel %vm257, %v2126, %v2130
  %v2134 = vrot.slane %v2132, 4
  %v2136 = vadd.f32 %v1338, %v2134
  %v2137 = vrot.slane %v2016, 4
  %v2139 = vadd.f32 %v1454, %v2137
  %v2140 = vrot.slane %v1906, 4
  %v2142 = vadd.f32 %v1564, %v2140
  %v2143 = vrot.slane %v1790, 4
  %v2145 = vadd.f32 %v1680, %v2143
  %v2146 = vrot.slane %v1680, 4
  %v2148 = vadd.f32 %v1790, %v2146
  %v2149 = vrot.slane %v1564, 4
  %v2151 = vadd.f32 %v1906, %v2149
  %v2152 = vrot.slane %v1454, 4
  %v2154 = vadd.f32 %v2016, %v2152
  %v2155 = vrot.slane %v1338, 4
  %v2157 = vadd.f32 %v2132, %v2155
  %v2159 = vrot.slane %v2139, 4
  %v2162 = vrot.slane %v2145, 4
  %v2165 = vrot.slane %v2151, 4
  %v2168 = vrot.slane %v2157, 4
  %v2170 = vsel %vm146, %v2136, %v2159
  %v2171 = vsel %vm146, %v2142, %v2162
  %v2172 = vsel %vm146, %v2148, %v2165
  %v2173 = vsel %vm146, %v2154, %v2168
  %v2174 = vld [vmem:[%s1 + $0x1b0] sm:$0xff]
  %v2175 = vld [vmem:[%s1 + $0x1b8] sm:$0xff]
  %v2176 = vld [vmem:[%s1 + $0x1c0] sm:$0xff]
  %v2177 = vld [vmem:[%s1 + $0x1c8] sm:$0xff]
  %v2178 = vld [vmem:[%s1 + $0x1d0] sm:$0xff]
  %v2179 = vld [vmem:[%s1 + $0x1d8] sm:$0xff]
  %v2180 = vld [vmem:[%s1 + $0x1e0] sm:$0xff]
  %v2181 = vld [vmem:[%s1 + $0x1e8] sm:$0xff]
  %v2182 = vld [vmem:[%s1 + $0x1f0] sm:$0xff]
  %v2183 = vld [vmem:[%s1 + $0x1f8] sm:$0xff]
  %v2184 = vld [vmem:[%s1 + $0x200] sm:$0xff]
  %v2185 = vld [vmem:[%s1 + $0x208] sm:$0xff]
  %v2186 = vld [vmem:[%s1 + $0x210] sm:$0xff]
  %v2187 = vld [vmem:[%s1 + $0x218] sm:$0xff]
  %v2188 = vld [vmem:[%s1 + $0x220] sm:$0xff]
  %v2189 = vld [vmem:[%s1 + $0x228] sm:$0xff]
  %v2191 = vsel %vm148, %v2170, 0
  %v2194 = vsel %vm148, %v2171, 0
  %v2197 = vsel %vm148, %v2172, 0
  %v2200 = vsel %vm148, %v2173, 0
  %2202 = vmatprep.subr.mxu0 %v2175
  %2203 = vmatpush1.msra.mxu0 %v2174
  %2204 = vmatprep.subr.mxu0 %v2177
  %2205 = vmatpush1.msra.mxu0 %v2176
  %2206 = vmatprep.subr.mxu0 %v2179
  %2207 = vmatpush1.msra.mxu0 %v2178
  %2208 = vmatprep.subr.mxu0 %v2181
  %2209 = vmatpush1.msra.mxu0 %v2180
  %2210 = vmatprep.subr.mxu0 %v2183
  %2211 = vmatpush1.msra.mxu0 %v2182
  %2212 = vmatprep.subr.mxu0 %v2185
  %2213 = vmatpush1.msra.mxu0 %v2184
  %2214 = vmatprep.subr.mxu0 %v2187
  %2215 = vmatpush1.msra.mxu0 %v2186
  %2216 = vmatprep.subr.mxu0 %v2189
  %2217 = vmatpush1.msra.mxu0 %v2188
  %2218 = vmatprep.subr.mxu0 0.0
  %2219 = vmatpush1.msra.mxu0 0.0
  %2220 = vmatprep.subr.mxu0 0.0
  %2221 = vmatpush1.msra.mxu0 0.0
  %2222 = vmatprep.subr.mxu0 0.0
  %2223 = vmatpush1.msra.mxu0 0.0
  %2224 = vmatprep.subr.mxu0 0.0
  %2225 = vmatpush1.msra.mxu0 0.0
  %2226 = vmatprep.subr.mxu0 0.0
  %2227 = vmatpush1.msra.mxu0 0.0
  %2228 = vmatprep.subr.mxu0 0.0
  %2229 = vmatpush1.msra.mxu0 0.0
  %2230 = vmatprep.subr.mxu0 0.0
  %2231 = vmatpush1.msra.mxu0 0.0
  %2232 = vmatprep.subr.mxu0 0.0
  %2233 = vmatpush1.msra.mxu0 0.0
  %2234 = vmatprep.subr.mxu0 0.0
  %2235 = vmatpush1.msra.mxu0 0.0
  %2236 = vmatprep.subr.mxu0 0.0
  %2237 = vmatpush1.msra.mxu0 0.0
  %2238 = vmatprep.subr.mxu0 0.0
  %2239 = vmatpush1.msra.mxu0 0.0
  %2240 = vmatprep.subr.mxu0 0.0
  %2241 = vmatpush1.msra.mxu0 0.0
  %2242 = vmatprep.subr.mxu0 0.0
  %2243 = vmatpush1.msra.mxu0 0.0
  %2244 = vmatprep.subr.mxu0 0.0
  %2245 = vmatpush1.msra.mxu0 0.0
  %2246 = vmatprep.subr.mxu0 0.0
  %2247 = vmatpush1.msra.mxu0 0.0
  %2248 = vmatprep.subr.mxu0 0.0
  %2249 = vmatpush1.msra.mxu0 0.0
  %2250 = vmatprep.subr.mxu0 0.0
  %2251 = vmatpush1.msra.mxu0 0.0
  %2252 = vmatprep.subr.mxu0 0.0
  %2253 = vmatpush1.msra.mxu0 0.0
  %2254 = vmatprep.subr.mxu0 0.0
  %2255 = vmatpush1.msra.mxu0 0.0
  %2256 = vmatprep.subr.mxu0 0.0
  %2257 = vmatpush1.msra.mxu0 0.0
  %2258 = vmatprep.subr.mxu0 0.0
  %2259 = vmatpush1.msra.mxu0 0.0
  %2260 = vmatprep.subr.mxu0 0.0
  %2261 = vmatpush1.msra.mxu0 0.0
  %2262 = vmatprep.subr.mxu0 0.0
  %2263 = vmatpush1.msra.mxu0 0.0
  %2264 = vmatprep.subr.mxu0 0.0
  %2265 = vmatpush1.msra.mxu0 0.0
  %2266 = vmatprep.mubr.f32.mxu0 0.0
  %2267 = vmatmul.mubr.f32.gmra.mrb[0].mxu0 %v2191
  %v2268 = vpop.f32.mrb[0].mxu0
  %v2269 = vadd.f32 0.0, %v2268
  %v2270 = vpop.f32.mrb[0].mxu0
  %2271 = vmatprep.mubr.f32.mxu0 0.0
  %2272 = vmatmul.mubr.f32.gmra.mrb[0].mxu0 %v2194
  %v2273 = vpop.f32.mrb[0].mxu0
  %v2274 = vadd.f32 0.0, %v2273
  %v2275 = vpop.f32.mrb[0].mxu0
  %2276 = vmatprep.mubr.f32.mxu0 0.0
  %2277 = vmatmul.mubr.f32.gmra.mrb[0].mxu0 %v2197
  %v2278 = vpop.f32.mrb[0].mxu0
  %v2279 = vadd.f32 0.0, %v2278
  %v2280 = vpop.f32.mrb[0].mxu0
  %2281 = vmatprep.mubr.f32.mxu0 0.0
  %2282 = vmatmul.mubr.f32.gmra.mrb[0].mxu0 %v2200
  %v2283 = vpop.f32.mrb[0].mxu0
  %v2284 = vadd.f32 0.0, %v2283
  %v2285 = vpop.f32.mrb[0].mxu0
  %v2286 = vadd.f32 0.0, %v2285
  %2287 = vdwg.mxu0
  %v2292 = vcombine.high %v2269, %v2269
  %v2293 = vcombine.high %v2274, %v2274
  %v2294 = vcombine.high %v2279, %v2279
  %v2295 = vcombine.high %v2284, %v2284
  %v2301 = vcombine.high %v2286, %v2286
  %v2303 = vmul.f32 %v2269, %v2301
  %v2304 = vmul.f32 %v2292, %v2301
  %v2305 = vmul.f32 %v2274, %v2301
  %v2306 = vmul.f32 %v2293, %v2301
  %v2307 = vmul.f32 %v2279, %v2301
  %v2308 = vmul.f32 %v2294, %v2301
  %v2309 = vmul.f32 %v2284, %v2301
  %v2310 = vmul.f32 %v2295, %v2301
  %vm2311 = vcmask 519168
  %v2312 = vsel %vm2311, %v2303, 0.0
  %2313 = vadd.xlane.f32.xlu0 %v2312
  %v2314 = vpop.xlane.xlu0 %2313
  %v2315 = vsel %vm2311, %v2304, 0.0
  %2316 = vadd.xlane.f32.xlu0 %v2315
  %v2317 = vpop.xlane.xlu0 %2316
  %v2318 = vsel %vm2311, %v2305, 0.0
  %2319 = vadd.xlane.f32.xlu0 %v2318
  %v2320 = vpop.xlane.xlu0 %2319
  %v2321 = vsel %vm2311, %v2306, 0.0
  %2322 = vadd.xlane.f32.xlu0 %v2321
  %v2323 = vpop.xlane.xlu0 %2322
  %v2324 = vsel %vm2311, %v2307, 0.0
  %2325 = vadd.xlane.f32.xlu0 %v2324
  %v2326 = vpop.xlane.xlu0 %2325
  %v2327 = vsel %vm2311, %v2308, 0.0
  %2328 = vadd.xlane.f32.xlu0 %v2327
  %v2329 = vpop.xlane.xlu0 %2328
  %v2330 = vsel %vm2311, %v2309, 0.0
  %2331 = vadd.xlane.f32.xlu0 %v2330
  %v2332 = vpop.xlane.xlu0 %2331
  %v2333 = vsel %vm2311, %v2310, 0.0
  %2334 = vadd.xlane.f32.xlu0 %v2333
  %v2335 = vpop.xlane.xlu0 %2334
  %v2336 = vmul.f32 %v2314, 0.125
  %v2337 = vmul.f32 %v2317, 0.125
  %v2338 = vmul.f32 %v2320, 0.125
  %v2339 = vmul.f32 %v2323, 0.125
  %v2340 = vmul.f32 %v2326, 0.125
  %v2341 = vmul.f32 %v2329, 0.125
  %v2342 = vmul.f32 %v2332, 0.125
  %v2343 = vmul.f32 %v2335, 0.125
  %v2344 = vsel %vm146, %v2336, -inf
  %v2345 = vsel %vm146, %v2337, -inf
  %v2346 = vsel %vm146, %v2338, -inf
  %v2347 = vsel %vm146, %v2339, -inf
  %v2348 = vsel %vm146, %v2340, -inf
  %v2349 = vmax.f32 %v2344, %v2348
  %v2350 = vsel %vm146, %v2341, -inf
  %v2351 = vmax.f32 %v2345, %v2350
  %v2352 = vsel %vm146, %v2342, -inf
  %v2353 = vmax.f32 %v2346, %v2352
  %v2354 = vsel %vm146, %v2343, -inf
  %v2355 = vmax.f32 %v2347, %v2354
  %v2356 = vmax.f32 %v2349, %v2351
  %v2357 = vmax.f32 %v2353, %v2355
  %v2358 = vmax.f32 %v2356, %v2357
  %v2359 = vsub.f32 %v2336, %v2358
  %v2360 = vsub.f32 %v2337, %v2358
  %v2361 = vsub.f32 %v2338, %v2358
  %v2362 = vsub.f32 %v2339, %v2358
  %v2363 = vsub.f32 %v2340, %v2358
  %v2364 = vsub.f32 %v2341, %v2358
  %v2365 = vsub.f32 %v2342, %v2358
  %v2366 = vsub.f32 %v2343, %v2358
  %v2367 = vmul.f32 %v2359, 1.442695
  %v2368 = vpow.pop %v2367
  %v2369 = vmul.f32 %v2360, 1.442695
  %v2370 = vpow.pop %v2369
  %v2371 = vmul.f32 %v2361, 1.442695
  %v2372 = vpow.pop %v2371
  %v2373 = vmul.f32 %v2362, 1.442695
  %v2374 = vpow.pop %v2373
  %v2375 = vmul.f32 %v2363, 1.442695
  %v2376 = vpow.pop %v2375
  %v2377 = vmul.f32 %v2364, 1.442695
  %v2378 = vpow.pop %v2377
  %v2379 = vmul.f32 %v2365, 1.442695
  %v2380 = vpow.pop %v2379
  %v2381 = vmul.f32 %v2366, 1.442695
  %v2382 = vpow.pop %v2381
  %v2383 = vsel %vm146, %v2368, 0.0
  %v2384 = vsel %vm146, %v2370, 0.0
  %v2385 = vadd.f32 %v2383, %v2384
  %v2386 = vsel %vm146, %v2372, 0.0
  %v2387 = vadd.f32 %v2385, %v2386
  %v2388 = vsel %vm146, %v2374, 0.0
  %v2389 = vadd.f32 %v2387, %v2388
  %v2390 = vsel %vm146, %v2376, 0.0
  %v2391 = vadd.f32 %v2389, %v2390
  %v2392 = vsel %vm146, %v2378, 0.0
  %v2393 = vadd.f32 %v2391, %v2392
  %v2394 = vsel %vm146, %v2380, 0.0
  %v2395 = vadd.f32 %v2393, %v2394
  %v2396 = vsel %vm146, %v2382, 0.0
  %v2397 = vadd.f32 %v2395, %v2396
  %v2398 = vrcp.pop %v2397
  %v2399 = vmul.f32 %v2368, %v2398
  %v2400 = vmul.f32 %v2370, %v2398
  %v2401 = vmul.f32 %v2372, %v2398
  %v2402 = vmul.f32 %v2374, %v2398
  %v2403 = vmul.f32 %v2376, %v2398
  %v2404 = vmul.f32 %v2378, %v2398
  %v2405 = vmul.f32 %v2380, %v2398
  %v2406 = vmul.f32 %v2382, %v2398
  %2407 = vrot.lane.b32.xlu0 %v2269, 64
  %v2408 = vpop.permute.xlu0 %2407
  %2409 = vrot.lane.b32.xlu0 %v2292, 64
  %v2410 = vpop.permute.xlu0 %2409
  %2411 = vrot.lane.b32.xlu0 %v2274, 64
  %v2412 = vpop.permute.xlu0 %2411
  %2413 = vrot.lane.b32.xlu0 %v2293, 64
  %v2414 = vpop.permute.xlu0 %2413
  %2415 = vrot.lane.b32.xlu0 %v2279, 64
  %v2416 = vpop.permute.xlu0 %2415
  %2417 = vrot.lane.b32.xlu0 %v2294, 64
  %v2418 = vpop.permute.xlu0 %2417
  %2419 = vrot.lane.b32.xlu0 %v2284, 64
  %v2420 = vpop.permute.xlu0 %2419
  %2421 = vrot.lane.b32.xlu0 %v2295, 64
  %v2422 = vpop.permute.xlu0 %2421
  %v2431 = vmul.f32 %v2399, %v2408
  %v2432 = vmul.f32 %v2400, %v2410
  %v2433 = vmul.f32 %v2401, %v2412
  %v2434 = vmul.f32 %v2402, %v2414
  %v2435 = vmul.f32 %v2403, %v2416
  %v2436 = vmul.f32 %v2404, %v2418
  %v2437 = vmul.f32 %v2405, %v2420
  %v2438 = vmul.f32 %v2406, %v2422
  %v2439 = vsel %vm2311, %v2431, 0.0
  %v2440 = vsel %vm2311, %v2432, 0.0
  %v2441 = vadd.f32 %v2439, %v2440
  %v2442 = vsel %vm2311, %v2433, 0.0
  %v2443 = vadd.f32 %v2441, %v2442
  %v2444 = vsel %vm2311, %v2434, 0.0
  %v2445 = vadd.f32 %v2443, %v2444
  %v2446 = vsel %vm2311, %v2435, 0.0
  %v2447 = vadd.f32 %v2445, %v2446
  %v2448 = vsel %vm2311, %v2436, 0.0
  %v2449 = vadd.f32 %v2447, %v2448
  %v2450 = vsel %vm2311, %v2437, 0.0
  %v2451 = vadd.f32 %v2449, %v2450
  %v2452 = vsel %vm2311, %v2438, 0.0
  %v2453 = vadd.f32 %v2451, %v2452
  %v2454 = vadd.f32 %v2453, %v2422
  %v2455 = vsel %vm2311, %v2454, 0.0
  %2456 = vadd.xlane.f32.xlu0 %v2455
  %v2457 = vpop.xlane.xlu0 %2456
  %v2458 = vrcp.pop 64.0
  %v2459 = vmul.f32 %v2457, %v2458
  %v2460 = vsub.f32 %v2454, %v2459
  %v2461 = vmul.f32 %v2460, %v2460
  %v2462 = vsel %vm2311, %v2461, 0.0
  %2463 = vadd.xlane.f32.xlu0 %v2462
  %v2464 = vpop.xlane.xlu0 %2463
  %v2465 = vmul.f32 %v2464, %v2458
  %v2466 = vadd.f32 %v2465, 1e-05
  %v2467 = vrsqrt.pop %v2466
  %v2468 = vmul.f32 %v2460, %v2467
  %v2469 = vld [vmem:[%s1 + $0x230] ss:$0 sm:$0xff]
  %v2470 = vmul.f32 %v2468, %v2469
  %v2471 = vld [vmem:[%s1 + $0x240] ss:$0 sm:$0xff]
  %v2472 = vadd.f32 %v2470, %v2471
  %v2473 = vld [vmem:[%s1 + $0x250] sm:$0xff]
  %v2474 = vld [vmem:[%s1 + $0x260] sm:$0xff]
  %v2475 = vld [vmem:[%s1 + $0x270] sm:$0xff]
  %v2476 = vld [vmem:[%s1 + $0x280] sm:$0xff]
  %v2477 = vld [vmem:[%s1 + $0x290] sm:$0xff]
  %v2478 = vld [vmem:[%s1 + $0x2a0] sm:$0xff]
  %v2479 = vld [vmem:[%s1 + $0x2b0] sm:$0xff]
  %v2480 = vld [vmem:[%s1 + $0x2c0] sm:$0xff]
  %v2481 = vld [vmem:[%s1 + $0x2d0] ss:$0 sm:$0xff]
  %v2483 = vsel %vm148, %v2472, 0
  %2485 = vmatprep.subr.mxu0 0.0
  %2486 = vmatpush1.msra.mxu0 %v2473
  %2487 = vmatprep.subr.mxu0 0.0
  %2488 = vmatpush1.msra.mxu0 %v2474
  %2489 = vmatprep.subr.mxu0 0.0
  %2490 = vmatpush1.msra.mxu0 %v2475
  %2491 = vmatprep.subr.mxu0 0.0
  %2492 = vmatpush1.msra.mxu0 %v2476
  %2493 = vmatprep.subr.mxu0 0.0
  %2494 = vmatpush1.msra.mxu0 %v2477
  %2495 = vmatprep.subr.mxu0 0.0
  %2496 = vmatpush1.msra.mxu0 %v2478
  %2497 = vmatprep.subr.mxu0 0.0
  %2498 = vmatpush1.msra.mxu0 %v2479
  %2499 = vmatprep.subr.mxu0 0.0
  %2500 = vmatpush1.msra.mxu0 %v2480
  %2501 = vmatprep.subr.mxu0 0.0
  %2502 = vmatpush1.msra.mxu0 0.0
  %2503 = vmatprep.subr.mxu0 0.0
  %2504 = vmatpush1.msra.mxu0 0.0
  %2505 = vmatprep.subr.mxu0 0.0
  %2506 = vmatpush1.msra.mxu0 0.0
  %2507 = vmatprep.subr.mxu0 0.0
  %2508 = vmatpush1.msra.mxu0 0.0
  %2509 = vmatprep.subr.mxu0 0.0
  %2510 = vmatpush1.msra.mxu0 0.0
  %2511 = vmatprep.subr.mxu0 0.0
  %2512 = vmatpush1.msra.mxu0 0.0
  %2513 = vmatprep.subr.mxu0 0.0
  %2514 = vmatpush1.msra.mxu0 0.0
  %2515 = vmatprep.subr.mxu0 0.0
  %2516 = vmatpush1.msra.mxu0 0.0
  %2517 = vmatprep.subr.mxu0 0.0
  %2518 = vmatpush1.msra.mxu0 0.0
  %2519 = vmatprep.subr.mxu0 0.0
  %2520 = vmatpush1.msra.mxu0 0.0
  %2521 = vmatprep.subr.mxu0 0.0
  %2522 = vmatpush1.msra.mxu0 0.0
  %2523 = vmatprep.subr.mxu0 0.0
  %2524 = vmatpush1.msra.mxu0 0.0
  %2525 = vmatprep.subr.mxu0 0.0
  %2526 = vmatpush1.msra.mxu0 0.0
  %2527 = vmatprep.subr.mxu0 0.0
  %2528 = vmatpush1.msra.mxu0 0.0
  %2529 = vmatprep.subr.mxu0 0.0
  %2530 = vmatpush1.msra.mxu0 0.0
  %2531 = vmatprep.subr.mxu0 0.0
  %2532 = vmatpush1.msra.mxu0 0.0
  %2533 = vmatprep.subr.mxu0 0.0
  %2534 = vmatpush1.msra.mxu0 0.0
  %2535 = vmatprep.subr.mxu0 0.0
  %2536 = vmatpush1.msra.mxu0 0.0
  %2537 = vmatprep.subr.mxu0 0.0
  %2538 = vmatpush1.msra.mxu0 0.0
  %2539 = vmatprep.subr.mxu0 0.0
  %2540 = vmatpush1.msra.mxu0 0.0
  %2541 = vmatprep.subr.mxu0 0.0
  %2542 = vmatpush1.msra.mxu0 0.0
  %2543 = vmatprep.subr.mxu0 0.0
  %2544 = vmatpush1.msra.mxu0 0.0
  %2545 = vmatprep.subr.mxu0 0.0
  %2546 = vmatpush1.msra.mxu0 0.0
  %2547 = vmatprep.subr.mxu0 0.0
  %2548 = vmatpush1.msra.mxu0 0.0
  %2549 = vmatprep.mubr.f32.mxu0 0.0
  %2550 = vmatmul.mubr.f32.gmra.mrb[0].mxu0 %v2483
  %v2551 = vpop.f32.mrb[0].mxu0
  %v2552 = vadd.f32 %v2481, %v2551
  %v2553 = vpop.f32.mrb[0].mxu0
  %2554 = vdwg.mxu0
  %v2555 = vmax.f32 %v2552, 0.0
  %v2556 = vld [vmem:[%s1 + $0x2e0] sm:$0xff]
  %v2557 = vld [vmem:[%s1 + $0x2f0] sm:$0xff]
  %v2558 = vld [vmem:[%s1 + $0x300] sm:$0xff]
  %v2559 = vld [vmem:[%s1 + $0x310] sm:$0xff]
  %v2560 = vld [vmem:[%s1 + $0x320] sm:$0xff]
  %v2561 = vld [vmem:[%s1 + $0x330] sm:$0xff]
  %v2562 = vld [vmem:[%s1 + $0x340] sm:$0xff]
  %v2563 = vld [vmem:[%s1 + $0x350] sm:$0xff]
  %v2564 = vld [vmem:[%s1 + $0x360] ss:$0 sm:$0xff]
  %v2566 = vsel %vm148, %v2555, 0
  %2568 = vmatprep.subr.mxu0 0.0
  %2569 = vmatpush1.msra.mxu0 %v2556
  %2570 = vmatprep.subr.mxu0 0.0
  %2571 = vmatpush1.msra.mxu0 %v2557
  %2572 = vmatprep.subr.mxu0 0.0
  %2573 = vmatpush1.msra.mxu0 %v2558
  %2574 = vmatprep.subr.mxu0 0.0
  %2575 = vmatpush1.msra.mxu0 %v2559
  %2576 = vmatprep.subr.mxu0 0.0
  %2577 = vmatpush1.msra.mxu0 %v2560
  %2578 = vmatprep.subr.mxu0 0.0
  %2579 = vmatpush1.msra.mxu0 %v2561
  %2580 = vmatprep.subr.mxu0 0.0
  %2581 = vmatpush1.msra.mxu0 %v2562
  %2582 = vmatprep.subr.mxu0 0.0
  %2583 = vmatpush1.msra.mxu0 %v2563
  %2584 = vmatprep.subr.mxu0 0.0
  %2585 = vmatpush1.msra.mxu0 0.0
  %2586 = vmatprep.subr.mxu0 0.0
  %2587 = vmatpush1.msra.mxu0 0.0
  %2588 = vmatprep.subr.mxu0 0.0
  %2589 = vmatpush1.msra.mxu0 0.0
  %2590 = vmatprep.subr.mxu0 0.0
  %2591 = vmatpush1.msra.mxu0 0.0
  %2592 = vmatprep.subr.mxu0 0.0
  %2593 = vmatpush1.msra.mxu0 0.0
  %2594 = vmatprep.subr.mxu0 0.0
  %2595 = vmatpush1.msra.mxu0 0.0
  %2596 = vmatprep.subr.mxu0 0.0
  %2597 = vmatpush1.msra.mxu0 0.0
  %2598 = vmatprep.subr.mxu0 0.0
  %2599 = vmatpush1.msra.mxu0 0.0
  %2600 = vmatprep.subr.mxu0 0.0
  %2601 = vmatpush1.msra.mxu0 0.0
  %2602 = vmatprep.subr.mxu0 0.0
  %2603 = vmatpush1.msra.mxu0 0.0
  %2604 = vmatprep.subr.mxu0 0.0
  %2605 = vmatpush1.msra.mxu0 0.0
  %2606 = vmatprep.subr.mxu0 0.0
  %2607 = vmatpush1.msra.mxu0 0.0
  %2608 = vmatprep.subr.mxu0 0.0
  %2609 = vmatpush1.msra.mxu0 0.0
  %2610 = vmatprep.subr.mxu0 0.0
  %2611 = vmatpush1.msra.mxu0 0.0
  %2612 = vmatprep.subr.mxu0 0.0
  %2613 = vmatpush1.msra.mxu0 0.0
  %2614 = vmatprep.subr.mxu0 0.0
  %2615 = vmatpush1.msra.mxu0 0.0
  %2616 = vmatprep.subr.mxu0 0.0
  %2617 = vmatpush1.msra.mxu0 0.0
  %2618 = vmatprep.subr.mxu0 0.0
  %2619 = vmatpush1.msra.mxu0 0.0
  %2620 = vmatprep.subr.mxu0 0.0
  %2621 = vmatpush1.msra.mxu0 0.0
  %2622 = vmatprep.subr.mxu0 0.0
  %2623 = vmatpush1.msra.mxu0 0.0
  %2624 = vmatprep.subr.mxu0 0.0
  %2625 = vmatpush1.msra.mxu0 0.0
  %2626 = vmatprep.subr.mxu0 0.0
  %2627 = vmatpush1.msra.mxu0 0.0
  %2628 = vmatprep.subr.mxu0 0.0
  %2629 = vmatpush1.msra.mxu0 0.0
  %2630 = vmatprep.subr.mxu0 0.0
  %2631 = vmatpush1.msra.mxu0 0.0
  %2632 = vmatprep.mubr.f32.mxu0 0.0
  %2633 = vmatmul.mubr.f32.gmra.mrb[0].mxu0 %v2566
  %v2634 = vpop.f32.mrb[0].mxu0
  %v2635 = vadd.f32 %v2564, %v2634
  %v2636 = vpop.f32.mrb[0].mxu0
  %2637 = vdwg.mxu0
  %v2638 = vmax.f32 %v2635, 0.0
  %v2639 = vld [vmem:[%s1 + $0x370] ss:$0 sm:$0xff]
  %v2640 = vmul.f32 %v2638, %v2639
  %vm2641 = vcmask 257024
  %v2642 = vsel %vm2641, %v2640, 0.0
  %2643 = vadd.xlane.f32.xlu0 %v2642
  %v2644 = vpop.xlane.xlu0 %2643
  %v2645 = vld [vmem:[%s1 + $0x380] ss:$0 sm:$0xff]
  %v2646 = vadd.f32 %v2644, %v2645
  %vm2647 = vcmask 3072
  %2648 = vst.msk [vmem:[%s2] sm:$0xf] %vm2647, %v2646
  // Predicated region
  $region10: #{attn_bilstm_forward.1} parent=0 // pred_check
    _
  $region11: #{attn_bilstm_forward.1} parent=0 // pred_check_branch
    %2650 = sbr.rel (0) target = $region13
  $region12: #{attn_bilstm_forward.1} parent=0 // pred_region
    _
  $region13: #{attn_bilstm_forward.1} parent=0 // pred_fallthru
    _
  // Predicated region
  $region14: #{attn_bilstm_forward.1} parent=0 // pred_check
    _
  $region15: #{attn_bilstm_forward.1} parent=0 // pred_check_branch
    %2652 = sbr.rel (0) target = $region17
  $region16: #{attn_bilstm_forward.1} parent=0 // pred_region
    _
  $region17: #{attn_bilstm_forward.1} parent=0 // pred_fallthru
    _

</llo_original>
